<compile_context>
chip_gen: v5e
topology: v5e:2x2
jax: 0.10.0
libtpu: 0.0.40
codegen_flags: <defaults>
</compile_context>

<pallas_src>
import functools

import jax
import jax.numpy as jnp
from jax.experimental import pallas as pl
from jax.experimental.pallas import tpu as pltpu

LANE = 128
SUBLANE = 16  # bf16 sublane packing (also satisfies the f32 requirement of 8)


def _round_up(x, m):
    return ((x + m - 1) // m) * m


# ----------------------------------------------------------------------------
# Pallas kernels
# ----------------------------------------------------------------------------
def _matmul_bias_act_kernel(a_ref, b_ref, bias_ref, o_ref, *, activation):
    acc = jnp.dot(a_ref[...], b_ref[...], preferred_element_type=jnp.float32)
    acc = acc + bias_ref[...]
    if activation == "relu":
        acc = jnp.maximum(acc, 0.0)
    elif activation == "sigmoid":
        # exp and reciprocal both lower to the otherwise-idle EUP slot.
        acc = pl.reciprocal(1.0 + jnp.exp(-acc), approx=True)
    o_ref[...] = acc.astype(o_ref.dtype)


def matmul_bias_act(a, b, bias, activation="none"):
    """a: (M, K), b: (K, N), bias: (N,) -> (M, N) with fused bias + activation.

    - A/B are cast to bf16 for the MXU (f32 accumulation, f32 epilogue).
    - N is padded to a multiple of 128 so output stores are lane-dense.
    - M is padded to a multiple of 16 only; row tiles of at most 512.
    """
    M, K = a.shape
    K2, N = b.shape
    assert K == K2
    n_pad = _round_up(N, LANE)
    tm = _round_up(M, SUBLANE) if M <= 512 else 512
    m_pad = _round_up(M, tm)

    a_p = jnp.pad(a, ((0, m_pad - M), (0, 0))).astype(jnp.bfloat16)
    b_p = jnp.pad(b, ((0, 0), (0, n_pad - N))).astype(jnp.bfloat16)
    bias_p = jnp.pad(bias, (0, n_pad - N)).reshape(1, n_pad).astype(jnp.float32)

    kernel = functools.partial(_matmul_bias_act_kernel, activation=activation)
    out = pl.pallas_call(
        kernel,
        out_shape=jax.ShapeDtypeStruct((m_pad, n_pad), jnp.float32),
        grid=(m_pad // tm,),
        in_specs=[
            pl.BlockSpec((tm, K), lambda i: (i, 0)),
            pl.BlockSpec((K, n_pad), lambda i: (0, 0)),
            pl.BlockSpec((1, n_pad), lambda i: (0, 0)),
        ],
        out_specs=pl.BlockSpec((tm, n_pad), lambda i: (i, 0)),
        compiler_params=pltpu.CompilerParams(dimension_semantics=("parallel",)),
    )(a_p, b_p, bias_p)
    return out[:M, :N]


def _latent_reparam_kernel(h_ref, w_ref, b_ref, eps_ref, mu_ref, lv_ref, z_ref, *, latent):
    # One (M, 3136) x (3136, 256) matmul; mu/logvar split + reparameterization fused
    # into the epilogue.
    acc = jnp.dot(h_ref[...], w_ref[...], preferred_element_type=jnp.float32)
    acc = acc + b_ref[...]
    mu = acc[:, :latent]
    lv = acc[:, latent:]
    mu_ref[...] = mu
    lv_ref[...] = lv
    z_ref[...] = mu + eps_ref[...] * jnp.exp(0.5 * lv)


def latent_head_reparam(h, w_cat, b_cat, eps):
    """Fused fc1/fc2 heads + reparameterization: one matmul, three outputs."""
    B, _ = h.shape
    n = w_cat.shape[1]
    latent = n // 2
    m_pad = _round_up(B, SUBLANE)
    h_p = jnp.pad(h, ((0, m_pad - B), (0, 0))).astype(jnp.bfloat16)
    eps_p = jnp.pad(eps, ((0, m_pad - B), (0, 0))).astype(jnp.float32)
    kernel = functools.partial(_latent_reparam_kernel, latent=latent)
    mu, logvar, z = pl.pallas_call(
        kernel,
        out_shape=(
            jax.ShapeDtypeStruct((m_pad, latent), jnp.float32),
            jax.ShapeDtypeStruct((m_pad, latent), jnp.float32),
            jax.ShapeDtypeStruct((m_pad, latent), jnp.float32),
        ),
    )(h_p, w_cat.astype(jnp.bfloat16), b_cat.reshape(1, n).astype(jnp.float32), eps_p)
    return mu[:B], logvar[:B], z[:B]


# ----------------------------------------------------------------------------
# Plain-JAX glue: NHWC im2col, sub-pixel conv-transpose, weight permutations
# (data-movement only; all FLOPs happen in the Pallas kernels above).
# ----------------------------------------------------------------------------
# TODO(synk): move im2col into the kernel via a scalar-prefetch / Element index_map
# gather to remove the remaining XLA slice+stack glue.
def im2col_nhwc(x, k, stride):
    """x: (B, H, W, C) already padded -> (B*Ho*Wo, k*k*C), columns in (kh, kw, c) order."""
    B, H, W, C = x.shape
    Ho = (H - k) // stride + 1
    Wo = (W - k) // stride + 1
    patches = []
    for i in range(k):
        for j in range(k):
            patches.append(x[:, i:i + stride * Ho:stride, j:j + stride * Wo:stride, :])
    cols = jnp.stack(patches, axis=3)                       # (B, Ho, Wo, k*k, C)
    return cols.reshape(B * Ho * Wo, k * k * C), Ho, Wo


def conv2d_nhwc(x, w, b, stride, pad, activation):
    """x: (B,H,W,C) NHWC; w: (OC, IC, k, k) PyTorch layout."""
    B = x.shape[0]
    OC, IC, k, _ = w.shape
    xp = jnp.pad(x, ((0, 0), (pad, pad), (pad, pad), (0, 0)))
    cols, Ho, Wo = im2col_nhwc(xp, k, stride)
    wmat = w.transpose(2, 3, 1, 0).reshape(k * k * IC, OC)  # rows in (kh, kw, ic) order
    out = matmul_bias_act(cols, wmat, b, activation)
    return out.reshape(B, Ho, Wo, OC)


def _subpixel_weight(w_t):
    """(IC, OC, 4, 4) ConvTranspose2d weight -> (4*IC, 4*OC) stride-2 sub-pixel matrix.

    Rows follow im2col (d_h, d_w, ic) order for a 2x2 stride-1 window over the
    once-padded input; columns are (r, s, oc) output phases: y[2u+r, 2v+s, oc].
    Derivation: kh = 3 - r - 2*d_h, kw = 3 - s - 2*d_w.
    """
    IC, OC = w_t.shape[0], w_t.shape[1]
    wf = w_t[:, :, ::-1, ::-1]                              # wf[.., a, b] = w_t[.., 3-a, 3-b]
    sub = wf.reshape(IC, OC, 2, 2, 2, 2)                    # (ic, oc, d_h, r, d_w, s)
    sub = sub.transpose(2, 4, 0, 3, 5, 1)                   # (d_h, d_w, ic, r, s, oc)
    return sub.reshape(4 * IC, 4 * OC)


def conv_transpose2d_nhwc(x, w_t, b, activation):
    """ConvTranspose2d(k=4, stride=2, pad=1) via sub-pixel decomposition:
    ONE stride-1 matmul with K=4*C, N=4*OC on the un-dilated map, then interleave."""
    B, H, W, C = x.shape
    OC = w_t.shape[1]
    xp = jnp.pad(x, ((0, 0), (1, 1), (1, 1), (0, 0)))
    cols, Ho, Wo = im2col_nhwc(xp, 2, 1)                    # Ho=H+1, Wo=W+1, K=4*C
    wmat = _subpixel_weight(w_t)                            # (4*C, 4*OC)
    bias4 = jnp.tile(b, 4)
    out = matmul_bias_act(cols, wmat, bias4, activation)    # (B*(H+1)*(W+1), 4*OC)
    out = out.reshape(B, Ho, Wo, 2, 2, OC)                  # (b, u', v', r, s, oc)
    p00 = out[:, :H, :W, 0, 0]
    p01 = out[:, :H, 1:, 0, 1]
    p10 = out[:, 1:, :W, 1, 0]
    p11 = out[:, 1:, 1:, 1, 1]
    y = jnp.stack([jnp.stack([p00, p01], axis=3),
                   jnp.stack([p10, p11], axis=3)], axis=2)  # (B, H, 2, W, 2, OC)
    return y.reshape(B, 2 * H, 2 * W, OC)


def _perm_fc_in(w, c=64, h=7, ww=7):
    """Linear weight columns from PyTorch (c,h,w) flatten order to NHWC (h,w,c) order."""
    o = w.shape[0]
    return w.reshape(o, c, h, ww).transpose(0, 2, 3, 1).reshape(o, c * h * ww)


def _perm_fc_out(w, b, c=64, h=7, ww=7):
    """fc3: rows from (c,h,w) order to (h,w,c) so its output is directly NHWC."""
    i = w.shape[1]
    wp = w.reshape(c, h, ww, i).transpose(1, 2, 0, 3).reshape(c * h * ww, i)
    bp = b.reshape(c, h, ww).transpose(1, 2, 0).reshape(c * h * ww)
    return wp, bp


# ----------------------------------------------------------------------------
# VAE forward
# ----------------------------------------------------------------------------
def vae_forward(params, x, eps):
    B = x.shape[0]
    xh = jnp.transpose(x, (0, 2, 3, 1))                                       # NHWC in
    h = conv2d_nhwc(xh, params["conv1_w"], params["conv1_b"], 2, 1, "relu")   # (B,14,14,32)
    h = conv2d_nhwc(h, params["conv2_w"], params["conv2_b"], 2, 1, "relu")    # (B,7,7,64)
    h = h.reshape(B, 7 * 7 * 64)

    # Fused fc1/fc2 heads + reparameterization (one 256-wide, lane-dense matmul).
    w_cat = jnp.concatenate(
        [_perm_fc_in(params["fc1_w"]), _perm_fc_in(params["fc2_w"])], axis=0).T  # (3136,256)
    b_cat = jnp.concatenate([params["fc1_b"], params["fc2_b"]])
    mu, logvar, z = latent_head_reparam(h, w_cat, b_cat, eps)

    # Decoder: fc3 emits directly in the NHWC (B,7,7,64) layout the deconv consumes.
    w3, b3 = _perm_fc_out(params["fc3_w"], params["fc3_b"])
    d = matmul_bias_act(z, w3.T, b3, "none").reshape(B, 7, 7, 64)
    d = conv_transpose2d_nhwc(d, params["deconv1_w"], params["deconv1_b"], "relu")      # (B,14,14,32)
    r = conv_transpose2d_nhwc(d, params["deconv2_w"], params["deconv2_b"], "sigmoid")   # (B,28,28,1)
    return jnp.transpose(r, (0, 3, 1, 2)), mu, logvar


# ----------------------------------------------------------------------------
# Pure-JAX reference (PyTorch semantics) for a loose numerical self-check
# ----------------------------------------------------------------------------
def vae_forward_ref(params, x, eps):
    dn = ("NCHW", "OIHW", "NCHW")

    def conv(x, w, b, stride, pad):
        y = jax.lax.conv_general_dilated(x, w, (stride, stride),
                                         ((pad, pad), (pad, pad)), dimension_numbers=dn)
        return y + b.reshape(1, -1, 1, 1)

    def convT(x, w_t, b, stride, pad):
        w = jnp.flip(w_t, (2, 3)).transpose(1, 0, 2, 3)
        k = w.shape[2]
        y = jax.lax.conv_general_dilated(x, w, (1, 1),
                                         ((k - 1 - pad, k - 1 - pad),) * 2,
                                         lhs_dilation=(stride, stride), dimension_numbers=dn)
        return y + b.reshape(1, -1, 1, 1)

    B = x.shape[0]
    h = jax.nn.relu(conv(x, params["conv1_w"], params["conv1_b"], 2, 1))
    h = jax.nn.relu(conv(h, params["conv2_w"], params["conv2_b"], 2, 1))
    h = h.reshape(B, -1)
    mu = h @ params["fc1_w"].T + params["fc1_b"]
    logvar = h @ params["fc2_w"].T + params["fc2_b"]
    z = mu + eps * jnp.exp(0.5 * logvar)
    z = (z @ params["fc3_w"].T + params["fc3_b"]).reshape(B, 64, 7, 7)
    d = jax.nn.relu(convT(z, params["deconv1_w"], params["deconv1_b"], 2, 1))
    return jax.nn.sigmoid(convT(d, params["deconv2_w"], params["deconv2_b"], 2, 1)), mu, logvar


def init_params(key):
    ks = jax.random.split(key, 14)
    s = 0.05
    return {
        "conv1_w": s * jax.random.normal(ks[0], (32, 1, 4, 4), jnp.float32),
        "conv1_b": s * jax.random.normal(ks[1], (32,), jnp.float32),
        "conv2_w": s * jax.random.normal(ks[2], (64, 32, 4, 4), jnp.float32),
        "conv2_b": s * jax.random.normal(ks[3], (64,), jnp.float32),
        "fc1_w": s * jax.random.normal(ks[4], (128, 64 * 7 * 7), jnp.float32),
        "fc1_b": s * jax.random.normal(ks[5], (128,), jnp.float32),
        "fc2_w": s * jax.random.normal(ks[6], (128, 64 * 7 * 7), jnp.float32),
        "fc2_b": s * jax.random.normal(ks[7], (128,), jnp.float32),
        "fc3_w": s * jax.random.normal(ks[8], (64 * 7 * 7, 128), jnp.float32),
        "fc3_b": s * jax.random.normal(ks[9], (64 * 7 * 7,), jnp.float32),
        "deconv1_w": s * jax.random.normal(ks[10], (64, 32, 4, 4), jnp.float32),
        "deconv1_b": s * jax.random.normal(ks[11], (32,), jnp.float32),
        "deconv2_w": s * jax.random.normal(ks[12], (32, 1, 4, 4), jnp.float32),
        "deconv2_b": s * jax.random.normal(ks[13], (1,), jnp.float32),
    }


if __name__ == "__main__":
    key = jax.random.PRNGKey(0)
    k_param, k_x, k_eps = jax.random.split(key, 3)

    params = init_params(k_param)
    # MNIST-like input; 28x28 is required by the 64*7*7 flatten in the module.
    x = jax.random.uniform(k_x, (2, 1, 28, 28), jnp.float32)
    eps = jax.random.normal(k_eps, (2, 128), jnp.float32)  # randn_like(std)

    fwd = jax.jit(vae_forward)
    recon, mu, logvar = fwd(params, x, eps)
    jax.block_until_ready((recon, mu, logvar))

    assert recon.shape == (2, 1, 28, 28)
    assert mu.shape == (2, 128) and logvar.shape == (2, 128)
    assert bool(jnp.all(jnp.isfinite(recon)))

    # Loose self-check vs a pure-XLA reference (bf16 MXU operands => loose tolerance).
    r_ref, mu_ref, lv_ref = jax.jit(vae_forward_ref)(params, x, eps)
    assert float(jnp.max(jnp.abs(recon - r_ref))) < 2e-2
    assert float(jnp.max(jnp.abs(mu - mu_ref))) < 2e-2
    assert float(jnp.max(jnp.abs(logvar - lv_ref))) < 2e-2

    print("KERNEL_OK")
</pallas_src>

<mosaic_0001>
module attributes {stable_mosaic.version = 11 : i64} {
  func.func @_matmul_bias_act_kernel(%arg0: i32, %arg1: memref<400x16xbf16, #tpu.memory_space<vmem>>, %arg2: memref<16x128xbf16, #tpu.memory_space<vmem>>, %arg3: memref<1x128xf32, #tpu.memory_space<vmem>>, %arg4: memref<400x128xf32, #tpu.memory_space<vmem>>) attributes {dimension_semantics = [#tpu.dimension_semantics<parallel>], iteration_bounds = array<i64: 1>, scalar_prefetch = 0 : i64, scratch_operands = 0 : i64, tpu.core_type = #tpu.core_type<tc>, window_params = [{transform_indices = @transform_0, window_bounds = array<i64: 400, 16>}, {pipeline_mode = #tpu.pipeline_mode<synchronous>, transform_indices = @transform_1, window_bounds = array<i64: 16, 128>}, {pipeline_mode = #tpu.pipeline_mode<synchronous>, transform_indices = @transform_2, window_bounds = array<i64: 1, 128>}, {transform_indices = @transform_3, window_bounds = array<i64: 400, 128>}]} {
    %c0 = arith.constant 0 : index
    %c0_0 = arith.constant 0 : index
    %0 = vector.load %arg1[%c0, %c0_0] : memref<400x16xbf16, #tpu.memory_space<vmem>>, vector<400x16xbf16>
    %c0_1 = arith.constant 0 : index
    %c0_2 = arith.constant 0 : index
    %1 = vector.load %arg2[%c0_1, %c0_2] : memref<16x128xbf16, #tpu.memory_space<vmem>>, vector<16x128xbf16>
    %cst = arith.constant dense<0.000000e+00> : vector<400x128xf32>
    %2 = tpu.matmul %0, %1, %cst {dimension_numbers = #tpu.dot_dimension_numbers<[1], [0], [0], [1], [0, 0, 1, 1], [], []>} : vector<400x16xbf16>, vector<16x128xbf16>, vector<400x128xf32> -> vector<400x128xf32>
    %c0_3 = arith.constant 0 : index
    %c0_4 = arith.constant 0 : index
    %3 = vector.load %arg3[%c0_3, %c0_4] : memref<1x128xf32, #tpu.memory_space<vmem>>, vector<1x128xf32>
    %4 = vector.broadcast %3 : vector<1x128xf32> to vector<400x128xf32>
    %5 = arith.addf %2, %4 : vector<400x128xf32>
    %cst_5 = arith.constant 0.000000e+00 : f32
    %6 = vector.broadcast %cst_5 : f32 to vector<400x128xf32>
    %7 = arith.maximumf %5, %6 : vector<400x128xf32>
    %c0_6 = arith.constant 0 : index
    %c0_7 = arith.constant 0 : index
    %8 = vector.load %arg4[%c0_6, %c0_7] : memref<400x128xf32, #tpu.memory_space<vmem>>, vector<400x128xf32>
    tpu.vector_store %arg4[%c0_6, %c0_7], %7 {strides = array<i32>} : memref<400x128xf32, #tpu.memory_space<vmem>>, vector<400x128xf32>,
    return
  }
  func.func @transform_0(%arg0: i32) -> (i32, i32) {
    %c0_i32 = arith.constant 0 : i32
    %c0_i32_0 = arith.constant 0 : i32
    return %arg0, %c0_i32 : i32, i32
  }
  func.func @transform_1(%arg0: i32) -> (i32, i32) {
    %c0_i32 = arith.constant 0 : i32
    %c0_i32_0 = arith.constant 0 : i32
    %c0_i32_1 = arith.constant 0 : i32
    return %c0_i32, %c0_i32_0 : i32, i32
  }
  func.func @transform_2(%arg0: i32) -> (i32, i32) {
    %c0_i32 = arith.constant 0 : i32
    %c0_i32_0 = arith.constant 0 : i32
    %c0_i32_1 = arith.constant 0 : i32
    return %c0_i32, %c0_i32_0 : i32, i32
  }
  func.func @transform_3(%arg0: i32) -> (i32, i32) {
    %c0_i32 = arith.constant 0 : i32
    %c0_i32_0 = arith.constant 0 : i32
    return %arg0, %c0_i32 : i32, i32
  }
}

module attributes {stable_mosaic.version = 11 : i64} {
  func.func @_matmul_bias_act_kernel(%arg0: i32, %arg1: memref<112x512xbf16, #tpu.memory_space<vmem>>, %arg2: memref<512x128xbf16, #tpu.memory_space<vmem>>, %arg3: memref<1x128xf32, #tpu.memory_space<vmem>>, %arg4: memref<112x128xf32, #tpu.memory_space<vmem>>) attributes {dimension_semantics = [#tpu.dimension_semantics<parallel>], iteration_bounds = array<i64: 1>, scalar_prefetch = 0 : i64, scratch_operands = 0 : i64, tpu.core_type = #tpu.core_type<tc>, window_params = [{transform_indices = @transform_0, window_bounds = array<i64: 112, 512>}, {pipeline_mode = #tpu.pipeline_mode<synchronous>, transform_indices = @transform_1, window_bounds = array<i64: 512, 128>}, {pipeline_mode = #tpu.pipeline_mode<synchronous>, transform_indices = @transform_2, window_bounds = array<i64: 1, 128>}, {transform_indices = @transform_3, window_bounds = array<i64: 112, 128>}]} {
    %c0 = arith.constant 0 : index
    %c0_0 = arith.constant 0 : index
    %0 = vector.load %arg1[%c0, %c0_0] : memref<112x512xbf16, #tpu.memory_space<vmem>>, vector<112x512xbf16>
    %c0_1 = arith.constant 0 : index
    %c0_2 = arith.constant 0 : index
    %1 = vector.load %arg2[%c0_1, %c0_2] : memref<512x128xbf16, #tpu.memory_space<vmem>>, vector<512x128xbf16>
    %cst = arith.constant dense<0.000000e+00> : vector<112x128xf32>
    %2 = tpu.matmul %0, %1, %cst {dimension_numbers = #tpu.dot_dimension_numbers<[1], [0], [0], [1], [0, 0, 1, 1], [], []>} : vector<112x512xbf16>, vector<512x128xbf16>, vector<112x128xf32> -> vector<112x128xf32>
    %c0_3 = arith.constant 0 : index
    %c0_4 = arith.constant 0 : index
    %3 = vector.load %arg3[%c0_3, %c0_4] : memref<1x128xf32, #tpu.memory_space<vmem>>, vector<1x128xf32>
    %4 = vector.broadcast %3 : vector<1x128xf32> to vector<112x128xf32>
    %5 = arith.addf %2, %4 : vector<112x128xf32>
    %cst_5 = arith.constant 0.000000e+00 : f32
    %6 = vector.broadcast %cst_5 : f32 to vector<112x128xf32>
    %7 = arith.maximumf %5, %6 : vector<112x128xf32>
    %c0_6 = arith.constant 0 : index
    %c0_7 = arith.constant 0 : index
    %8 = vector.load %arg4[%c0_6, %c0_7] : memref<112x128xf32, #tpu.memory_space<vmem>>, vector<112x128xf32>
    tpu.vector_store %arg4[%c0_6, %c0_7], %7 {strides = array<i32>} : memref<112x128xf32, #tpu.memory_space<vmem>>, vector<112x128xf32>,
    return
  }
  func.func @transform_0(%arg0: i32) -> (i32, i32) {
    %c0_i32 = arith.constant 0 : i32
    %c0_i32_0 = arith.constant 0 : i32
    return %arg0, %c0_i32 : i32, i32
  }
  func.func @transform_1(%arg0: i32) -> (i32, i32) {
    %c0_i32 = arith.constant 0 : i32
    %c0_i32_0 = arith.constant 0 : i32
    %c0_i32_1 = arith.constant 0 : i32
    return %c0_i32, %c0_i32_0 : i32, i32
  }
  func.func @transform_2(%arg0: i32) -> (i32, i32) {
    %c0_i32 = arith.constant 0 : i32
    %c0_i32_0 = arith.constant 0 : i32
    %c0_i32_1 = arith.constant 0 : i32
    return %c0_i32, %c0_i32_0 : i32, i32
  }
  func.func @transform_3(%arg0: i32) -> (i32, i32) {
    %c0_i32 = arith.constant 0 : i32
    %c0_i32_0 = arith.constant 0 : i32
    return %arg0, %c0_i32 : i32, i32
  }
}

module attributes {stable_mosaic.version = 11 : i64} {
  func.func @_latent_reparam_kernel(%arg0: memref<16x3136xbf16, #tpu.memory_space<vmem>>, %arg1: memref<3136x256xbf16, #tpu.memory_space<vmem>>, %arg2: memref<1x256xf32, #tpu.memory_space<vmem>>, %arg3: memref<16x128xf32, #tpu.memory_space<vmem>>, %arg4: memref<16x128xf32, #tpu.memory_space<vmem>>, %arg5: memref<16x128xf32, #tpu.memory_space<vmem>>, %arg6: memref<16x128xf32, #tpu.memory_space<vmem>>) attributes {dimension_semantics = [], scalar_prefetch = 0 : i64, scratch_operands = 0 : i64, tpu.core_type = #tpu.core_type<tc>} {
    %c0 = arith.constant 0 : index
    %c0_0 = arith.constant 0 : index
    %0 = vector.load %arg0[%c0, %c0_0] : memref<16x3136xbf16, #tpu.memory_space<vmem>>, vector<16x3136xbf16>
    %c0_1 = arith.constant 0 : index
    %c0_2 = arith.constant 0 : index
    %1 = vector.load %arg1[%c0_1, %c0_2] : memref<3136x256xbf16, #tpu.memory_space<vmem>>, vector<3136x256xbf16>
    %cst = arith.constant dense<0.000000e+00> : vector<16x256xf32>
    %2 = tpu.matmul %0, %1, %cst {dimension_numbers = #tpu.dot_dimension_numbers<[1], [0], [0], [1], [0, 0, 1, 1], [], []>} : vector<16x3136xbf16>, vector<3136x256xbf16>, vector<16x256xf32> -> vector<16x256xf32>
    %c0_3 = arith.constant 0 : index
    %c0_4 = arith.constant 0 : index
    %3 = vector.load %arg2[%c0_3, %c0_4] : memref<1x256xf32, #tpu.memory_space<vmem>>, vector<1x256xf32>
    %4 = vector.broadcast %3 : vector<1x256xf32> to vector<16x256xf32>
    %5 = arith.addf %2, %4 : vector<16x256xf32>
    %6 = vector.extract_strided_slice %5 {offsets = [0, 0], sizes = [16, 128], strides = [1, 1]} : vector<16x256xf32> to vector<16x128xf32>
    %7 = vector.extract_strided_slice %5 {offsets = [0, 128], sizes = [16, 128], strides = [1, 1]} : vector<16x256xf32> to vector<16x128xf32>
    %c0_5 = arith.constant 0 : index
    %c0_6 = arith.constant 0 : index
    %8 = vector.load %arg4[%c0_5, %c0_6] : memref<16x128xf32, #tpu.memory_space<vmem>>, vector<16x128xf32>
    tpu.vector_store %arg4[%c0_5, %c0_6], %6 {strides = array<i32>} : memref<16x128xf32, #tpu.memory_space<vmem>>, vector<16x128xf32>,
    %c0_7 = arith.constant 0 : index
    %c0_8 = arith.constant 0 : index
    %9 = vector.load %arg5[%c0_7, %c0_8] : memref<16x128xf32, #tpu.memory_space<vmem>>, vector<16x128xf32>
    tpu.vector_store %arg5[%c0_7, %c0_8], %7 {strides = array<i32>} : memref<16x128xf32, #tpu.memory_space<vmem>>, vector<16x128xf32>,
    %c0_9 = arith.constant 0 : index
    %c0_10 = arith.constant 0 : index
    %10 = vector.load %arg3[%c0_9, %c0_10] : memref<16x128xf32, #tpu.memory_space<vmem>>, vector<16x128xf32>
    %cst_11 = arith.constant 5.000000e-01 : f32
    %11 = vector.broadcast %cst_11 : f32 to vector<16x128xf32>
    %12 = arith.mulf %11, %7 : vector<16x128xf32>
    %13 = math.exp %12 : vector<16x128xf32>
    %14 = arith.mulf %10, %13 : vector<16x128xf32>
    %15 = arith.addf %6, %14 : vector<16x128xf32>
    %c0_12 = arith.constant 0 : index
    %c0_13 = arith.constant 0 : index
    %16 = vector.load %arg6[%c0_12, %c0_13] : memref<16x128xf32, #tpu.memory_space<vmem>>, vector<16x128xf32>
    tpu.vector_store %arg6[%c0_12, %c0_13], %15 {strides = array<i32>} : memref<16x128xf32, #tpu.memory_space<vmem>>, vector<16x128xf32>,
    return
  }
}

module attributes {stable_mosaic.version = 11 : i64} {
  func.func @_matmul_bias_act_kernel(%arg0: i32, %arg1: memref<16x128xbf16, #tpu.memory_space<vmem>>, %arg2: memref<128x3200xbf16, #tpu.memory_space<vmem>>, %arg3: memref<1x3200xf32, #tpu.memory_space<vmem>>, %arg4: memref<16x3200xf32, #tpu.memory_space<vmem>>) attributes {dimension_semantics = [#tpu.dimension_semantics<parallel>], iteration_bounds = array<i64: 1>, scalar_prefetch = 0 : i64, scratch_operands = 0 : i64, tpu.core_type = #tpu.core_type<tc>, window_params = [{transform_indices = @transform_0, window_bounds = array<i64: 16, 128>}, {pipeline_mode = #tpu.pipeline_mode<synchronous>, transform_indices = @transform_1, window_bounds = array<i64: 128, 3200>}, {pipeline_mode = #tpu.pipeline_mode<synchronous>, transform_indices = @transform_2, window_bounds = array<i64: 1, 3200>}, {transform_indices = @transform_3, window_bounds = array<i64: 16, 3200>}]} {
    %c0 = arith.constant 0 : index
    %c0_0 = arith.constant 0 : index
    %0 = vector.load %arg1[%c0, %c0_0] : memref<16x128xbf16, #tpu.memory_space<vmem>>, vector<16x128xbf16>
    %c0_1 = arith.constant 0 : index
    %c0_2 = arith.constant 0 : index
    %1 = vector.load %arg2[%c0_1, %c0_2] : memref<128x3200xbf16, #tpu.memory_space<vmem>>, vector<128x3200xbf16>
    %cst = arith.constant dense<0.000000e+00> : vector<16x3200xf32>
    %2 = tpu.matmul %0, %1, %cst {dimension_numbers = #tpu.dot_dimension_numbers<[1], [0], [0], [1], [0, 0, 1, 1], [], []>} : vector<16x128xbf16>, vector<128x3200xbf16>, vector<16x3200xf32> -> vector<16x3200xf32>
    %c0_3 = arith.constant 0 : index
    %c0_4 = arith.constant 0 : index
    %3 = vector.load %arg3[%c0_3, %c0_4] : memref<1x3200xf32, #tpu.memory_space<vmem>>, vector<1x3200xf32>
    %4 = vector.broadcast %3 : vector<1x3200xf32> to vector<16x3200xf32>
    %5 = arith.addf %2, %4 : vector<16x3200xf32>
    %c0_5 = arith.constant 0 : index
    %c0_6 = arith.constant 0 : index
    %6 = vector.load %arg4[%c0_5, %c0_6] : memref<16x3200xf32, #tpu.memory_space<vmem>>, vector<16x3200xf32>
    tpu.vector_store %arg4[%c0_5, %c0_6], %5 {strides = array<i32>} : memref<16x3200xf32, #tpu.memory_space<vmem>>, vector<16x3200xf32>,
    return
  }
  func.func @transform_0(%arg0: i32) -> (i32, i32) {
    %c0_i32 = arith.constant 0 : i32
    %c0_i32_0 = arith.constant 0 : i32
    return %arg0, %c0_i32 : i32, i32
  }
  func.func @transform_1(%arg0: i32) -> (i32, i32) {
    %c0_i32 = arith.constant 0 : i32
    %c0_i32_0 = arith.constant 0 : i32
    %c0_i32_1 = arith.constant 0 : i32
    return %c0_i32, %c0_i32_0 : i32, i32
  }
  func.func @transform_2(%arg0: i32) -> (i32, i32) {
    %c0_i32 = arith.constant 0 : i32
    %c0_i32_0 = arith.constant 0 : i32
    %c0_i32_1 = arith.constant 0 : i32
    return %c0_i32, %c0_i32_0 : i32, i32
  }
  func.func @transform_3(%arg0: i32) -> (i32, i32) {
    %c0_i32 = arith.constant 0 : i32
    %c0_i32_0 = arith.constant 0 : i32
    return %arg0, %c0_i32 : i32, i32
  }
}

module attributes {stable_mosaic.version = 11 : i64} {
  func.func @_matmul_bias_act_kernel(%arg0: i32, %arg1: memref<128x256xbf16, #tpu.memory_space<vmem>>, %arg2: memref<256x128xbf16, #tpu.memory_space<vmem>>, %arg3: memref<1x128xf32, #tpu.memory_space<vmem>>, %arg4: memref<128x128xf32, #tpu.memory_space<vmem>>) attributes {dimension_semantics = [#tpu.dimension_semantics<parallel>], iteration_bounds = array<i64: 1>, scalar_prefetch = 0 : i64, scratch_operands = 0 : i64, tpu.core_type = #tpu.core_type<tc>, window_params = [{transform_indices = @transform_0, window_bounds = array<i64: 128, 256>}, {pipeline_mode = #tpu.pipeline_mode<synchronous>, transform_indices = @transform_1, window_bounds = array<i64: 256, 128>}, {pipeline_mode = #tpu.pipeline_mode<synchronous>, transform_indices = @transform_2, window_bounds = array<i64: 1, 128>}, {transform_indices = @transform_3, window_bounds = array<i64: 128, 128>}]} {
    %c0 = arith.constant 0 : index
    %c0_0 = arith.constant 0 : index
    %0 = vector.load %arg1[%c0, %c0_0] : memref<128x256xbf16, #tpu.memory_space<vmem>>, vector<128x256xbf16>
    %c0_1 = arith.constant 0 : index
    %c0_2 = arith.constant 0 : index
    %1 = vector.load %arg2[%c0_1, %c0_2] : memref<256x128xbf16, #tpu.memory_space<vmem>>, vector<256x128xbf16>
    %cst = arith.constant dense<0.000000e+00> : vector<128x128xf32>
    %2 = tpu.matmul %0, %1, %cst {dimension_numbers = #tpu.dot_dimension_numbers<[1], [0], [0], [1], [0, 0, 1, 1], [], []>} : vector<128x256xbf16>, vector<256x128xbf16>, vector<128x128xf32> -> vector<128x128xf32>
    %c0_3 = arith.constant 0 : index
    %c0_4 = arith.constant 0 : index
    %3 = vector.load %arg3[%c0_3, %c0_4] : memref<1x128xf32, #tpu.memory_space<vmem>>, vector<1x128xf32>
    %4 = vector.broadcast %3 : vector<1x128xf32> to vector<128x128xf32>
    %5 = arith.addf %2, %4 : vector<128x128xf32>
    %cst_5 = arith.constant 0.000000e+00 : f32
    %6 = vector.broadcast %cst_5 : f32 to vector<128x128xf32>
    %7 = arith.maximumf %5, %6 : vector<128x128xf32>
    %c0_6 = arith.constant 0 : index
    %c0_7 = arith.constant 0 : index
    %8 = vector.load %arg4[%c0_6, %c0_7] : memref<128x128xf32, #tpu.memory_space<vmem>>, vector<128x128xf32>
    tpu.vector_store %arg4[%c0_6, %c0_7], %7 {strides = array<i32>} : memref<128x128xf32, #tpu.memory_space<vmem>>, vector<128x128xf32>,
    return
  }
  func.func @transform_0(%arg0: i32) -> (i32, i32) {
    %c0_i32 = arith.constant 0 : i32
    %c0_i32_0 = arith.constant 0 : i32
    return %arg0, %c0_i32 : i32, i32
  }
  func.func @transform_1(%arg0: i32) -> (i32, i32) {
    %c0_i32 = arith.constant 0 : i32
    %c0_i32_0 = arith.constant 0 : i32
    %c0_i32_1 = arith.constant 0 : i32
    return %c0_i32, %c0_i32_0 : i32, i32
  }
  func.func @transform_2(%arg0: i32) -> (i32, i32) {
    %c0_i32 = arith.constant 0 : i32
    %c0_i32_0 = arith.constant 0 : i32
    %c0_i32_1 = arith.constant 0 : i32
    return %c0_i32, %c0_i32_0 : i32, i32
  }
  func.func @transform_3(%arg0: i32) -> (i32, i32) {
    %c0_i32 = arith.constant 0 : i32
    %c0_i32_0 = arith.constant 0 : i32
    return %arg0, %c0_i32 : i32, i32
  }
}

module attributes {stable_mosaic.version = 11 : i64} {
  func.func @_matmul_bias_act_kernel(%arg0: i32, %arg1: memref<464x128xbf16, #tpu.memory_space<vmem>>, %arg2: memref<128x128xbf16, #tpu.memory_space<vmem>>, %arg3: memref<1x128xf32, #tpu.memory_space<vmem>>, %arg4: memref<464x128xf32, #tpu.memory_space<vmem>>) attributes {dimension_semantics = [#tpu.dimension_semantics<parallel>], iteration_bounds = array<i64: 1>, scalar_prefetch = 0 : i64, scratch_operands = 0 : i64, tpu.core_type = #tpu.core_type<tc>, window_params = [{transform_indices = @transform_0, window_bounds = array<i64: 464, 128>}, {pipeline_mode = #tpu.pipeline_mode<synchronous>, transform_indices = @transform_1, window_bounds = array<i64: 128, 128>}, {pipeline_mode = #tpu.pipeline_mode<synchronous>, transform_indices = @transform_2, window_bounds = array<i64: 1, 128>}, {transform_indices = @transform_3, window_bounds = array<i64: 464, 128>}]} {
    %c0 = arith.constant 0 : index
    %c0_0 = arith.constant 0 : index
    %0 = vector.load %arg1[%c0, %c0_0] : memref<464x128xbf16, #tpu.memory_space<vmem>>, vector<464x128xbf16>
    %c0_1 = arith.constant 0 : index
    %c0_2 = arith.constant 0 : index
    %1 = vector.load %arg2[%c0_1, %c0_2] : memref<128x128xbf16, #tpu.memory_space<vmem>>, vector<128x128xbf16>
    %cst = arith.constant dense<0.000000e+00> : vector<464x128xf32>
    %2 = tpu.matmul %0, %1, %cst {dimension_numbers = #tpu.dot_dimension_numbers<[1], [0], [0], [1], [0, 0, 1, 1], [], []>} : vector<464x128xbf16>, vector<128x128xbf16>, vector<464x128xf32> -> vector<464x128xf32>
    %c0_3 = arith.constant 0 : index
    %c0_4 = arith.constant 0 : index
    %3 = vector.load %arg3[%c0_3, %c0_4] : memref<1x128xf32, #tpu.memory_space<vmem>>, vector<1x128xf32>
    %4 = vector.broadcast %3 : vector<1x128xf32> to vector<464x128xf32>
    %5 = arith.addf %2, %4 : vector<464x128xf32>
    %cst_5 = arith.constant 0.000000e+00 : f32
    %6 = vector.broadcast %cst_5 : f32 to vector<464x128xf32>
    %7 = arith.subf %6, %5 : vector<464x128xf32>
    %8 = math.exp %7 : vector<464x128xf32>
    %cst_6 = arith.constant 1.000000e+00 : f32
    %9 = vector.broadcast %cst_6 : f32 to vector<464x128xf32>
    %10 = arith.addf %9, %8 : vector<464x128xf32>
    %11 = tpu.reciprocal %10 {approx = true} : vector<464x128xf32> -> vector<464x128xf32>
    %c0_7 = arith.constant 0 : index
    %c0_8 = arith.constant 0 : index
    %12 = vector.load %arg4[%c0_7, %c0_8] : memref<464x128xf32, #tpu.memory_space<vmem>>, vector<464x128xf32>
    tpu.vector_store %arg4[%c0_7, %c0_8], %11 {strides = array<i32>} : memref<464x128xf32, #tpu.memory_space<vmem>>, vector<464x128xf32>,
    return
  }
  func.func @transform_0(%arg0: i32) -> (i32, i32) {
    %c0_i32 = arith.constant 0 : i32
    %c0_i32_0 = arith.constant 0 : i32
    return %arg0, %c0_i32 : i32, i32
  }
  func.func @transform_1(%arg0: i32) -> (i32, i32) {
    %c0_i32 = arith.constant 0 : i32
    %c0_i32_0 = arith.constant 0 : i32
    %c0_i32_1 = arith.constant 0 : i32
    return %c0_i32, %c0_i32_0 : i32, i32
  }
  func.func @transform_2(%arg0: i32) -> (i32, i32) {
    %c0_i32 = arith.constant 0 : i32
    %c0_i32_0 = arith.constant 0 : i32
    %c0_i32_1 = arith.constant 0 : i32
    return %c0_i32, %c0_i32_0 : i32, i32
  }
  func.func @transform_3(%arg0: i32) -> (i32, i32) {
    %c0_i32 = arith.constant 0 : i32
    %c0_i32_0 = arith.constant 0 : i32
    return %arg0, %c0_i32 : i32, i32
  }
}

</mosaic_0001>

<llo_original>
// kernel: vae_forward.6
$region0: #{vae_forward.6}
  #allocation0 [shape = 'u32[]', space=smem, size = 0x4, offset = 0x4, fixed_abs, tag = 'smem constant byte address 0x4 - core index']
  #allocation1 [shape = 'u32[72,128]{1,0:T(1,128)}', space=vmem, size = 0x9000, scoped, tag = 'internal scratch']
  %s0 = inlined_call_operand.vmem [shape: bf16[400,16], index: 0, kind: input, shape index: {}]
  %s1 = inlined_call_operand.vmem [shape: bf16[16,128], index: 1, kind: input, shape index: {}]
  %s2 = inlined_call_operand.vmem [shape: f32[1,128], index: 2, kind: input, shape index: {}]
  %s3 = inlined_call_operand.vmem [shape: f32[400,128], index: 3, kind: output, shape index: {}]
  %s4 = sld [smem:[#allocation0]]
  $region22: #{vae_forward.6} parent=0
    _
  %s6 = ssub.s32 1, %s4
  %s7 = scalar_select 0, %s6, %s4
  // Predicated region
  $region2: #{vae_forward.6} parent=0 // pred_check
    _
  $region3: #{vae_forward.6} parent=0 // pred_check_branch
    %9 = sbr.rel (0) target = $region5
  $region4: #{vae_forward.6} parent=0 // pred_region
    _
  $region5: #{vae_forward.6} parent=0 // pred_fallthru
    _
  // Predicated region
  $region6: #{vae_forward.6} parent=0 // pred_check
    _
  $region7: #{vae_forward.6} parent=0 // pred_check_branch
    %11 = sbr.rel (0) target = $region9
  $region8: #{vae_forward.6} parent=0 // pred_region
    _
  $region9: #{vae_forward.6} parent=0 // pred_fallthru
    _
  // Predicated region
  $region10: #{vae_forward.6} parent=0 // pred_check
    _
  $region11: #{vae_forward.6} parent=0 // pred_check_branch
    %13 = sbr.rel (0) target = $region13
  $region12: #{vae_forward.6} parent=0 // pred_region
    _
  $region13: #{vae_forward.6} parent=0 // pred_fallthru
    _
  %v15 = vld [vmem:[%s0] sm:$0xf]
  %v16 = vld [vmem:[%s0 + $0x4] sm:$0xf]
  %v17 = vld [vmem:[%s0 + $0x8] sm:$0xf]
  %v18 = vld [vmem:[%s0 + $0xc] sm:$0xf]
  %v19 = vld [vmem:[%s0 + $0x10] sm:$0xf]
  %v20 = vld [vmem:[%s0 + $0x14] sm:$0xf]
  %v21 = vld [vmem:[%s0 + $0x18] sm:$0xf]
  %v22 = vld [vmem:[%s0 + $0x1c] sm:$0xf]
  %v23 = vld [vmem:[%s0 + $0x20] sm:$0xf]
  %v24 = vld [vmem:[%s0 + $0x24] sm:$0xf]
  %v25 = vld [vmem:[%s0 + $0x28] sm:$0xf]
  %v26 = vld [vmem:[%s0 + $0x2c] sm:$0xf]
  %v27 = vld [vmem:[%s0 + $0x30] sm:$0xf]
  %v28 = vld [vmem:[%s0 + $0x34] sm:$0xf]
  %v29 = vld [vmem:[%s0 + $0x38] sm:$0xf]
  %v30 = vld [vmem:[%s0 + $0x3c] sm:$0xf]
  %v31 = vld [vmem:[%s0 + $0x40] sm:$0xf]
  %v32 = vld [vmem:[%s0 + $0x44] sm:$0xf]
  %v33 = vld [vmem:[%s0 + $0x48] sm:$0xf]
  %v34 = vld [vmem:[%s0 + $0x4c] sm:$0xf]
  %v35 = vld [vmem:[%s0 + $0x50] sm:$0xf]
  %v36 = vld [vmem:[%s0 + $0x54] sm:$0xf]
  %v37 = vld [vmem:[%s0 + $0x58] sm:$0xf]
  %v38 = vld [vmem:[%s0 + $0x5c] sm:$0xf]
  %v39 = vld [vmem:[%s0 + $0x60] sm:$0xf]
  %v40 = vld [vmem:[%s0 + $0x64] sm:$0xf]
  %v41 = vld [vmem:[%s0 + $0x68] sm:$0xf]
  %v42 = vld [vmem:[%s0 + $0x6c] sm:$0xf]
  %v43 = vld [vmem:[%s0 + $0x70] sm:$0xf]
  %v44 = vld [vmem:[%s0 + $0x74] sm:$0xf]
  %v45 = vld [vmem:[%s0 + $0x78] sm:$0xf]
  %v46 = vld [vmem:[%s0 + $0x7c] sm:$0xf]
  %v47 = vld [vmem:[%s0 + $0x80] sm:$0xf]
  %v48 = vld [vmem:[%s0 + $0x84] sm:$0xf]
  %v49 = vld [vmem:[%s0 + $0x88] sm:$0xf]
  %v50 = vld [vmem:[%s0 + $0x8c] sm:$0xf]
  %v51 = vld [vmem:[%s0 + $0x90] sm:$0xf]
  %v52 = vld [vmem:[%s0 + $0x94] sm:$0xf]
  %v53 = vld [vmem:[%s0 + $0x98] sm:$0xf]
  %v54 = vld [vmem:[%s0 + $0x9c] sm:$0xf]
  %v55 = vld [vmem:[%s0 + $0xa0] sm:$0xf]
  %v56 = vld [vmem:[%s0 + $0xa4] sm:$0xf]
  %v57 = vld [vmem:[%s0 + $0xa8] sm:$0xf]
  %v58 = vld [vmem:[%s0 + $0xac] sm:$0xf]
  %v59 = vld [vmem:[%s0 + $0xb0] sm:$0xf]
  %v60 = vld [vmem:[%s0 + $0xb4] sm:$0xf]
  %v61 = vld [vmem:[%s0 + $0xb8] sm:$0xf]
  %v62 = vld [vmem:[%s0 + $0xbc] sm:$0xf]
  %v63 = vld [vmem:[%s0 + $0xc0] sm:$0xf]
  %v64 = vld [vmem:[%s0 + $0xc4] sm:$0xf]
  %v65 = vld [vmem:[%s1] sm:$0xf]
  %v66 = vld [vmem:[%s1 + $0x4] sm:$0xf]
  %v67 = vld [vmem:[%s2] sm:$0x1]
  %v69 = vperm.slane %v67, 0
  %v121 = vunpack.c.l.b16 %v15
  %v122 = vunpack.c.l.b16 %v16
  %v123 = vunpack.c.l.b16 %v17
  %v124 = vunpack.c.l.b16 %v18
  %v125 = vunpack.c.l.b16 %v19
  %v126 = vunpack.c.l.b16 %v20
  %v127 = vunpack.c.l.b16 %v21
  %v128 = vunpack.c.l.b16 %v22
  %v129 = vunpack.c.l.b16 %v23
  %v130 = vunpack.c.l.b16 %v24
  %v131 = vunpack.c.l.b16 %v25
  %v132 = vunpack.c.l.b16 %v26
  %v133 = vunpack.c.l.b16 %v27
  %v134 = vunpack.c.l.b16 %v28
  %v135 = vunpack.c.l.b16 %v29
  %v136 = vunpack.c.l.b16 %v30
  %v137 = vunpack.c.l.b16 %v31
  %v138 = vunpack.c.l.b16 %v32
  %v139 = vunpack.c.l.b16 %v33
  %v140 = vunpack.c.l.b16 %v34
  %v141 = vunpack.c.l.b16 %v35
  %v142 = vunpack.c.l.b16 %v36
  %v143 = vunpack.c.l.b16 %v37
  %v144 = vunpack.c.l.b16 %v38
  %v145 = vunpack.c.l.b16 %v39
  %v146 = vunpack.c.l.b16 %v40
  %v147 = vunpack.c.l.b16 %v41
  %v148 = vunpack.c.l.b16 %v42
  %v149 = vunpack.c.l.b16 %v43
  %v150 = vunpack.c.l.b16 %v44
  %v151 = vunpack.c.l.b16 %v45
  %v152 = vunpack.c.l.b16 %v46
  %v153 = vunpack.c.l.b16 %v47
  %v154 = vunpack.c.l.b16 %v48
  %v155 = vunpack.c.l.b16 %v49
  %v156 = vunpack.c.l.b16 %v50
  %v157 = vunpack.c.l.b16 %v51
  %v158 = vunpack.c.l.b16 %v52
  %v159 = vunpack.c.l.b16 %v53
  %v160 = vunpack.c.l.b16 %v54
  %v161 = vunpack.c.l.b16 %v55
  %v162 = vunpack.c.l.b16 %v56
  %v163 = vunpack.c.l.b16 %v57
  %v164 = vunpack.c.l.b16 %v58
  %v165 = vunpack.c.l.b16 %v59
  %v166 = vunpack.c.l.b16 %v60
  %v167 = vunpack.c.l.b16 %v61
  %v168 = vunpack.c.l.b16 %v62
  %v169 = vunpack.c.l.b16 %v63
  %v170 = vunpack.c.l.b16 %v64
  %v171 = vpack.c.b16 %v122, %v121
  %v172 = vpack.c.b16 %v124, %v123
  %v173 = vpack.c.b16 %v126, %v125
  %v174 = vpack.c.b16 %v128, %v127
  %v175 = vpack.c.b16 %v130, %v129
  %v176 = vpack.c.b16 %v132, %v131
  %v177 = vpack.c.b16 %v134, %v133
  %v178 = vpack.c.b16 %v136, %v135
  %v179 = vpack.c.b16 %v138, %v137
  %v180 = vpack.c.b16 %v140, %v139
  %v181 = vpack.c.b16 %v142, %v141
  %v182 = vpack.c.b16 %v144, %v143
  %v183 = vpack.c.b16 %v146, %v145
  %v184 = vpack.c.b16 %v148, %v147
  %v185 = vpack.c.b16 %v150, %v149
  %v186 = vpack.c.b16 %v152, %v151
  %v187 = vpack.c.b16 %v154, %v153
  %v188 = vpack.c.b16 %v156, %v155
  %v189 = vpack.c.b16 %v158, %v157
  %v190 = vpack.c.b16 %v160, %v159
  %v191 = vpack.c.b16 %v162, %v161
  %v192 = vpack.c.b16 %v164, %v163
  %v193 = vpack.c.b16 %v166, %v165
  %v194 = vpack.c.b16 %v168, %v167
  %v195 = vpack.c.b16 %v170, %v169
  %v198 = vunpack.c.l.b16 %v65
  %v199 = vunpack.c.l.b16 %v66
  %v200 = vpack.c.b16 %v199, %v198
  %vm202 = vcmask 130048
  %v204 = vsel %vm202, %v171, 0
  %v207 = vsel %vm202, %v172, 0
  %v210 = vsel %vm202, %v173, 0
  %v213 = vsel %vm202, %v174, 0
  %v216 = vsel %vm202, %v175, 0
  %v219 = vsel %vm202, %v176, 0
  %v222 = vsel %vm202, %v177, 0
  %v225 = vsel %vm202, %v178, 0
  %v228 = vsel %vm202, %v179, 0
  %v231 = vsel %vm202, %v180, 0
  %v234 = vsel %vm202, %v181, 0
  %v237 = vsel %vm202, %v182, 0
  %v240 = vsel %vm202, %v183, 0
  %v243 = vsel %vm202, %v184, 0
  %v246 = vsel %vm202, %v185, 0
  %v249 = vsel %vm202, %v186, 0
  %v252 = vsel %vm202, %v187, 0
  %v255 = vsel %vm202, %v188, 0
  %v258 = vsel %vm202, %v189, 0
  %v261 = vsel %vm202, %v190, 0
  %v264 = vsel %vm202, %v191, 0
  %v267 = vsel %vm202, %v192, 0
  %v270 = vsel %vm202, %v193, 0
  %v273 = vsel %vm202, %v194, 0
  %v276 = vsel %vm202, %v195, 0
  %278 = vmatpush.bf16.msra.mxu0 0
  %279 = vmatpush.bf16.msra.mxu0 0
  %280 = vmatpush.bf16.msra.mxu0 0
  %281 = vmatpush.bf16.msra.mxu0 0
  %282 = vmatpush.bf16.msra.mxu0 0
  %283 = vmatpush.bf16.msra.mxu0 0
  %284 = vmatpush.bf16.msra.mxu0 0
  %285 = vmatpush.bf16.msra.mxu0 %v200
  %286 = vmatmul.bf16.gmra.mxu0 %v204
  %v287 = vpop.f32.mrf.mxu0
  %v288 = vadd.f32 %v69, %v287
  %v289 = vpop.f32.mrf.mxu0
  %v290 = vadd.f32 %v69, %v289
  %291 = vmatmul.bf16.gmra.mxu0 %v207
  %v292 = vpop.f32.mrf.mxu0
  %v293 = vadd.f32 %v69, %v292
  %v294 = vpop.f32.mrf.mxu0
  %v295 = vadd.f32 %v69, %v294
  %296 = vmatmul.bf16.gmra.mxu0 %v210
  %v297 = vpop.f32.mrf.mxu0
  %v298 = vadd.f32 %v69, %v297
  %v299 = vpop.f32.mrf.mxu0
  %v300 = vadd.f32 %v69, %v299
  %301 = vmatmul.bf16.gmra.mxu0 %v213
  %v302 = vpop.f32.mrf.mxu0
  %v303 = vadd.f32 %v69, %v302
  %v304 = vpop.f32.mrf.mxu0
  %v305 = vadd.f32 %v69, %v304
  %306 = vmatmul.bf16.gmra.mxu0 %v216
  %v307 = vpop.f32.mrf.mxu0
  %v308 = vadd.f32 %v69, %v307
  %v309 = vpop.f32.mrf.mxu0
  %v310 = vadd.f32 %v69, %v309
  %311 = vmatmul.bf16.gmra.mxu0 %v219
  %v312 = vpop.f32.mrf.mxu0
  %v313 = vadd.f32 %v69, %v312
  %v314 = vpop.f32.mrf.mxu0
  %v315 = vadd.f32 %v69, %v314
  %316 = vmatmul.bf16.gmra.mxu0 %v222
  %v317 = vpop.f32.mrf.mxu0
  %v318 = vadd.f32 %v69, %v317
  %v319 = vpop.f32.mrf.mxu0
  %v320 = vadd.f32 %v69, %v319
  %321 = vmatmul.bf16.gmra.mxu0 %v225
  %v322 = vpop.f32.mrf.mxu0
  %v323 = vadd.f32 %v69, %v322
  %v324 = vpop.f32.mrf.mxu0
  %v325 = vadd.f32 %v69, %v324
  %326 = vmatmul.bf16.gmra.mxu0 %v228
  %v327 = vpop.f32.mrf.mxu0
  %v328 = vadd.f32 %v69, %v327
  %v329 = vpop.f32.mrf.mxu0
  %v330 = vadd.f32 %v69, %v329
  %331 = vmatmul.bf16.gmra.mxu0 %v231
  %v332 = vpop.f32.mrf.mxu0
  %v333 = vadd.f32 %v69, %v332
  %v334 = vpop.f32.mrf.mxu0
  %v335 = vadd.f32 %v69, %v334
  %336 = vmatmul.bf16.gmra.mxu0 %v234
  %v337 = vpop.f32.mrf.mxu0
  %v338 = vadd.f32 %v69, %v337
  %v339 = vpop.f32.mrf.mxu0
  %v340 = vadd.f32 %v69, %v339
  %341 = vmatmul.bf16.gmra.mxu0 %v237
  %v342 = vpop.f32.mrf.mxu0
  %v343 = vadd.f32 %v69, %v342
  %v344 = vpop.f32.mrf.mxu0
  %v345 = vadd.f32 %v69, %v344
  %346 = vmatmul.bf16.gmra.mxu0 %v240
  %v347 = vpop.f32.mrf.mxu0
  %v348 = vadd.f32 %v69, %v347
  %v349 = vpop.f32.mrf.mxu0
  %v350 = vadd.f32 %v69, %v349
  %351 = vmatmul.bf16.gmra.mxu0 %v243
  %v352 = vpop.f32.mrf.mxu0
  %v353 = vadd.f32 %v69, %v352
  %v354 = vpop.f32.mrf.mxu0
  %v355 = vadd.f32 %v69, %v354
  %356 = vmatmul.bf16.gmra.mxu0 %v246
  %v357 = vpop.f32.mrf.mxu0
  %v358 = vadd.f32 %v69, %v357
  %v359 = vpop.f32.mrf.mxu0
  %v360 = vadd.f32 %v69, %v359
  %361 = vmatmul.bf16.gmra.mxu0 %v249
  %v362 = vpop.f32.mrf.mxu0
  %v363 = vadd.f32 %v69, %v362
  %v364 = vpop.f32.mrf.mxu0
  %v365 = vadd.f32 %v69, %v364
  %366 = vmatmul.bf16.gmra.mxu0 %v252
  %v367 = vpop.f32.mrf.mxu0
  %v368 = vadd.f32 %v69, %v367
  %v369 = vpop.f32.mrf.mxu0
  %v370 = vadd.f32 %v69, %v369
  %371 = vmatmul.bf16.gmra.mxu0 %v255
  %v372 = vpop.f32.mrf.mxu0
  %v373 = vadd.f32 %v69, %v372
  %v374 = vpop.f32.mrf.mxu0
  %v375 = vadd.f32 %v69, %v374
  %376 = vmatmul.bf16.gmra.mxu0 %v258
  %v377 = vpop.f32.mrf.mxu0
  %v378 = vadd.f32 %v69, %v377
  %v379 = vpop.f32.mrf.mxu0
  %v380 = vadd.f32 %v69, %v379
  %381 = vmatmul.bf16.gmra.mxu0 %v261
  %v382 = vpop.f32.mrf.mxu0
  %v383 = vadd.f32 %v69, %v382
  %v384 = vpop.f32.mrf.mxu0
  %v385 = vadd.f32 %v69, %v384
  %386 = vmatmul.bf16.gmra.mxu0 %v264
  %v387 = vpop.f32.mrf.mxu0
  %v388 = vadd.f32 %v69, %v387
  %v389 = vpop.f32.mrf.mxu0
  %v390 = vadd.f32 %v69, %v389
  %391 = vmatmul.bf16.gmra.mxu0 %v267
  %v392 = vpop.f32.mrf.mxu0
  %v393 = vadd.f32 %v69, %v392
  %v394 = vpop.f32.mrf.mxu0
  %v395 = vadd.f32 %v69, %v394
  %396 = vmatmul.bf16.gmra.mxu0 %v270
  %v397 = vpop.f32.mrf.mxu0
  %v398 = vadd.f32 %v69, %v397
  %v399 = vpop.f32.mrf.mxu0
  %v400 = vadd.f32 %v69, %v399
  %401 = vmatmul.bf16.gmra.mxu0 %v273
  %v402 = vpop.f32.mrf.mxu0
  %v403 = vadd.f32 %v69, %v402
  %v404 = vpop.f32.mrf.mxu0
  %v405 = vadd.f32 %v69, %v404
  %406 = vmatmul.bf16.gmra.mxu0 %v276
  %v407 = vpop.f32.mrf.mxu0
  %v408 = vadd.f32 %v69, %v407
  %v409 = vpop.f32.mrf.mxu0
  %v410 = vadd.f32 %v69, %v409
  %411 = vdwg.mxu0
  %v412 = vmax.f32 %v288, 0.0
  %v413 = vmax.f32 %v290, 0.0
  %v414 = vmax.f32 %v293, 0.0
  %v415 = vmax.f32 %v295, 0.0
  %v416 = vmax.f32 %v298, 0.0
  %v417 = vmax.f32 %v300, 0.0
  %v418 = vmax.f32 %v303, 0.0
  %v419 = vmax.f32 %v305, 0.0
  %v420 = vmax.f32 %v308, 0.0
  %v421 = vmax.f32 %v310, 0.0
  %v422 = vmax.f32 %v313, 0.0
  %v423 = vmax.f32 %v315, 0.0
  %v424 = vmax.f32 %v318, 0.0
  %v425 = vmax.f32 %v320, 0.0
  %v426 = vmax.f32 %v323, 0.0
  %v427 = vmax.f32 %v325, 0.0
  %v428 = vmax.f32 %v328, 0.0
  %v429 = vmax.f32 %v330, 0.0
  %v430 = vmax.f32 %v333, 0.0
  %v431 = vmax.f32 %v335, 0.0
  %v432 = vmax.f32 %v338, 0.0
  %v433 = vmax.f32 %v340, 0.0
  %v434 = vmax.f32 %v343, 0.0
  %v435 = vmax.f32 %v345, 0.0
  %v436 = vmax.f32 %v348, 0.0
  %v437 = vmax.f32 %v350, 0.0
  %v438 = vmax.f32 %v353, 0.0
  %v439 = vmax.f32 %v355, 0.0
  %v440 = vmax.f32 %v358, 0.0
  %v441 = vmax.f32 %v360, 0.0
  %v442 = vmax.f32 %v363, 0.0
  %v443 = vmax.f32 %v365, 0.0
  %v444 = vmax.f32 %v368, 0.0
  %v445 = vmax.f32 %v370, 0.0
  %v446 = vmax.f32 %v373, 0.0
  %v447 = vmax.f32 %v375, 0.0
  %v448 = vmax.f32 %v378, 0.0
  %v449 = vmax.f32 %v380, 0.0
  %v450 = vmax.f32 %v383, 0.0
  %v451 = vmax.f32 %v385, 0.0
  %v452 = vmax.f32 %v388, 0.0
  %v453 = vmax.f32 %v390, 0.0
  %v454 = vmax.f32 %v393, 0.0
  %v455 = vmax.f32 %v395, 0.0
  %v456 = vmax.f32 %v398, 0.0
  %v457 = vmax.f32 %v400, 0.0
  %v458 = vmax.f32 %v403, 0.0
  %v459 = vmax.f32 %v405, 0.0
  %v460 = vmax.f32 %v408, 0.0
  %v461 = vmax.f32 %v410, 0.0
  %462 = vst [vmem:[%s3] sm:$0xff] %v412
  %463 = vst [vmem:[%s3 + $0x8] sm:$0xff] %v413
  %464 = vst [vmem:[%s3 + $0x10] sm:$0xff] %v414
  %465 = vst [vmem:[%s3 + $0x18] sm:$0xff] %v415
  %466 = vst [vmem:[%s3 + $0x20] sm:$0xff] %v416
  %467 = vst [vmem:[%s3 + $0x28] sm:$0xff] %v417
  %468 = vst [vmem:[%s3 + $0x30] sm:$0xff] %v418
  %469 = vst [vmem:[%s3 + $0x38] sm:$0xff] %v419
  %470 = vst [vmem:[%s3 + $0x40] sm:$0xff] %v420
  %471 = vst [vmem:[%s3 + $0x48] sm:$0xff] %v421
  %472 = vst [vmem:[%s3 + $0x50] sm:$0xff] %v422
  %473 = vst [vmem:[%s3 + $0x58] sm:$0xff] %v423
  %474 = vst [vmem:[%s3 + $0x60] sm:$0xff] %v424
  %475 = vst [vmem:[%s3 + $0x68] sm:$0xff] %v425
  %476 = vst [vmem:[%s3 + $0x70] sm:$0xff] %v426
  %477 = vst [vmem:[%s3 + $0x78] sm:$0xff] %v427
  %478 = vst [vmem:[%s3 + $0x80] sm:$0xff] %v428
  %479 = vst [vmem:[%s3 + $0x88] sm:$0xff] %v429
  %480 = vst [vmem:[%s3 + $0x90] sm:$0xff] %v430
  %481 = vst [vmem:[%s3 + $0x98] sm:$0xff] %v431
  %482 = vst [vmem:[%s3 + $0xa0] sm:$0xff] %v432
  %483 = vst [vmem:[%s3 + $0xa8] sm:$0xff] %v433
  %484 = vst [vmem:[%s3 + $0xb0] sm:$0xff] %v434
  %485 = vst [vmem:[%s3 + $0xb8] sm:$0xff] %v435
  %486 = vst [vmem:[%s3 + $0xc0] sm:$0xff] %v436
  %487 = vst [vmem:[%s3 + $0xc8] sm:$0xff] %v437
  %488 = vst [vmem:[%s3 + $0xd0] sm:$0xff] %v438
  %489 = vst [vmem:[%s3 + $0xd8] sm:$0xff] %v439
  %490 = vst [vmem:[%s3 + $0xe0] sm:$0xff] %v440
  %491 = vst [vmem:[%s3 + $0xe8] sm:$0xff] %v441
  %492 = vst [vmem:[%s3 + $0xf0] sm:$0xff] %v442
  %493 = vst [vmem:[%s3 + $0xf8] sm:$0xff] %v443
  %494 = vst [vmem:[%s3 + $0x100] sm:$0xff] %v444
  %495 = vst [vmem:[%s3 + $0x108] sm:$0xff] %v445
  %496 = vst [vmem:[%s3 + $0x110] sm:$0xff] %v446
  %497 = vst [vmem:[%s3 + $0x118] sm:$0xff] %v447
  %498 = vst [vmem:[%s3 + $0x120] sm:$0xff] %v448
  %499 = vst [vmem:[%s3 + $0x128] sm:$0xff] %v449
  %500 = vst [vmem:[%s3 + $0x130] sm:$0xff] %v450
  %501 = vst [vmem:[%s3 + $0x138] sm:$0xff] %v451
  %502 = vst [vmem:[%s3 + $0x140] sm:$0xff] %v452
  %503 = vst [vmem:[%s3 + $0x148] sm:$0xff] %v453
  %504 = vst [vmem:[%s3 + $0x150] sm:$0xff] %v454
  %505 = vst [vmem:[%s3 + $0x158] sm:$0xff] %v455
  %506 = vst [vmem:[%s3 + $0x160] sm:$0xff] %v456
  %507 = vst [vmem:[%s3 + $0x168] sm:$0xff] %v457
  %508 = vst [vmem:[%s3 + $0x170] sm:$0xff] %v458
  %509 = vst [vmem:[%s3 + $0x178] sm:$0xff] %v459
  %510 = vst [vmem:[%s3 + $0x180] sm:$0xff] %v460
  %511 = vst [vmem:[%s3 + $0x188] sm:$0xff] %v461
  // Predicated region
  $region14: #{vae_forward.6} parent=0 // pred_check
    _
  $region15: #{vae_forward.6} parent=0 // pred_check_branch
    %513 = sbr.rel (0) target = $region17
  $region16: #{vae_forward.6} parent=0 // pred_region
    _
  $region17: #{vae_forward.6} parent=0 // pred_fallthru
    _
  // Predicated region
  $region18: #{vae_forward.6} parent=0 // pred_check
    _
  $region19: #{vae_forward.6} parent=0 // pred_check_branch
    %515 = sbr.rel (0) target = $region21
  $region20: #{vae_forward.6} parent=0 // pred_region
    _
  $region21: #{vae_forward.6} parent=0 // pred_fallthru
    _

// kernel: vae_forward.7
$region0: #{vae_forward.7}
  #allocation0 [shape = 'u32[]', space=smem, size = 0x4, offset = 0x4, fixed_abs, tag = 'smem constant byte address 0x4 - core index']
  #allocation1 [shape = 'u32[72,128]{1,0:T(1,128)}', space=vmem, size = 0x9000, scoped, tag = 'internal scratch']
  %s0 = inlined_call_operand.vmem [shape: bf16[112,512], index: 0, kind: input, shape index: {}]
  %s1 = inlined_call_operand.vmem [shape: bf16[512,128], index: 1, kind: input, shape index: {}]
  %s2 = inlined_call_operand.vmem [shape: f32[1,128], index: 2, kind: input, shape index: {}]
  %s3 = inlined_call_operand.vmem [shape: f32[112,128], index: 3, kind: output, shape index: {}]
  %s4 = sld [smem:[#allocation0]]
  $region22: #{vae_forward.7} parent=0
    _
  %s6 = ssub.s32 1, %s4
  %s7 = scalar_select 0, %s6, %s4
  // Predicated region
  $region2: #{vae_forward.7} parent=0 // pred_check
    _
  $region3: #{vae_forward.7} parent=0 // pred_check_branch
    %9 = sbr.rel (0) target = $region5
  $region4: #{vae_forward.7} parent=0 // pred_region
    _
  $region5: #{vae_forward.7} parent=0 // pred_fallthru
    _
  // Predicated region
  $region6: #{vae_forward.7} parent=0 // pred_check
    _
  $region7: #{vae_forward.7} parent=0 // pred_check_branch
    %11 = sbr.rel (0) target = $region9
  $region8: #{vae_forward.7} parent=0 // pred_region
    _
  $region9: #{vae_forward.7} parent=0 // pred_fallthru
    _
  // Predicated region
  $region10: #{vae_forward.7} parent=0 // pred_check
    _
  $region11: #{vae_forward.7} parent=0 // pred_check_branch
    %13 = sbr.rel (0) target = $region13
  $region12: #{vae_forward.7} parent=0 // pred_region
    _
  $region13: #{vae_forward.7} parent=0 // pred_fallthru
    _
  %v14 = vld [vmem:[%s0] sm:$0xff]
  %v15 = vld [vmem:[%s0 + $0x8] sm:$0xff]
  %v16 = vld [vmem:[%s0 + $0x10] sm:$0xff]
  %v17 = vld [vmem:[%s0 + $0x18] sm:$0xff]
  %v18 = vld [vmem:[%s0 + $0x20] sm:$0xff]
  %v19 = vld [vmem:[%s0 + $0x28] sm:$0xff]
  %v20 = vld [vmem:[%s0 + $0x30] sm:$0xff]
  %v21 = vld [vmem:[%s0 + $0x38] sm:$0xff]
  %v22 = vld [vmem:[%s0 + $0x40] sm:$0xff]
  %v23 = vld [vmem:[%s0 + $0x48] sm:$0xff]
  %v24 = vld [vmem:[%s0 + $0x50] sm:$0xff]
  %v25 = vld [vmem:[%s0 + $0x58] sm:$0xff]
  %v26 = vld [vmem:[%s0 + $0x60] sm:$0xff]
  %v27 = vld [vmem:[%s0 + $0x68] sm:$0xff]
  %v28 = vld [vmem:[%s0 + $0x70] sm:$0xff]
  %v29 = vld [vmem:[%s0 + $0x78] sm:$0xff]
  %v30 = vld [vmem:[%s0 + $0x80] sm:$0xff]
  %v31 = vld [vmem:[%s0 + $0x88] sm:$0xff]
  %v32 = vld [vmem:[%s0 + $0x90] sm:$0xff]
  %v33 = vld [vmem:[%s0 + $0x98] sm:$0xff]
  %v34 = vld [vmem:[%s0 + $0xa0] sm:$0xff]
  %v35 = vld [vmem:[%s0 + $0xa8] sm:$0xff]
  %v36 = vld [vmem:[%s0 + $0xb0] sm:$0xff]
  %v37 = vld [vmem:[%s0 + $0xb8] sm:$0xff]
  %v38 = vld [vmem:[%s0 + $0xc0] sm:$0xff]
  %v39 = vld [vmem:[%s0 + $0xc8] sm:$0xff]
  %v40 = vld [vmem:[%s0 + $0xd0] sm:$0xff]
  %v41 = vld [vmem:[%s0 + $0xd8] sm:$0xff]
  %v42 = vld [vmem:[%s1] sm:$0xf]
  %v43 = vld [vmem:[%s1 + $0x4] sm:$0xf]
  %v44 = vld [vmem:[%s1 + $0x8] sm:$0xf]
  %v45 = vld [vmem:[%s1 + $0xc] sm:$0xf]
  %v46 = vld [vmem:[%s1 + $0x10] sm:$0xf]
  %v47 = vld [vmem:[%s1 + $0x14] sm:$0xf]
  %v48 = vld [vmem:[%s1 + $0x18] sm:$0xf]
  %v49 = vld [vmem:[%s1 + $0x1c] sm:$0xf]
  %v50 = vld [vmem:[%s1 + $0x20] sm:$0xf]
  %v51 = vld [vmem:[%s1 + $0x24] sm:$0xf]
  %v52 = vld [vmem:[%s1 + $0x28] sm:$0xf]
  %v53 = vld [vmem:[%s1 + $0x2c] sm:$0xf]
  %v54 = vld [vmem:[%s1 + $0x30] sm:$0xf]
  %v55 = vld [vmem:[%s1 + $0x34] sm:$0xf]
  %v56 = vld [vmem:[%s1 + $0x38] sm:$0xf]
  %v57 = vld [vmem:[%s1 + $0x3c] sm:$0xf]
  %v58 = vld [vmem:[%s1 + $0x40] sm:$0xf]
  %v59 = vld [vmem:[%s1 + $0x44] sm:$0xf]
  %v60 = vld [vmem:[%s1 + $0x48] sm:$0xf]
  %v61 = vld [vmem:[%s1 + $0x4c] sm:$0xf]
  %v62 = vld [vmem:[%s1 + $0x50] sm:$0xf]
  %v63 = vld [vmem:[%s1 + $0x54] sm:$0xf]
  %v64 = vld [vmem:[%s1 + $0x58] sm:$0xf]
  %v65 = vld [vmem:[%s1 + $0x5c] sm:$0xf]
  %v66 = vld [vmem:[%s1 + $0x60] sm:$0xf]
  %v67 = vld [vmem:[%s1 + $0x64] sm:$0xf]
  %v68 = vld [vmem:[%s1 + $0x68] sm:$0xf]
  %v69 = vld [vmem:[%s1 + $0x6c] sm:$0xf]
  %v70 = vld [vmem:[%s1 + $0x70] sm:$0xf]
  %v71 = vld [vmem:[%s1 + $0x74] sm:$0xf]
  %v72 = vld [vmem:[%s1 + $0x78] sm:$0xf]
  %v73 = vld [vmem:[%s1 + $0x7c] sm:$0xf]
  %v74 = vld [vmem:[%s1 + $0x80] sm:$0xf]
  %v75 = vld [vmem:[%s1 + $0x84] sm:$0xf]
  %v76 = vld [vmem:[%s1 + $0x88] sm:$0xf]
  %v77 = vld [vmem:[%s1 + $0x8c] sm:$0xf]
  %v78 = vld [vmem:[%s1 + $0x90] sm:$0xf]
  %v79 = vld [vmem:[%s1 + $0x94] sm:$0xf]
  %v80 = vld [vmem:[%s1 + $0x98] sm:$0xf]
  %v81 = vld [vmem:[%s1 + $0x9c] sm:$0xf]
  %v82 = vld [vmem:[%s1 + $0xa0] sm:$0xf]
  %v83 = vld [vmem:[%s1 + $0xa4] sm:$0xf]
  %v84 = vld [vmem:[%s1 + $0xa8] sm:$0xf]
  %v85 = vld [vmem:[%s1 + $0xac] sm:$0xf]
  %v86 = vld [vmem:[%s1 + $0xb0] sm:$0xf]
  %v87 = vld [vmem:[%s1 + $0xb4] sm:$0xf]
  %v88 = vld [vmem:[%s1 + $0xb8] sm:$0xf]
  %v89 = vld [vmem:[%s1 + $0xbc] sm:$0xf]
  %v90 = vld [vmem:[%s1 + $0xc0] sm:$0xf]
  %v91 = vld [vmem:[%s1 + $0xc4] sm:$0xf]
  %v92 = vld [vmem:[%s1 + $0xc8] sm:$0xf]
  %v93 = vld [vmem:[%s1 + $0xcc] sm:$0xf]
  %v94 = vld [vmem:[%s1 + $0xd0] sm:$0xf]
  %v95 = vld [vmem:[%s1 + $0xd4] sm:$0xf]
  %v96 = vld [vmem:[%s1 + $0xd8] sm:$0xf]
  %v97 = vld [vmem:[%s1 + $0xdc] sm:$0xf]
  %v98 = vld [vmem:[%s1 + $0xe0] sm:$0xf]
  %v99 = vld [vmem:[%s1 + $0xe4] sm:$0xf]
  %v100 = vld [vmem:[%s1 + $0xe8] sm:$0xf]
  %v101 = vld [vmem:[%s1 + $0xec] sm:$0xf]
  %v102 = vld [vmem:[%s1 + $0xf0] sm:$0xf]
  %v103 = vld [vmem:[%s1 + $0xf4] sm:$0xf]
  %v104 = vld [vmem:[%s1 + $0xf8] sm:$0xf]
  %v105 = vld [vmem:[%s1 + $0xfc] sm:$0xf]
  %v106 = vld [vmem:[%s2] sm:$0x1]
  %v108 = vperm.slane %v106, 0
  %v138 = vunpack.c.l.b16 %v14
  %v139 = vunpack.c.h.b16 %v14
  %v140 = vunpack.c.l.b16 %v15
  %v141 = vunpack.c.h.b16 %v15
  %v142 = vunpack.c.l.b16 %v16
  %v143 = vunpack.c.h.b16 %v16
  %v144 = vunpack.c.l.b16 %v17
  %v145 = vunpack.c.h.b16 %v17
  %v146 = vunpack.c.l.b16 %v18
  %v147 = vunpack.c.h.b16 %v18
  %v148 = vunpack.c.l.b16 %v19
  %v149 = vunpack.c.h.b16 %v19
  %v150 = vunpack.c.l.b16 %v20
  %v151 = vunpack.c.h.b16 %v20
  %v152 = vunpack.c.l.b16 %v21
  %v153 = vunpack.c.h.b16 %v21
  %v154 = vunpack.c.l.b16 %v22
  %v155 = vunpack.c.h.b16 %v22
  %v156 = vunpack.c.l.b16 %v23
  %v157 = vunpack.c.h.b16 %v23
  %v158 = vunpack.c.l.b16 %v24
  %v159 = vunpack.c.h.b16 %v24
  %v160 = vunpack.c.l.b16 %v25
  %v161 = vunpack.c.h.b16 %v25
  %v162 = vunpack.c.l.b16 %v26
  %v163 = vunpack.c.h.b16 %v26
  %v164 = vunpack.c.l.b16 %v27
  %v165 = vunpack.c.h.b16 %v27
  %v166 = vunpack.c.l.b16 %v28
  %v167 = vunpack.c.h.b16 %v28
  %v168 = vunpack.c.l.b16 %v29
  %v169 = vunpack.c.h.b16 %v29
  %v170 = vunpack.c.l.b16 %v30
  %v171 = vunpack.c.h.b16 %v30
  %v172 = vunpack.c.l.b16 %v31
  %v173 = vunpack.c.h.b16 %v31
  %v174 = vunpack.c.l.b16 %v32
  %v175 = vunpack.c.h.b16 %v32
  %v176 = vunpack.c.l.b16 %v33
  %v177 = vunpack.c.h.b16 %v33
  %v178 = vunpack.c.l.b16 %v34
  %v179 = vunpack.c.h.b16 %v34
  %v180 = vunpack.c.l.b16 %v35
  %v181 = vunpack.c.h.b16 %v35
  %v182 = vunpack.c.l.b16 %v36
  %v183 = vunpack.c.h.b16 %v36
  %v184 = vunpack.c.l.b16 %v37
  %v185 = vunpack.c.h.b16 %v37
  %v186 = vunpack.c.l.b16 %v38
  %v187 = vunpack.c.h.b16 %v38
  %v188 = vunpack.c.l.b16 %v39
  %v189 = vunpack.c.h.b16 %v39
  %v190 = vunpack.c.l.b16 %v40
  %v191 = vunpack.c.h.b16 %v40
  %v192 = vunpack.c.l.b16 %v41
  %v193 = vunpack.c.h.b16 %v41
  %v194 = vpack.c.b16 %v142, %v138
  %v195 = vpack.c.b16 %v143, %v139
  %v196 = vpack.c.b16 %v144, %v140
  %v197 = vpack.c.b16 %v145, %v141
  %v198 = vpack.c.b16 %v150, %v146
  %v199 = vpack.c.b16 %v151, %v147
  %v200 = vpack.c.b16 %v152, %v148
  %v201 = vpack.c.b16 %v153, %v149
  %v202 = vpack.c.b16 %v158, %v154
  %v203 = vpack.c.b16 %v159, %v155
  %v204 = vpack.c.b16 %v160, %v156
  %v205 = vpack.c.b16 %v161, %v157
  %v206 = vpack.c.b16 %v166, %v162
  %v207 = vpack.c.b16 %v167, %v163
  %v208 = vpack.c.b16 %v168, %v164
  %v209 = vpack.c.b16 %v169, %v165
  %v210 = vpack.c.b16 %v174, %v170
  %v211 = vpack.c.b16 %v175, %v171
  %v212 = vpack.c.b16 %v176, %v172
  %v213 = vpack.c.b16 %v177, %v173
  %v214 = vpack.c.b16 %v182, %v178
  %v215 = vpack.c.b16 %v183, %v179
  %v216 = vpack.c.b16 %v184, %v180
  %v217 = vpack.c.b16 %v185, %v181
  %v218 = vpack.c.b16 %v190, %v186
  %v219 = vpack.c.b16 %v191, %v187
  %v220 = vpack.c.b16 %v192, %v188
  %v221 = vpack.c.b16 %v193, %v189
  %v314 = vunpack.c.l.b16 %v42
  %v315 = vunpack.c.l.b16 %v43
  %v316 = vunpack.c.l.b16 %v44
  %v317 = vunpack.c.l.b16 %v45
  %v318 = vunpack.c.l.b16 %v46
  %v319 = vunpack.c.l.b16 %v47
  %v320 = vunpack.c.l.b16 %v48
  %v321 = vunpack.c.l.b16 %v49
  %v322 = vunpack.c.l.b16 %v50
  %v323 = vunpack.c.l.b16 %v51
  %v324 = vunpack.c.l.b16 %v52
  %v325 = vunpack.c.l.b16 %v53
  %v326 = vunpack.c.l.b16 %v54
  %v327 = vunpack.c.l.b16 %v55
  %v328 = vunpack.c.l.b16 %v56
  %v329 = vunpack.c.l.b16 %v57
  %v330 = vunpack.c.l.b16 %v58
  %v331 = vunpack.c.l.b16 %v59
  %v332 = vunpack.c.l.b16 %v60
  %v333 = vunpack.c.l.b16 %v61
  %v334 = vunpack.c.l.b16 %v62
  %v335 = vunpack.c.l.b16 %v63
  %v336 = vunpack.c.l.b16 %v64
  %v337 = vunpack.c.l.b16 %v65
  %v338 = vunpack.c.l.b16 %v66
  %v339 = vunpack.c.l.b16 %v67
  %v340 = vunpack.c.l.b16 %v68
  %v341 = vunpack.c.l.b16 %v69
  %v342 = vunpack.c.l.b16 %v70
  %v343 = vunpack.c.l.b16 %v71
  %v344 = vunpack.c.l.b16 %v72
  %v345 = vunpack.c.l.b16 %v73
  %v346 = vunpack.c.l.b16 %v74
  %v347 = vunpack.c.l.b16 %v75
  %v348 = vunpack.c.l.b16 %v76
  %v349 = vunpack.c.l.b16 %v77
  %v350 = vunpack.c.l.b16 %v78
  %v351 = vunpack.c.l.b16 %v79
  %v352 = vunpack.c.l.b16 %v80
  %v353 = vunpack.c.l.b16 %v81
  %v354 = vunpack.c.l.b16 %v82
  %v355 = vunpack.c.l.b16 %v83
  %v356 = vunpack.c.l.b16 %v84
  %v357 = vunpack.c.l.b16 %v85
  %v358 = vunpack.c.l.b16 %v86
  %v359 = vunpack.c.l.b16 %v87
  %v360 = vunpack.c.l.b16 %v88
  %v361 = vunpack.c.l.b16 %v89
  %v362 = vunpack.c.l.b16 %v90
  %v363 = vunpack.c.l.b16 %v91
  %v364 = vunpack.c.l.b16 %v92
  %v365 = vunpack.c.l.b16 %v93
  %v366 = vunpack.c.l.b16 %v94
  %v367 = vunpack.c.l.b16 %v95
  %v368 = vunpack.c.l.b16 %v96
  %v369 = vunpack.c.l.b16 %v97
  %v370 = vunpack.c.l.b16 %v98
  %v371 = vunpack.c.l.b16 %v99
  %v372 = vunpack.c.l.b16 %v100
  %v373 = vunpack.c.l.b16 %v101
  %v374 = vunpack.c.l.b16 %v102
  %v375 = vunpack.c.l.b16 %v103
  %v376 = vunpack.c.l.b16 %v104
  %v377 = vunpack.c.l.b16 %v105
  %v378 = vpack.c.b16 %v315, %v314
  %v379 = vpack.c.b16 %v317, %v316
  %v380 = vpack.c.b16 %v319, %v318
  %v381 = vpack.c.b16 %v321, %v320
  %v382 = vpack.c.b16 %v323, %v322
  %v383 = vpack.c.b16 %v325, %v324
  %v384 = vpack.c.b16 %v327, %v326
  %v385 = vpack.c.b16 %v329, %v328
  %v386 = vpack.c.b16 %v331, %v330
  %v387 = vpack.c.b16 %v333, %v332
  %v388 = vpack.c.b16 %v335, %v334
  %v389 = vpack.c.b16 %v337, %v336
  %v390 = vpack.c.b16 %v339, %v338
  %v391 = vpack.c.b16 %v341, %v340
  %v392 = vpack.c.b16 %v343, %v342
  %v393 = vpack.c.b16 %v345, %v344
  %v394 = vpack.c.b16 %v347, %v346
  %v395 = vpack.c.b16 %v349, %v348
  %v396 = vpack.c.b16 %v351, %v350
  %v397 = vpack.c.b16 %v353, %v352
  %v398 = vpack.c.b16 %v355, %v354
  %v399 = vpack.c.b16 %v357, %v356
  %v400 = vpack.c.b16 %v359, %v358
  %v401 = vpack.c.b16 %v361, %v360
  %v402 = vpack.c.b16 %v363, %v362
  %v403 = vpack.c.b16 %v365, %v364
  %v404 = vpack.c.b16 %v367, %v366
  %v405 = vpack.c.b16 %v369, %v368
  %v406 = vpack.c.b16 %v371, %v370
  %v407 = vpack.c.b16 %v373, %v372
  %v408 = vpack.c.b16 %v375, %v374
  %v409 = vpack.c.b16 %v377, %v376
  %442 = vmatpush.bf16.msra.mxu0 %v385
  %443 = vmatpush.bf16.msra.mxu0 %v384
  %444 = vmatpush.bf16.msra.mxu0 %v383
  %445 = vmatpush.bf16.msra.mxu0 %v382
  %446 = vmatpush.bf16.msra.mxu0 %v381
  %447 = vmatpush.bf16.msra.mxu0 %v380
  %448 = vmatpush.bf16.msra.mxu0 %v379
  %449 = vmatpush.bf16.msra.mxu0 %v378
  %450 = vmatmul.bf16.gmra.mxu0 %v194
  %v451 = vpop.f32.mrf.mxu0
  %v452 = vadd.f32 %v108, %v451
  %v453 = vpop.f32.mrf.mxu0
  %v454 = vadd.f32 %v108, %v453
  %455 = vmatmul.bf16.gmra.mxu0 %v198
  %v456 = vpop.f32.mrf.mxu0
  %v457 = vadd.f32 %v108, %v456
  %v458 = vpop.f32.mrf.mxu0
  %v459 = vadd.f32 %v108, %v458
  %460 = vmatmul.bf16.gmra.mxu0 %v202
  %v461 = vpop.f32.mrf.mxu0
  %v462 = vadd.f32 %v108, %v461
  %v463 = vpop.f32.mrf.mxu0
  %v464 = vadd.f32 %v108, %v463
  %465 = vmatmul.bf16.gmra.mxu0 %v206
  %v466 = vpop.f32.mrf.mxu0
  %v467 = vadd.f32 %v108, %v466
  %v468 = vpop.f32.mrf.mxu0
  %v469 = vadd.f32 %v108, %v468
  %470 = vmatmul.bf16.gmra.mxu0 %v210
  %v471 = vpop.f32.mrf.mxu0
  %v472 = vadd.f32 %v108, %v471
  %v473 = vpop.f32.mrf.mxu0
  %v474 = vadd.f32 %v108, %v473
  %475 = vmatmul.bf16.gmra.mxu0 %v214
  %v476 = vpop.f32.mrf.mxu0
  %v477 = vadd.f32 %v108, %v476
  %v478 = vpop.f32.mrf.mxu0
  %v479 = vadd.f32 %v108, %v478
  %480 = vmatmul.bf16.gmra.mxu0 %v218
  %v481 = vpop.f32.mrf.mxu0
  %v482 = vadd.f32 %v108, %v481
  %v483 = vpop.f32.mrf.mxu0
  %v484 = vadd.f32 %v108, %v483
  %485 = vdwg.mxu0
  %486 = vmatpush.bf16.msra.mxu0 %v393
  %487 = vmatpush.bf16.msra.mxu0 %v392
  %488 = vmatpush.bf16.msra.mxu0 %v391
  %489 = vmatpush.bf16.msra.mxu0 %v390
  %490 = vmatpush.bf16.msra.mxu0 %v389
  %491 = vmatpush.bf16.msra.mxu0 %v388
  %492 = vmatpush.bf16.msra.mxu0 %v387
  %493 = vmatpush.bf16.msra.mxu0 %v386
  %494 = vmatmul.bf16.gmra.mxu0 %v195
  %v495 = vpop.f32.mrf.mxu0
  %v496 = vadd.f32 %v452, %v495
  %v497 = vpop.f32.mrf.mxu0
  %v498 = vadd.f32 %v454, %v497
  %499 = vmatmul.bf16.gmra.mxu0 %v199
  %v500 = vpop.f32.mrf.mxu0
  %v501 = vadd.f32 %v457, %v500
  %v502 = vpop.f32.mrf.mxu0
  %v503 = vadd.f32 %v459, %v502
  %504 = vmatmul.bf16.gmra.mxu0 %v203
  %v505 = vpop.f32.mrf.mxu0
  %v506 = vadd.f32 %v462, %v505
  %v507 = vpop.f32.mrf.mxu0
  %v508 = vadd.f32 %v464, %v507
  %509 = vmatmul.bf16.gmra.mxu0 %v207
  %v510 = vpop.f32.mrf.mxu0
  %v511 = vadd.f32 %v467, %v510
  %v512 = vpop.f32.mrf.mxu0
  %v513 = vadd.f32 %v469, %v512
  %514 = vmatmul.bf16.gmra.mxu0 %v211
  %v515 = vpop.f32.mrf.mxu0
  %v516 = vadd.f32 %v472, %v515
  %v517 = vpop.f32.mrf.mxu0
  %v518 = vadd.f32 %v474, %v517
  %519 = vmatmul.bf16.gmra.mxu0 %v215
  %v520 = vpop.f32.mrf.mxu0
  %v521 = vadd.f32 %v477, %v520
  %v522 = vpop.f32.mrf.mxu0
  %v523 = vadd.f32 %v479, %v522
  %524 = vmatmul.bf16.gmra.mxu0 %v219
  %v525 = vpop.f32.mrf.mxu0
  %v526 = vadd.f32 %v482, %v525
  %v527 = vpop.f32.mrf.mxu0
  %v528 = vadd.f32 %v484, %v527
  %529 = vdwg.mxu0
  %530 = vmatpush.bf16.msra.mxu0 %v401
  %531 = vmatpush.bf16.msra.mxu0 %v400
  %532 = vmatpush.bf16.msra.mxu0 %v399
  %533 = vmatpush.bf16.msra.mxu0 %v398
  %534 = vmatpush.bf16.msra.mxu0 %v397
  %535 = vmatpush.bf16.msra.mxu0 %v396
  %536 = vmatpush.bf16.msra.mxu0 %v395
  %537 = vmatpush.bf16.msra.mxu0 %v394
  %538 = vmatmul.bf16.gmra.mxu0 %v196
  %v539 = vpop.f32.mrf.mxu0
  %v540 = vadd.f32 %v496, %v539
  %v541 = vpop.f32.mrf.mxu0
  %v542 = vadd.f32 %v498, %v541
  %543 = vmatmul.bf16.gmra.mxu0 %v200
  %v544 = vpop.f32.mrf.mxu0
  %v545 = vadd.f32 %v501, %v544
  %v546 = vpop.f32.mrf.mxu0
  %v547 = vadd.f32 %v503, %v546
  %548 = vmatmul.bf16.gmra.mxu0 %v204
  %v549 = vpop.f32.mrf.mxu0
  %v550 = vadd.f32 %v506, %v549
  %v551 = vpop.f32.mrf.mxu0
  %v552 = vadd.f32 %v508, %v551
  %553 = vmatmul.bf16.gmra.mxu0 %v208
  %v554 = vpop.f32.mrf.mxu0
  %v555 = vadd.f32 %v511, %v554
  %v556 = vpop.f32.mrf.mxu0
  %v557 = vadd.f32 %v513, %v556
  %558 = vmatmul.bf16.gmra.mxu0 %v212
  %v559 = vpop.f32.mrf.mxu0
  %v560 = vadd.f32 %v516, %v559
  %v561 = vpop.f32.mrf.mxu0
  %v562 = vadd.f32 %v518, %v561
  %563 = vmatmul.bf16.gmra.mxu0 %v216
  %v564 = vpop.f32.mrf.mxu0
  %v565 = vadd.f32 %v521, %v564
  %v566 = vpop.f32.mrf.mxu0
  %v567 = vadd.f32 %v523, %v566
  %568 = vmatmul.bf16.gmra.mxu0 %v220
  %v569 = vpop.f32.mrf.mxu0
  %v570 = vadd.f32 %v526, %v569
  %v571 = vpop.f32.mrf.mxu0
  %v572 = vadd.f32 %v528, %v571
  %573 = vdwg.mxu0
  %574 = vmatpush.bf16.msra.mxu0 %v409
  %575 = vmatpush.bf16.msra.mxu0 %v408
  %576 = vmatpush.bf16.msra.mxu0 %v407
  %577 = vmatpush.bf16.msra.mxu0 %v406
  %578 = vmatpush.bf16.msra.mxu0 %v405
  %579 = vmatpush.bf16.msra.mxu0 %v404
  %580 = vmatpush.bf16.msra.mxu0 %v403
  %581 = vmatpush.bf16.msra.mxu0 %v402
  %582 = vmatmul.bf16.gmra.mxu0 %v197
  %v583 = vpop.f32.mrf.mxu0
  %v584 = vadd.f32 %v540, %v583
  %v585 = vpop.f32.mrf.mxu0
  %v586 = vadd.f32 %v542, %v585
  %587 = vmatmul.bf16.gmra.mxu0 %v201
  %v588 = vpop.f32.mrf.mxu0
  %v589 = vadd.f32 %v545, %v588
  %v590 = vpop.f32.mrf.mxu0
  %v591 = vadd.f32 %v547, %v590
  %592 = vmatmul.bf16.gmra.mxu0 %v205
  %v593 = vpop.f32.mrf.mxu0
  %v594 = vadd.f32 %v550, %v593
  %v595 = vpop.f32.mrf.mxu0
  %v596 = vadd.f32 %v552, %v595
  %597 = vmatmul.bf16.gmra.mxu0 %v209
  %v598 = vpop.f32.mrf.mxu0
  %v599 = vadd.f32 %v555, %v598
  %v600 = vpop.f32.mrf.mxu0
  %v601 = vadd.f32 %v557, %v600
  %602 = vmatmul.bf16.gmra.mxu0 %v213
  %v603 = vpop.f32.mrf.mxu0
  %v604 = vadd.f32 %v560, %v603
  %v605 = vpop.f32.mrf.mxu0
  %v606 = vadd.f32 %v562, %v605
  %607 = vmatmul.bf16.gmra.mxu0 %v217
  %v608 = vpop.f32.mrf.mxu0
  %v609 = vadd.f32 %v565, %v608
  %v610 = vpop.f32.mrf.mxu0
  %v611 = vadd.f32 %v567, %v610
  %612 = vmatmul.bf16.gmra.mxu0 %v221
  %v613 = vpop.f32.mrf.mxu0
  %v614 = vadd.f32 %v570, %v613
  %v615 = vpop.f32.mrf.mxu0
  %v616 = vadd.f32 %v572, %v615
  %617 = vdwg.mxu0
  %v618 = vmax.f32 %v584, 0.0
  %v619 = vmax.f32 %v586, 0.0
  %v620 = vmax.f32 %v589, 0.0
  %v621 = vmax.f32 %v591, 0.0
  %v622 = vmax.f32 %v594, 0.0
  %v623 = vmax.f32 %v596, 0.0
  %v624 = vmax.f32 %v599, 0.0
  %v625 = vmax.f32 %v601, 0.0
  %v626 = vmax.f32 %v604, 0.0
  %v627 = vmax.f32 %v606, 0.0
  %v628 = vmax.f32 %v609, 0.0
  %v629 = vmax.f32 %v611, 0.0
  %v630 = vmax.f32 %v614, 0.0
  %v631 = vmax.f32 %v616, 0.0
  %632 = vst [vmem:[%s3] sm:$0xff] %v618
  %633 = vst [vmem:[%s3 + $0x8] sm:$0xff] %v619
  %634 = vst [vmem:[%s3 + $0x10] sm:$0xff] %v620
  %635 = vst [vmem:[%s3 + $0x18] sm:$0xff] %v621
  %636 = vst [vmem:[%s3 + $0x20] sm:$0xff] %v622
  %637 = vst [vmem:[%s3 + $0x28] sm:$0xff] %v623
  %638 = vst [vmem:[%s3 + $0x30] sm:$0xff] %v624
  %639 = vst [vmem:[%s3 + $0x38] sm:$0xff] %v625
  %640 = vst [vmem:[%s3 + $0x40] sm:$0xff] %v626
  %641 = vst [vmem:[%s3 + $0x48] sm:$0xff] %v627
  %642 = vst [vmem:[%s3 + $0x50] sm:$0xff] %v628
  %643 = vst [vmem:[%s3 + $0x58] sm:$0xff] %v629
  %644 = vst [vmem:[%s3 + $0x60] sm:$0xff] %v630
  %645 = vst [vmem:[%s3 + $0x68] sm:$0xff] %v631
  // Predicated region
  $region14: #{vae_forward.7} parent=0 // pred_check
    _
  $region15: #{vae_forward.7} parent=0 // pred_check_branch
    %647 = sbr.rel (0) target = $region17
  $region16: #{vae_forward.7} parent=0 // pred_region
    _
  $region17: #{vae_forward.7} parent=0 // pred_fallthru
    _
  // Predicated region
  $region18: #{vae_forward.7} parent=0 // pred_check
    _
  $region19: #{vae_forward.7} parent=0 // pred_check_branch
    %649 = sbr.rel (0) target = $region21
  $region20: #{vae_forward.7} parent=0 // pred_region
    _
  $region21: #{vae_forward.7} parent=0 // pred_fallthru
    _

// kernel: vae_forward.8
$region0: #{vae_forward.8}
  #allocation0 [shape = 'u32[]', space=smem, size = 0x4, offset = 0x4, fixed_abs, tag = 'smem constant byte address 0x4 - core index']
  #allocation1 [shape = 'u32[72,128]{1,0:T(1,128)}', space=vmem, size = 0x9000, scoped, tag = 'internal scratch']
  %s0 = inlined_call_operand.vmem [shape: bf16[16,3136], index: 0, kind: input, shape index: {}]
  %s1 = inlined_call_operand.vmem [shape: bf16[3136,256], index: 1, kind: input, shape index: {}]
  %s2 = inlined_call_operand.vmem [shape: f32[1,256], index: 2, kind: input, shape index: {}]
  %s3 = inlined_call_operand.vmem [shape: f32[16,128], index: 3, kind: input, shape index: {}]
  %s4 = inlined_call_operand.vmem [shape: f32[16,128], index: 4, kind: output, shape index: {0}]
  %s5 = inlined_call_operand.vmem [shape: f32[16,128], index: 5, kind: output, shape index: {1}]
  %s6 = inlined_call_operand.vmem [shape: f32[16,128], index: 6, kind: output, shape index: {2}]
  %7 = xla_tuple %s4, %s5, %s6
  %s8 = sld [smem:[#allocation0]]
  $region42: #{vae_forward.8} parent=0
    _
  %s10 = ssub.s32 1, %s8
  %s11 = scalar_select 0, %s10, %s8
  // Predicated region
  $region2: #{vae_forward.8} parent=0 // pred_check
    _
  $region3: #{vae_forward.8} parent=0 // pred_check_branch
    %13 = sbr.rel (0) target = $region5
  $region4: #{vae_forward.8} parent=0 // pred_region
    _
  $region5: #{vae_forward.8} parent=0 // pred_fallthru
    _
  // Predicated region
  $region6: #{vae_forward.8} parent=0 // pred_check
    _
  $region7: #{vae_forward.8} parent=0 // pred_check_branch
    %15 = sbr.rel (0) target = $region9
  $region8: #{vae_forward.8} parent=0 // pred_region
    _
  $region9: #{vae_forward.8} parent=0 // pred_fallthru
    _
  // Predicated region
  $region10: #{vae_forward.8} parent=0 // pred_check
    _
  $region11: #{vae_forward.8} parent=0 // pred_check_branch
    %17 = sbr.rel (0) target = $region13
  $region12: #{vae_forward.8} parent=0 // pred_region
    _
  $region13: #{vae_forward.8} parent=0 // pred_fallthru
    _
  // Predicated region
  $region14: #{vae_forward.8} parent=0 // pred_check
    _
  $region15: #{vae_forward.8} parent=0 // pred_check_branch
    %19 = sbr.rel (0) target = $region17
  $region16: #{vae_forward.8} parent=0 // pred_region
    _
  $region17: #{vae_forward.8} parent=0 // pred_fallthru
    _
  %v21 = vld [vmem:[%s0] sm:$0xff]
  %v22 = vld [vmem:[%s0 + $0x8] sm:$0xff]
  %v23 = vld [vmem:[%s0 + $0x10] sm:$0xff]
  %v24 = vld [vmem:[%s0 + $0x18] sm:$0xff]
  %v25 = vld [vmem:[%s0 + $0x20] sm:$0xff]
  %v26 = vld [vmem:[%s0 + $0x28] sm:$0xff]
  %v27 = vld [vmem:[%s0 + $0x30] sm:$0xff]
  %v28 = vld [vmem:[%s0 + $0x38] sm:$0xff]
  %v29 = vld [vmem:[%s0 + $0x40] sm:$0xff]
  %v30 = vld [vmem:[%s0 + $0x48] sm:$0xff]
  %v31 = vld [vmem:[%s0 + $0x50] sm:$0xff]
  %v32 = vld [vmem:[%s0 + $0x58] sm:$0xff]
  %v33 = vld [vmem:[%s0 + $0x60] sm:$0xf]
  %v34 = vld [vmem:[%s0 + $0x64] sm:$0xff]
  %v35 = vld [vmem:[%s0 + $0x6c] sm:$0xff]
  %v36 = vld [vmem:[%s0 + $0x74] sm:$0xff]
  %v37 = vld [vmem:[%s0 + $0x7c] sm:$0xff]
  %v38 = vld [vmem:[%s0 + $0x84] sm:$0xff]
  %v39 = vld [vmem:[%s0 + $0x8c] sm:$0xff]
  %v40 = vld [vmem:[%s0 + $0x94] sm:$0xff]
  %v41 = vld [vmem:[%s0 + $0x9c] sm:$0xff]
  %v42 = vld [vmem:[%s0 + $0xa4] sm:$0xff]
  %v43 = vld [vmem:[%s0 + $0xac] sm:$0xff]
  %v44 = vld [vmem:[%s0 + $0xb4] sm:$0xff]
  %v45 = vld [vmem:[%s0 + $0xbc] sm:$0xff]
  %v46 = vld [vmem:[%s0 + $0xc4] sm:$0xf]
  %v47 = vld [vmem:[%s1] sm:$0xff]
  %v48 = vld [vmem:[%s1 + $0x8] sm:$0xff]
  %v49 = vld [vmem:[%s1 + $0x10] sm:$0xff]
  %v50 = vld [vmem:[%s1 + $0x18] sm:$0xff]
  %v51 = vld [vmem:[%s1 + $0x20] sm:$0xff]
  %v52 = vld [vmem:[%s1 + $0x28] sm:$0xff]
  %v53 = vld [vmem:[%s1 + $0x30] sm:$0xff]
  %v54 = vld [vmem:[%s1 + $0x38] sm:$0xff]
  %v55 = vld [vmem:[%s1 + $0x40] sm:$0xff]
  %v56 = vld [vmem:[%s1 + $0x48] sm:$0xff]
  %v57 = vld [vmem:[%s1 + $0x50] sm:$0xff]
  %v58 = vld [vmem:[%s1 + $0x58] sm:$0xff]
  %v59 = vld [vmem:[%s1 + $0x60] sm:$0xff]
  %v60 = vld [vmem:[%s1 + $0x68] sm:$0xff]
  %v61 = vld [vmem:[%s1 + $0x70] sm:$0xff]
  %v62 = vld [vmem:[%s1 + $0x78] sm:$0xff]
  %v63 = vld [vmem:[%s1 + $0x80] sm:$0xff]
  %v64 = vld [vmem:[%s1 + $0x88] sm:$0xff]
  %v65 = vld [vmem:[%s1 + $0x90] sm:$0xff]
  %v66 = vld [vmem:[%s1 + $0x98] sm:$0xff]
  %v67 = vld [vmem:[%s1 + $0xa0] sm:$0xff]
  %v68 = vld [vmem:[%s1 + $0xa8] sm:$0xff]
  %v69 = vld [vmem:[%s1 + $0xb0] sm:$0xff]
  %v70 = vld [vmem:[%s1 + $0xb8] sm:$0xff]
  %v71 = vld [vmem:[%s1 + $0xc0] sm:$0xff]
  %v72 = vld [vmem:[%s1 + $0xc8] sm:$0xff]
  %v73 = vld [vmem:[%s1 + $0xd0] sm:$0xff]
  %v74 = vld [vmem:[%s1 + $0xd8] sm:$0xff]
  %v75 = vld [vmem:[%s1 + $0xe0] sm:$0xff]
  %v76 = vld [vmem:[%s1 + $0xe8] sm:$0xff]
  %v77 = vld [vmem:[%s1 + $0xf0] sm:$0xff]
  %v78 = vld [vmem:[%s1 + $0xf8] sm:$0xff]
  %v79 = vld [vmem:[%s1 + $0x100] sm:$0xff]
  %v80 = vld [vmem:[%s1 + $0x108] sm:$0xff]
  %v81 = vld [vmem:[%s1 + $0x110] sm:$0xff]
  %v82 = vld [vmem:[%s1 + $0x118] sm:$0xff]
  %v83 = vld [vmem:[%s1 + $0x120] sm:$0xff]
  %v84 = vld [vmem:[%s1 + $0x128] sm:$0xff]
  %v85 = vld [vmem:[%s1 + $0x130] sm:$0xff]
  %v86 = vld [vmem:[%s1 + $0x138] sm:$0xff]
  %v87 = vld [vmem:[%s1 + $0x140] sm:$0xff]
  %v88 = vld [vmem:[%s1 + $0x148] sm:$0xff]
  %v89 = vld [vmem:[%s1 + $0x150] sm:$0xff]
  %v90 = vld [vmem:[%s1 + $0x158] sm:$0xff]
  %v91 = vld [vmem:[%s1 + $0x160] sm:$0xff]
  %v92 = vld [vmem:[%s1 + $0x168] sm:$0xff]
  %v93 = vld [vmem:[%s1 + $0x170] sm:$0xff]
  %v94 = vld [vmem:[%s1 + $0x178] sm:$0xff]
  %v95 = vld [vmem:[%s1 + $0x180] sm:$0xff]
  %v96 = vld [vmem:[%s1 + $0x188] sm:$0xff]
  %v97 = vld [vmem:[%s1 + $0x190] sm:$0xff]
  %v98 = vld [vmem:[%s1 + $0x198] sm:$0xff]
  %v99 = vld [vmem:[%s1 + $0x1a0] sm:$0xff]
  %v100 = vld [vmem:[%s1 + $0x1a8] sm:$0xff]
  %v101 = vld [vmem:[%s1 + $0x1b0] sm:$0xff]
  %v102 = vld [vmem:[%s1 + $0x1b8] sm:$0xff]
  %v103 = vld [vmem:[%s1 + $0x1c0] sm:$0xff]
  %v104 = vld [vmem:[%s1 + $0x1c8] sm:$0xff]
  %v105 = vld [vmem:[%s1 + $0x1d0] sm:$0xff]
  %v106 = vld [vmem:[%s1 + $0x1d8] sm:$0xff]
  %v107 = vld [vmem:[%s1 + $0x1e0] sm:$0xff]
  %v108 = vld [vmem:[%s1 + $0x1e8] sm:$0xff]
  %v109 = vld [vmem:[%s1 + $0x1f0] sm:$0xff]
  %v110 = vld [vmem:[%s1 + $0x1f8] sm:$0xff]
  %v111 = vld [vmem:[%s1 + $0x200] sm:$0xff]
  %v112 = vld [vmem:[%s1 + $0x208] sm:$0xff]
  %v113 = vld [vmem:[%s1 + $0x210] sm:$0xff]
  %v114 = vld [vmem:[%s1 + $0x218] sm:$0xff]
  %v115 = vld [vmem:[%s1 + $0x220] sm:$0xff]
  %v116 = vld [vmem:[%s1 + $0x228] sm:$0xff]
  %v117 = vld [vmem:[%s1 + $0x230] sm:$0xff]
  %v118 = vld [vmem:[%s1 + $0x238] sm:$0xff]
  %v119 = vld [vmem:[%s1 + $0x240] sm:$0xff]
  %v120 = vld [vmem:[%s1 + $0x248] sm:$0xff]
  %v121 = vld [vmem:[%s1 + $0x250] sm:$0xff]
  %v122 = vld [vmem:[%s1 + $0x258] sm:$0xff]
  %v123 = vld [vmem:[%s1 + $0x260] sm:$0xff]
  %v124 = vld [vmem:[%s1 + $0x268] sm:$0xff]
  %v125 = vld [vmem:[%s1 + $0x270] sm:$0xff]
  %v126 = vld [vmem:[%s1 + $0x278] sm:$0xff]
  %v127 = vld [vmem:[%s1 + $0x280] sm:$0xff]
  %v128 = vld [vmem:[%s1 + $0x288] sm:$0xff]
  %v129 = vld [vmem:[%s1 + $0x290] sm:$0xff]
  %v130 = vld [vmem:[%s1 + $0x298] sm:$0xff]
  %v131 = vld [vmem:[%s1 + $0x2a0] sm:$0xff]
  %v132 = vld [vmem:[%s1 + $0x2a8] sm:$0xff]
  %v133 = vld [vmem:[%s1 + $0x2b0] sm:$0xff]
  %v134 = vld [vmem:[%s1 + $0x2b8] sm:$0xff]
  %v135 = vld [vmem:[%s1 + $0x2c0] sm:$0xff]
  %v136 = vld [vmem:[%s1 + $0x2c8] sm:$0xff]
  %v137 = vld [vmem:[%s1 + $0x2d0] sm:$0xff]
  %v138 = vld [vmem:[%s1 + $0x2d8] sm:$0xff]
  %v139 = vld [vmem:[%s1 + $0x2e0] sm:$0xff]
  %v140 = vld [vmem:[%s1 + $0x2e8] sm:$0xff]
  %v141 = vld [vmem:[%s1 + $0x2f0] sm:$0xff]
  %v142 = vld [vmem:[%s1 + $0x2f8] sm:$0xff]
  %v143 = vld [vmem:[%s1 + $0x300] sm:$0xff]
  %v144 = vld [vmem:[%s1 + $0x308] sm:$0xff]
  %v145 = vld [vmem:[%s1 + $0x310] sm:$0xff]
  %v146 = vld [vmem:[%s1 + $0x318] sm:$0xff]
  %v147 = vld [vmem:[%s1 + $0x320] sm:$0xff]
  %v148 = vld [vmem:[%s1 + $0x328] sm:$0xff]
  %v149 = vld [vmem:[%s1 + $0x330] sm:$0xff]
  %v150 = vld [vmem:[%s1 + $0x338] sm:$0xff]
  %v151 = vld [vmem:[%s1 + $0x340] sm:$0xff]
  %v152 = vld [vmem:[%s1 + $0x348] sm:$0xff]
  %v153 = vld [vmem:[%s1 + $0x350] sm:$0xff]
  %v154 = vld [vmem:[%s1 + $0x358] sm:$0xff]
  %v155 = vld [vmem:[%s1 + $0x360] sm:$0xff]
  %v156 = vld [vmem:[%s1 + $0x368] sm:$0xff]
  %v157 = vld [vmem:[%s1 + $0x370] sm:$0xff]
  %v158 = vld [vmem:[%s1 + $0x378] sm:$0xff]
  %v159 = vld [vmem:[%s1 + $0x380] sm:$0xff]
  %v160 = vld [vmem:[%s1 + $0x388] sm:$0xff]
  %v161 = vld [vmem:[%s1 + $0x390] sm:$0xff]
  %v162 = vld [vmem:[%s1 + $0x398] sm:$0xff]
  %v163 = vld [vmem:[%s1 + $0x3a0] sm:$0xff]
  %v164 = vld [vmem:[%s1 + $0x3a8] sm:$0xff]
  %v165 = vld [vmem:[%s1 + $0x3b0] sm:$0xff]
  %v166 = vld [vmem:[%s1 + $0x3b8] sm:$0xff]
  %v167 = vld [vmem:[%s1 + $0x3c0] sm:$0xff]
  %v168 = vld [vmem:[%s1 + $0x3c8] sm:$0xff]
  %v169 = vld [vmem:[%s1 + $0x3d0] sm:$0xff]
  %v170 = vld [vmem:[%s1 + $0x3d8] sm:$0xff]
  %v171 = vld [vmem:[%s1 + $0x3e0] sm:$0xff]
  %v172 = vld [vmem:[%s1 + $0x3e8] sm:$0xff]
  %v173 = vld [vmem:[%s1 + $0x3f0] sm:$0xff]
  %v174 = vld [vmem:[%s1 + $0x3f8] sm:$0xff]
  %v175 = vld [vmem:[%s1 + $0x400] sm:$0xff]
  %v176 = vld [vmem:[%s1 + $0x408] sm:$0xff]
  %v177 = vld [vmem:[%s1 + $0x410] sm:$0xff]
  %v178 = vld [vmem:[%s1 + $0x418] sm:$0xff]
  %v179 = vld [vmem:[%s1 + $0x420] sm:$0xff]
  %v180 = vld [vmem:[%s1 + $0x428] sm:$0xff]
  %v181 = vld [vmem:[%s1 + $0x430] sm:$0xff]
  %v182 = vld [vmem:[%s1 + $0x438] sm:$0xff]
  %v183 = vld [vmem:[%s1 + $0x440] sm:$0xff]
  %v184 = vld [vmem:[%s1 + $0x448] sm:$0xff]
  %v185 = vld [vmem:[%s1 + $0x450] sm:$0xff]
  %v186 = vld [vmem:[%s1 + $0x458] sm:$0xff]
  %v187 = vld [vmem:[%s1 + $0x460] sm:$0xff]
  %v188 = vld [vmem:[%s1 + $0x468] sm:$0xff]
  %v189 = vld [vmem:[%s1 + $0x470] sm:$0xff]
  %v190 = vld [vmem:[%s1 + $0x478] sm:$0xff]
  %v191 = vld [vmem:[%s1 + $0x480] sm:$0xff]
  %v192 = vld [vmem:[%s1 + $0x488] sm:$0xff]
  %v193 = vld [vmem:[%s1 + $0x490] sm:$0xff]
  %v194 = vld [vmem:[%s1 + $0x498] sm:$0xff]
  %v195 = vld [vmem:[%s1 + $0x4a0] sm:$0xff]
  %v196 = vld [vmem:[%s1 + $0x4a8] sm:$0xff]
  %v197 = vld [vmem:[%s1 + $0x4b0] sm:$0xff]
  %v198 = vld [vmem:[%s1 + $0x4b8] sm:$0xff]
  %v199 = vld [vmem:[%s1 + $0x4c0] sm:$0xff]
  %v200 = vld [vmem:[%s1 + $0x4c8] sm:$0xff]
  %v201 = vld [vmem:[%s1 + $0x4d0] sm:$0xff]
  %v202 = vld [vmem:[%s1 + $0x4d8] sm:$0xff]
  %v203 = vld [vmem:[%s1 + $0x4e0] sm:$0xff]
  %v204 = vld [vmem:[%s1 + $0x4e8] sm:$0xff]
  %v205 = vld [vmem:[%s1 + $0x4f0] sm:$0xff]
  %v206 = vld [vmem:[%s1 + $0x4f8] sm:$0xff]
  %v207 = vld [vmem:[%s1 + $0x500] sm:$0xff]
  %v208 = vld [vmem:[%s1 + $0x508] sm:$0xff]
  %v209 = vld [vmem:[%s1 + $0x510] sm:$0xff]
  %v210 = vld [vmem:[%s1 + $0x518] sm:$0xff]
  %v211 = vld [vmem:[%s1 + $0x520] sm:$0xff]
  %v212 = vld [vmem:[%s1 + $0x528] sm:$0xff]
  %v213 = vld [vmem:[%s1 + $0x530] sm:$0xff]
  %v214 = vld [vmem:[%s1 + $0x538] sm:$0xff]
  %v215 = vld [vmem:[%s1 + $0x540] sm:$0xff]
  %v216 = vld [vmem:[%s1 + $0x548] sm:$0xff]
  %v217 = vld [vmem:[%s1 + $0x550] sm:$0xff]
  %v218 = vld [vmem:[%s1 + $0x558] sm:$0xff]
  %v219 = vld [vmem:[%s1 + $0x560] sm:$0xff]
  %v220 = vld [vmem:[%s1 + $0x568] sm:$0xff]
  %v221 = vld [vmem:[%s1 + $0x570] sm:$0xff]
  %v222 = vld [vmem:[%s1 + $0x578] sm:$0xff]
  %v223 = vld [vmem:[%s1 + $0x580] sm:$0xff]
  %v224 = vld [vmem:[%s1 + $0x588] sm:$0xff]
  %v225 = vld [vmem:[%s1 + $0x590] sm:$0xff]
  %v226 = vld [vmem:[%s1 + $0x598] sm:$0xff]
  %v227 = vld [vmem:[%s1 + $0x5a0] sm:$0xff]
  %v228 = vld [vmem:[%s1 + $0x5a8] sm:$0xff]
  %v229 = vld [vmem:[%s1 + $0x5b0] sm:$0xff]
  %v230 = vld [vmem:[%s1 + $0x5b8] sm:$0xff]
  %v231 = vld [vmem:[%s1 + $0x5c0] sm:$0xff]
  %v232 = vld [vmem:[%s1 + $0x5c8] sm:$0xff]
  %v233 = vld [vmem:[%s1 + $0x5d0] sm:$0xff]
  %v234 = vld [vmem:[%s1 + $0x5d8] sm:$0xff]
  %v235 = vld [vmem:[%s1 + $0x5e0] sm:$0xff]
  %v236 = vld [vmem:[%s1 + $0x5e8] sm:$0xff]
  %v237 = vld [vmem:[%s1 + $0x5f0] sm:$0xff]
  %v238 = vld [vmem:[%s1 + $0x5f8] sm:$0xff]
  %v239 = vld [vmem:[%s1 + $0x600] sm:$0xff]
  %v240 = vld [vmem:[%s1 + $0x608] sm:$0xff]
  %v241 = vld [vmem:[%s1 + $0x610] sm:$0xff]
  %v242 = vld [vmem:[%s1 + $0x618] sm:$0xff]
  %v243 = vld [vmem:[%s1 + $0x620] sm:$0xff]
  %v244 = vld [vmem:[%s1 + $0x628] sm:$0xff]
  %v245 = vld [vmem:[%s1 + $0x630] sm:$0xff]
  %v246 = vld [vmem:[%s1 + $0x638] sm:$0xff]
  %v247 = vld [vmem:[%s1 + $0x640] sm:$0xff]
  %v248 = vld [vmem:[%s1 + $0x648] sm:$0xff]
  %v249 = vld [vmem:[%s1 + $0x650] sm:$0xff]
  %v250 = vld [vmem:[%s1 + $0x658] sm:$0xff]
  %v251 = vld [vmem:[%s1 + $0x660] sm:$0xff]
  %v252 = vld [vmem:[%s1 + $0x668] sm:$0xff]
  %v253 = vld [vmem:[%s1 + $0x670] sm:$0xff]
  %v254 = vld [vmem:[%s1 + $0x678] sm:$0xff]
  %v255 = vld [vmem:[%s1 + $0x680] sm:$0xff]
  %v256 = vld [vmem:[%s1 + $0x688] sm:$0xff]
  %v257 = vld [vmem:[%s1 + $0x690] sm:$0xff]
  %v258 = vld [vmem:[%s1 + $0x698] sm:$0xff]
  %v259 = vld [vmem:[%s1 + $0x6a0] sm:$0xff]
  %v260 = vld [vmem:[%s1 + $0x6a8] sm:$0xff]
  %v261 = vld [vmem:[%s1 + $0x6b0] sm:$0xff]
  %v262 = vld [vmem:[%s1 + $0x6b8] sm:$0xff]
  %v263 = vld [vmem:[%s1 + $0x6c0] sm:$0xff]
  %v264 = vld [vmem:[%s1 + $0x6c8] sm:$0xff]
  %v265 = vld [vmem:[%s1 + $0x6d0] sm:$0xff]
  %v266 = vld [vmem:[%s1 + $0x6d8] sm:$0xff]
  %v267 = vld [vmem:[%s1 + $0x6e0] sm:$0xff]
  %v268 = vld [vmem:[%s1 + $0x6e8] sm:$0xff]
  %v269 = vld [vmem:[%s1 + $0x6f0] sm:$0xff]
  %v270 = vld [vmem:[%s1 + $0x6f8] sm:$0xff]
  %v271 = vld [vmem:[%s1 + $0x700] sm:$0xff]
  %v272 = vld [vmem:[%s1 + $0x708] sm:$0xff]
  %v273 = vld [vmem:[%s1 + $0x710] sm:$0xff]
  %v274 = vld [vmem:[%s1 + $0x718] sm:$0xff]
  %v275 = vld [vmem:[%s1 + $0x720] sm:$0xff]
  %v276 = vld [vmem:[%s1 + $0x728] sm:$0xff]
  %v277 = vld [vmem:[%s1 + $0x730] sm:$0xff]
  %v278 = vld [vmem:[%s1 + $0x738] sm:$0xff]
  %v279 = vld [vmem:[%s1 + $0x740] sm:$0xff]
  %v280 = vld [vmem:[%s1 + $0x748] sm:$0xff]
  %v281 = vld [vmem:[%s1 + $0x750] sm:$0xff]
  %v282 = vld [vmem:[%s1 + $0x758] sm:$0xff]
  %v283 = vld [vmem:[%s1 + $0x760] sm:$0xff]
  %v284 = vld [vmem:[%s1 + $0x768] sm:$0xff]
  %v285 = vld [vmem:[%s1 + $0x770] sm:$0xff]
  %v286 = vld [vmem:[%s1 + $0x778] sm:$0xff]
  %v287 = vld [vmem:[%s1 + $0x780] sm:$0xff]
  %v288 = vld [vmem:[%s1 + $0x788] sm:$0xff]
  %v289 = vld [vmem:[%s1 + $0x790] sm:$0xff]
  %v290 = vld [vmem:[%s1 + $0x798] sm:$0xff]
  %v291 = vld [vmem:[%s1 + $0x7a0] sm:$0xff]
  %v292 = vld [vmem:[%s1 + $0x7a8] sm:$0xff]
  %v293 = vld [vmem:[%s1 + $0x7b0] sm:$0xff]
  %v294 = vld [vmem:[%s1 + $0x7b8] sm:$0xff]
  %v295 = vld [vmem:[%s1 + $0x7c0] sm:$0xff]
  %v296 = vld [vmem:[%s1 + $0x7c8] sm:$0xff]
  %v297 = vld [vmem:[%s1 + $0x7d0] sm:$0xff]
  %v298 = vld [vmem:[%s1 + $0x7d8] sm:$0xff]
  %v299 = vld [vmem:[%s1 + $0x7e0] sm:$0xff]
  %v300 = vld [vmem:[%s1 + $0x7e8] sm:$0xff]
  %v301 = vld [vmem:[%s1 + $0x7f0] sm:$0xff]
  %v302 = vld [vmem:[%s1 + $0x7f8] sm:$0xff]
  %v303 = vld [vmem:[%s1 + $0x800] sm:$0xff]
  %v304 = vld [vmem:[%s1 + $0x808] sm:$0xff]
  %v305 = vld [vmem:[%s1 + $0x810] sm:$0xff]
  %v306 = vld [vmem:[%s1 + $0x818] sm:$0xff]
  %v307 = vld [vmem:[%s1 + $0x820] sm:$0xff]
  %v308 = vld [vmem:[%s1 + $0x828] sm:$0xff]
  %v309 = vld [vmem:[%s1 + $0x830] sm:$0xff]
  %v310 = vld [vmem:[%s1 + $0x838] sm:$0xff]
  %v311 = vld [vmem:[%s1 + $0x840] sm:$0xff]
  %v312 = vld [vmem:[%s1 + $0x848] sm:$0xff]
  %v313 = vld [vmem:[%s1 + $0x850] sm:$0xff]
  %v314 = vld [vmem:[%s1 + $0x858] sm:$0xff]
  %v315 = vld [vmem:[%s1 + $0x860] sm:$0xff]
  %v316 = vld [vmem:[%s1 + $0x868] sm:$0xff]
  %v317 = vld [vmem:[%s1 + $0x870] sm:$0xff]
  %v318 = vld [vmem:[%s1 + $0x878] sm:$0xff]
  %v319 = vld [vmem:[%s1 + $0x880] sm:$0xff]
  %v320 = vld [vmem:[%s1 + $0x888] sm:$0xff]
  %v321 = vld [vmem:[%s1 + $0x890] sm:$0xff]
  %v322 = vld [vmem:[%s1 + $0x898] sm:$0xff]
  %v323 = vld [vmem:[%s1 + $0x8a0] sm:$0xff]
  %v324 = vld [vmem:[%s1 + $0x8a8] sm:$0xff]
  %v325 = vld [vmem:[%s1 + $0x8b0] sm:$0xff]
  %v326 = vld [vmem:[%s1 + $0x8b8] sm:$0xff]
  %v327 = vld [vmem:[%s1 + $0x8c0] sm:$0xff]
  %v328 = vld [vmem:[%s1 + $0x8c8] sm:$0xff]
  %v329 = vld [vmem:[%s1 + $0x8d0] sm:$0xff]
  %v330 = vld [vmem:[%s1 + $0x8d8] sm:$0xff]
  %v331 = vld [vmem:[%s1 + $0x8e0] sm:$0xff]
  %v332 = vld [vmem:[%s1 + $0x8e8] sm:$0xff]
  %v333 = vld [vmem:[%s1 + $0x8f0] sm:$0xff]
  %v334 = vld [vmem:[%s1 + $0x8f8] sm:$0xff]
  %v335 = vld [vmem:[%s1 + $0x900] sm:$0xff]
  %v336 = vld [vmem:[%s1 + $0x908] sm:$0xff]
  %v337 = vld [vmem:[%s1 + $0x910] sm:$0xff]
  %v338 = vld [vmem:[%s1 + $0x918] sm:$0xff]
  %v339 = vld [vmem:[%s1 + $0x920] sm:$0xff]
  %v340 = vld [vmem:[%s1 + $0x928] sm:$0xff]
  %v341 = vld [vmem:[%s1 + $0x930] sm:$0xff]
  %v342 = vld [vmem:[%s1 + $0x938] sm:$0xff]
  %v343 = vld [vmem:[%s1 + $0x940] sm:$0xff]
  %v344 = vld [vmem:[%s1 + $0x948] sm:$0xff]
  %v345 = vld [vmem:[%s1 + $0x950] sm:$0xff]
  %v346 = vld [vmem:[%s1 + $0x958] sm:$0xff]
  %v347 = vld [vmem:[%s1 + $0x960] sm:$0xff]
  %v348 = vld [vmem:[%s1 + $0x968] sm:$0xff]
  %v349 = vld [vmem:[%s1 + $0x970] sm:$0xff]
  %v350 = vld [vmem:[%s1 + $0x978] sm:$0xff]
  %v351 = vld [vmem:[%s1 + $0x980] sm:$0xff]
  %v352 = vld [vmem:[%s1 + $0x988] sm:$0xff]
  %v353 = vld [vmem:[%s1 + $0x990] sm:$0xff]
  %v354 = vld [vmem:[%s1 + $0x998] sm:$0xff]
  %v355 = vld [vmem:[%s1 + $0x9a0] sm:$0xff]
  %v356 = vld [vmem:[%s1 + $0x9a8] sm:$0xff]
  %v357 = vld [vmem:[%s1 + $0x9b0] sm:$0xff]
  %v358 = vld [vmem:[%s1 + $0x9b8] sm:$0xff]
  %v359 = vld [vmem:[%s1 + $0x9c0] sm:$0xff]
  %v360 = vld [vmem:[%s1 + $0x9c8] sm:$0xff]
  %v361 = vld [vmem:[%s1 + $0x9d0] sm:$0xff]
  %v362 = vld [vmem:[%s1 + $0x9d8] sm:$0xff]
  %v363 = vld [vmem:[%s1 + $0x9e0] sm:$0xff]
  %v364 = vld [vmem:[%s1 + $0x9e8] sm:$0xff]
  %v365 = vld [vmem:[%s1 + $0x9f0] sm:$0xff]
  %v366 = vld [vmem:[%s1 + $0x9f8] sm:$0xff]
  %v367 = vld [vmem:[%s1 + $0xa00] sm:$0xff]
  %v368 = vld [vmem:[%s1 + $0xa08] sm:$0xff]
  %v369 = vld [vmem:[%s1 + $0xa10] sm:$0xff]
  %v370 = vld [vmem:[%s1 + $0xa18] sm:$0xff]
  %v371 = vld [vmem:[%s1 + $0xa20] sm:$0xff]
  %v372 = vld [vmem:[%s1 + $0xa28] sm:$0xff]
  %v373 = vld [vmem:[%s1 + $0xa30] sm:$0xff]
  %v374 = vld [vmem:[%s1 + $0xa38] sm:$0xff]
  %v375 = vld [vmem:[%s1 + $0xa40] sm:$0xff]
  %v376 = vld [vmem:[%s1 + $0xa48] sm:$0xff]
  %v377 = vld [vmem:[%s1 + $0xa50] sm:$0xff]
  %v378 = vld [vmem:[%s1 + $0xa58] sm:$0xff]
  %v379 = vld [vmem:[%s1 + $0xa60] sm:$0xff]
  %v380 = vld [vmem:[%s1 + $0xa68] sm:$0xff]
  %v381 = vld [vmem:[%s1 + $0xa70] sm:$0xff]
  %v382 = vld [vmem:[%s1 + $0xa78] sm:$0xff]
  %v383 = vld [vmem:[%s1 + $0xa80] sm:$0xff]
  %v384 = vld [vmem:[%s1 + $0xa88] sm:$0xff]
  %v385 = vld [vmem:[%s1 + $0xa90] sm:$0xff]
  %v386 = vld [vmem:[%s1 + $0xa98] sm:$0xff]
  %v387 = vld [vmem:[%s1 + $0xaa0] sm:$0xff]
  %v388 = vld [vmem:[%s1 + $0xaa8] sm:$0xff]
  %v389 = vld [vmem:[%s1 + $0xab0] sm:$0xff]
  %v390 = vld [vmem:[%s1 + $0xab8] sm:$0xff]
  %v391 = vld [vmem:[%s1 + $0xac0] sm:$0xff]
  %v392 = vld [vmem:[%s1 + $0xac8] sm:$0xff]
  %v393 = vld [vmem:[%s1 + $0xad0] sm:$0xff]
  %v394 = vld [vmem:[%s1 + $0xad8] sm:$0xff]
  %v395 = vld [vmem:[%s1 + $0xae0] sm:$0xff]
  %v396 = vld [vmem:[%s1 + $0xae8] sm:$0xff]
  %v397 = vld [vmem:[%s1 + $0xaf0] sm:$0xff]
  %v398 = vld [vmem:[%s1 + $0xaf8] sm:$0xff]
  %v399 = vld [vmem:[%s1 + $0xb00] sm:$0xff]
  %v400 = vld [vmem:[%s1 + $0xb08] sm:$0xff]
  %v401 = vld [vmem:[%s1 + $0xb10] sm:$0xff]
  %v402 = vld [vmem:[%s1 + $0xb18] sm:$0xff]
  %v403 = vld [vmem:[%s1 + $0xb20] sm:$0xff]
  %v404 = vld [vmem:[%s1 + $0xb28] sm:$0xff]
  %v405 = vld [vmem:[%s1 + $0xb30] sm:$0xff]
  %v406 = vld [vmem:[%s1 + $0xb38] sm:$0xff]
  %v407 = vld [vmem:[%s1 + $0xb40] sm:$0xff]
  %v408 = vld [vmem:[%s1 + $0xb48] sm:$0xff]
  %v409 = vld [vmem:[%s1 + $0xb50] sm:$0xff]
  %v410 = vld [vmem:[%s1 + $0xb58] sm:$0xff]
  %v411 = vld [vmem:[%s1 + $0xb60] sm:$0xff]
  %v412 = vld [vmem:[%s1 + $0xb68] sm:$0xff]
  %v413 = vld [vmem:[%s1 + $0xb70] sm:$0xff]
  %v414 = vld [vmem:[%s1 + $0xb78] sm:$0xff]
  %v415 = vld [vmem:[%s1 + $0xb80] sm:$0xff]
  %v416 = vld [vmem:[%s1 + $0xb88] sm:$0xff]
  %v417 = vld [vmem:[%s1 + $0xb90] sm:$0xff]
  %v418 = vld [vmem:[%s1 + $0xb98] sm:$0xff]
  %v419 = vld [vmem:[%s1 + $0xba0] sm:$0xff]
  %v420 = vld [vmem:[%s1 + $0xba8] sm:$0xff]
  %v421 = vld [vmem:[%s1 + $0xbb0] sm:$0xff]
  %v422 = vld [vmem:[%s1 + $0xbb8] sm:$0xff]
  %v423 = vld [vmem:[%s1 + $0xbc0] sm:$0xff]
  %v424 = vld [vmem:[%s1 + $0xbc8] sm:$0xff]
  %v425 = vld [vmem:[%s1 + $0xbd0] sm:$0xff]
  %v426 = vld [vmem:[%s1 + $0xbd8] sm:$0xff]
  %v427 = vld [vmem:[%s1 + $0xbe0] sm:$0xff]
  %v428 = vld [vmem:[%s1 + $0xbe8] sm:$0xff]
  %v429 = vld [vmem:[%s1 + $0xbf0] sm:$0xff]
  %v430 = vld [vmem:[%s1 + $0xbf8] sm:$0xff]
  %v431 = vld [vmem:[%s1 + $0xc00] sm:$0xff]
  %v432 = vld [vmem:[%s1 + $0xc08] sm:$0xff]
  %v433 = vld [vmem:[%s1 + $0xc10] sm:$0xff]
  %v434 = vld [vmem:[%s1 + $0xc18] sm:$0xff]
  %v435 = vld [vmem:[%s1 + $0xc20] sm:$0xff]
  %v436 = vld [vmem:[%s1 + $0xc28] sm:$0xff]
  %v437 = vld [vmem:[%s1 + $0xc30] sm:$0xff]
  %v438 = vld [vmem:[%s1 + $0xc38] sm:$0xff]
  %v439 = vld [vmem:[%s2] sm:$0x3]
  %v441 = vperm.slane %v439, 0
  %v442 = vperm.slane %v439, 1
  %v471 = vunpack.c.l.b16 %v21
  %v472 = vunpack.c.h.b16 %v21
  %v473 = vunpack.c.l.b16 %v22
  %v474 = vunpack.c.h.b16 %v22
  %v475 = vunpack.c.l.b16 %v23
  %v476 = vunpack.c.h.b16 %v23
  %v477 = vunpack.c.l.b16 %v24
  %v478 = vunpack.c.h.b16 %v24
  %v479 = vunpack.c.l.b16 %v25
  %v480 = vunpack.c.h.b16 %v25
  %v481 = vunpack.c.l.b16 %v26
  %v482 = vunpack.c.h.b16 %v26
  %v483 = vunpack.c.l.b16 %v27
  %v484 = vunpack.c.h.b16 %v27
  %v485 = vunpack.c.l.b16 %v28
  %v486 = vunpack.c.h.b16 %v28
  %v487 = vunpack.c.l.b16 %v29
  %v488 = vunpack.c.h.b16 %v29
  %v489 = vunpack.c.l.b16 %v30
  %v490 = vunpack.c.h.b16 %v30
  %v491 = vunpack.c.l.b16 %v31
  %v492 = vunpack.c.h.b16 %v31
  %v493 = vunpack.c.l.b16 %v32
  %v494 = vunpack.c.h.b16 %v32
  %v495 = vunpack.c.l.b16 %v33
  %v496 = vunpack.c.l.b16 %v34
  %v497 = vunpack.c.h.b16 %v34
  %v498 = vunpack.c.l.b16 %v35
  %v499 = vunpack.c.h.b16 %v35
  %v500 = vunpack.c.l.b16 %v36
  %v501 = vunpack.c.h.b16 %v36
  %v502 = vunpack.c.l.b16 %v37
  %v503 = vunpack.c.h.b16 %v37
  %v504 = vunpack.c.l.b16 %v38
  %v505 = vunpack.c.h.b16 %v38
  %v506 = vunpack.c.l.b16 %v39
  %v507 = vunpack.c.h.b16 %v39
  %v508 = vunpack.c.l.b16 %v40
  %v509 = vunpack.c.h.b16 %v40
  %v510 = vunpack.c.l.b16 %v41
  %v511 = vunpack.c.h.b16 %v41
  %v512 = vunpack.c.l.b16 %v42
  %v513 = vunpack.c.h.b16 %v42
  %v514 = vunpack.c.l.b16 %v43
  %v515 = vunpack.c.h.b16 %v43
  %v516 = vunpack.c.l.b16 %v44
  %v517 = vunpack.c.h.b16 %v44
  %v518 = vunpack.c.l.b16 %v45
  %v519 = vunpack.c.h.b16 %v45
  %v520 = vunpack.c.l.b16 %v46
  %v521 = vpack.c.b16 %v496, %v471
  %v522 = vpack.c.b16 %v497, %v472
  %v523 = vpack.c.b16 %v498, %v473
  %v524 = vpack.c.b16 %v499, %v474
  %v525 = vpack.c.b16 %v500, %v475
  %v526 = vpack.c.b16 %v501, %v476
  %v527 = vpack.c.b16 %v502, %v477
  %v528 = vpack.c.b16 %v503, %v478
  %v529 = vpack.c.b16 %v504, %v479
  %v530 = vpack.c.b16 %v505, %v480
  %v531 = vpack.c.b16 %v506, %v481
  %v532 = vpack.c.b16 %v507, %v482
  %v533 = vpack.c.b16 %v508, %v483
  %v534 = vpack.c.b16 %v509, %v484
  %v535 = vpack.c.b16 %v510, %v485
  %v536 = vpack.c.b16 %v511, %v486
  %v537 = vpack.c.b16 %v512, %v487
  %v538 = vpack.c.b16 %v513, %v488
  %v539 = vpack.c.b16 %v514, %v489
  %v540 = vpack.c.b16 %v515, %v490
  %v541 = vpack.c.b16 %v516, %v491
  %v542 = vpack.c.b16 %v517, %v492
  %v543 = vpack.c.b16 %v518, %v493
  %v544 = vpack.c.b16 %v519, %v494
  %v545 = vpack.c.b16 %v520, %v495
  %v962 = vunpack.c.l.b16 %v47
  %v963 = vunpack.c.h.b16 %v47
  %v964 = vunpack.c.l.b16 %v48
  %v965 = vunpack.c.h.b16 %v48
  %v966 = vunpack.c.l.b16 %v49
  %v967 = vunpack.c.h.b16 %v49
  %v968 = vunpack.c.l.b16 %v50
  %v969 = vunpack.c.h.b16 %v50
  %v970 = vunpack.c.l.b16 %v51
  %v971 = vunpack.c.h.b16 %v51
  %v972 = vunpack.c.l.b16 %v52
  %v973 = vunpack.c.h.b16 %v52
  %v974 = vunpack.c.l.b16 %v53
  %v975 = vunpack.c.h.b16 %v53
  %v976 = vunpack.c.l.b16 %v54
  %v977 = vunpack.c.h.b16 %v54
  %v978 = vunpack.c.l.b16 %v55
  %v979 = vunpack.c.h.b16 %v55
  %v980 = vunpack.c.l.b16 %v56
  %v981 = vunpack.c.h.b16 %v56
  %v982 = vunpack.c.l.b16 %v57
  %v983 = vunpack.c.h.b16 %v57
  %v984 = vunpack.c.l.b16 %v58
  %v985 = vunpack.c.h.b16 %v58
  %v986 = vunpack.c.l.b16 %v59
  %v987 = vunpack.c.h.b16 %v59
  %v988 = vunpack.c.l.b16 %v60
  %v989 = vunpack.c.h.b16 %v60
  %v990 = vunpack.c.l.b16 %v61
  %v991 = vunpack.c.h.b16 %v61
  %v992 = vunpack.c.l.b16 %v62
  %v993 = vunpack.c.h.b16 %v62
  %v994 = vunpack.c.l.b16 %v63
  %v995 = vunpack.c.h.b16 %v63
  %v996 = vunpack.c.l.b16 %v64
  %v997 = vunpack.c.h.b16 %v64
  %v998 = vunpack.c.l.b16 %v65
  %v999 = vunpack.c.h.b16 %v65
  %v1000 = vunpack.c.l.b16 %v66
  %v1001 = vunpack.c.h.b16 %v66
  %v1002 = vunpack.c.l.b16 %v67
  %v1003 = vunpack.c.h.b16 %v67
  %v1004 = vunpack.c.l.b16 %v68
  %v1005 = vunpack.c.h.b16 %v68
  %v1006 = vunpack.c.l.b16 %v69
  %v1007 = vunpack.c.h.b16 %v69
  %v1008 = vunpack.c.l.b16 %v70
  %v1009 = vunpack.c.h.b16 %v70
  %v1010 = vunpack.c.l.b16 %v71
  %v1011 = vunpack.c.h.b16 %v71
  %v1012 = vunpack.c.l.b16 %v72
  %v1013 = vunpack.c.h.b16 %v72
  %v1014 = vunpack.c.l.b16 %v73
  %v1015 = vunpack.c.h.b16 %v73
  %v1016 = vunpack.c.l.b16 %v74
  %v1017 = vunpack.c.h.b16 %v74
  %v1018 = vunpack.c.l.b16 %v75
  %v1019 = vunpack.c.h.b16 %v75
  %v1020 = vunpack.c.l.b16 %v76
  %v1021 = vunpack.c.h.b16 %v76
  %v1022 = vunpack.c.l.b16 %v77
  %v1023 = vunpack.c.h.b16 %v77
  %v1024 = vunpack.c.l.b16 %v78
  %v1025 = vunpack.c.h.b16 %v78
  %v1026 = vunpack.c.l.b16 %v79
  %v1027 = vunpack.c.h.b16 %v79
  %v1028 = vunpack.c.l.b16 %v80
  %v1029 = vunpack.c.h.b16 %v80
  %v1030 = vunpack.c.l.b16 %v81
  %v1031 = vunpack.c.h.b16 %v81
  %v1032 = vunpack.c.l.b16 %v82
  %v1033 = vunpack.c.h.b16 %v82
  %v1034 = vunpack.c.l.b16 %v83
  %v1035 = vunpack.c.h.b16 %v83
  %v1036 = vunpack.c.l.b16 %v84
  %v1037 = vunpack.c.h.b16 %v84
  %v1038 = vunpack.c.l.b16 %v85
  %v1039 = vunpack.c.h.b16 %v85
  %v1040 = vunpack.c.l.b16 %v86
  %v1041 = vunpack.c.h.b16 %v86
  %v1042 = vunpack.c.l.b16 %v87
  %v1043 = vunpack.c.h.b16 %v87
  %v1044 = vunpack.c.l.b16 %v88
  %v1045 = vunpack.c.h.b16 %v88
  %v1046 = vunpack.c.l.b16 %v89
  %v1047 = vunpack.c.h.b16 %v89
  %v1048 = vunpack.c.l.b16 %v90
  %v1049 = vunpack.c.h.b16 %v90
  %v1050 = vunpack.c.l.b16 %v91
  %v1051 = vunpack.c.h.b16 %v91
  %v1052 = vunpack.c.l.b16 %v92
  %v1053 = vunpack.c.h.b16 %v92
  %v1054 = vunpack.c.l.b16 %v93
  %v1055 = vunpack.c.h.b16 %v93
  %v1056 = vunpack.c.l.b16 %v94
  %v1057 = vunpack.c.h.b16 %v94
  %v1058 = vunpack.c.l.b16 %v95
  %v1059 = vunpack.c.h.b16 %v95
  %v1060 = vunpack.c.l.b16 %v96
  %v1061 = vunpack.c.h.b16 %v96
  %v1062 = vunpack.c.l.b16 %v97
  %v1063 = vunpack.c.h.b16 %v97
  %v1064 = vunpack.c.l.b16 %v98
  %v1065 = vunpack.c.h.b16 %v98
  %v1066 = vunpack.c.l.b16 %v99
  %v1067 = vunpack.c.h.b16 %v99
  %v1068 = vunpack.c.l.b16 %v100
  %v1069 = vunpack.c.h.b16 %v100
  %v1070 = vunpack.c.l.b16 %v101
  %v1071 = vunpack.c.h.b16 %v101
  %v1072 = vunpack.c.l.b16 %v102
  %v1073 = vunpack.c.h.b16 %v102
  %v1074 = vunpack.c.l.b16 %v103
  %v1075 = vunpack.c.h.b16 %v103
  %v1076 = vunpack.c.l.b16 %v104
  %v1077 = vunpack.c.h.b16 %v104
  %v1078 = vunpack.c.l.b16 %v105
  %v1079 = vunpack.c.h.b16 %v105
  %v1080 = vunpack.c.l.b16 %v106
  %v1081 = vunpack.c.h.b16 %v106
  %v1082 = vunpack.c.l.b16 %v107
  %v1083 = vunpack.c.h.b16 %v107
  %v1084 = vunpack.c.l.b16 %v108
  %v1085 = vunpack.c.h.b16 %v108
  %v1086 = vunpack.c.l.b16 %v109
  %v1087 = vunpack.c.h.b16 %v109
  %v1088 = vunpack.c.l.b16 %v110
  %v1089 = vunpack.c.h.b16 %v110
  %v1090 = vunpack.c.l.b16 %v111
  %v1091 = vunpack.c.h.b16 %v111
  %v1092 = vunpack.c.l.b16 %v112
  %v1093 = vunpack.c.h.b16 %v112
  %v1094 = vunpack.c.l.b16 %v113
  %v1095 = vunpack.c.h.b16 %v113
  %v1096 = vunpack.c.l.b16 %v114
  %v1097 = vunpack.c.h.b16 %v114
  %v1098 = vunpack.c.l.b16 %v115
  %v1099 = vunpack.c.h.b16 %v115
  %v1100 = vunpack.c.l.b16 %v116
  %v1101 = vunpack.c.h.b16 %v116
  %v1102 = vunpack.c.l.b16 %v117
  %v1103 = vunpack.c.h.b16 %v117
  %v1104 = vunpack.c.l.b16 %v118
  %v1105 = vunpack.c.h.b16 %v118
  %v1106 = vunpack.c.l.b16 %v119
  %v1107 = vunpack.c.h.b16 %v119
  %v1108 = vunpack.c.l.b16 %v120
  %v1109 = vunpack.c.h.b16 %v120
  %v1110 = vunpack.c.l.b16 %v121
  %v1111 = vunpack.c.h.b16 %v121
  %v1112 = vunpack.c.l.b16 %v122
  %v1113 = vunpack.c.h.b16 %v122
  %v1114 = vunpack.c.l.b16 %v123
  %v1115 = vunpack.c.h.b16 %v123
  %v1116 = vunpack.c.l.b16 %v124
  %v1117 = vunpack.c.h.b16 %v124
  %v1118 = vunpack.c.l.b16 %v125
  %v1119 = vunpack.c.h.b16 %v125
  %v1120 = vunpack.c.l.b16 %v126
  %v1121 = vunpack.c.h.b16 %v126
  %v1122 = vunpack.c.l.b16 %v127
  %v1123 = vunpack.c.h.b16 %v127
  %v1124 = vunpack.c.l.b16 %v128
  %v1125 = vunpack.c.h.b16 %v128
  %v1126 = vunpack.c.l.b16 %v129
  %v1127 = vunpack.c.h.b16 %v129
  %v1128 = vunpack.c.l.b16 %v130
  %v1129 = vunpack.c.h.b16 %v130
  %v1130 = vunpack.c.l.b16 %v131
  %v1131 = vunpack.c.h.b16 %v131
  %v1132 = vunpack.c.l.b16 %v132
  %v1133 = vunpack.c.h.b16 %v132
  %v1134 = vunpack.c.l.b16 %v133
  %v1135 = vunpack.c.h.b16 %v133
  %v1136 = vunpack.c.l.b16 %v134
  %v1137 = vunpack.c.h.b16 %v134
  %v1138 = vunpack.c.l.b16 %v135
  %v1139 = vunpack.c.h.b16 %v135
  %v1140 = vunpack.c.l.b16 %v136
  %v1141 = vunpack.c.h.b16 %v136
  %v1142 = vunpack.c.l.b16 %v137
  %v1143 = vunpack.c.h.b16 %v137
  %v1144 = vunpack.c.l.b16 %v138
  %v1145 = vunpack.c.h.b16 %v138
  %v1146 = vunpack.c.l.b16 %v139
  %v1147 = vunpack.c.h.b16 %v139
  %v1148 = vunpack.c.l.b16 %v140
  %v1149 = vunpack.c.h.b16 %v140
  %v1150 = vunpack.c.l.b16 %v141
  %v1151 = vunpack.c.h.b16 %v141
  %v1152 = vunpack.c.l.b16 %v142
  %v1153 = vunpack.c.h.b16 %v142
  %v1154 = vunpack.c.l.b16 %v143
  %v1155 = vunpack.c.h.b16 %v143
  %v1156 = vunpack.c.l.b16 %v144
  %v1157 = vunpack.c.h.b16 %v144
  %v1158 = vunpack.c.l.b16 %v145
  %v1159 = vunpack.c.h.b16 %v145
  %v1160 = vunpack.c.l.b16 %v146
  %v1161 = vunpack.c.h.b16 %v146
  %v1162 = vunpack.c.l.b16 %v147
  %v1163 = vunpack.c.h.b16 %v147
  %v1164 = vunpack.c.l.b16 %v148
  %v1165 = vunpack.c.h.b16 %v148
  %v1166 = vunpack.c.l.b16 %v149
  %v1167 = vunpack.c.h.b16 %v149
  %v1168 = vunpack.c.l.b16 %v150
  %v1169 = vunpack.c.h.b16 %v150
  %v1170 = vunpack.c.l.b16 %v151
  %v1171 = vunpack.c.h.b16 %v151
  %v1172 = vunpack.c.l.b16 %v152
  %v1173 = vunpack.c.h.b16 %v152
  %v1174 = vunpack.c.l.b16 %v153
  %v1175 = vunpack.c.h.b16 %v153
  %v1176 = vunpack.c.l.b16 %v154
  %v1177 = vunpack.c.h.b16 %v154
  %v1178 = vunpack.c.l.b16 %v155
  %v1179 = vunpack.c.h.b16 %v155
  %v1180 = vunpack.c.l.b16 %v156
  %v1181 = vunpack.c.h.b16 %v156
  %v1182 = vunpack.c.l.b16 %v157
  %v1183 = vunpack.c.h.b16 %v157
  %v1184 = vunpack.c.l.b16 %v158
  %v1185 = vunpack.c.h.b16 %v158
  %v1186 = vunpack.c.l.b16 %v159
  %v1187 = vunpack.c.h.b16 %v159
  %v1188 = vunpack.c.l.b16 %v160
  %v1189 = vunpack.c.h.b16 %v160
  %v1190 = vunpack.c.l.b16 %v161
  %v1191 = vunpack.c.h.b16 %v161
  %v1192 = vunpack.c.l.b16 %v162
  %v1193 = vunpack.c.h.b16 %v162
  %v1194 = vunpack.c.l.b16 %v163
  %v1195 = vunpack.c.h.b16 %v163
  %v1196 = vunpack.c.l.b16 %v164
  %v1197 = vunpack.c.h.b16 %v164
  %v1198 = vunpack.c.l.b16 %v165
  %v1199 = vunpack.c.h.b16 %v165
  %v1200 = vunpack.c.l.b16 %v166
  %v1201 = vunpack.c.h.b16 %v166
  %v1202 = vunpack.c.l.b16 %v167
  %v1203 = vunpack.c.h.b16 %v167
  %v1204 = vunpack.c.l.b16 %v168
  %v1205 = vunpack.c.h.b16 %v168
  %v1206 = vunpack.c.l.b16 %v169
  %v1207 = vunpack.c.h.b16 %v169
  %v1208 = vunpack.c.l.b16 %v170
  %v1209 = vunpack.c.h.b16 %v170
  %v1210 = vunpack.c.l.b16 %v171
  %v1211 = vunpack.c.h.b16 %v171
  %v1212 = vunpack.c.l.b16 %v172
  %v1213 = vunpack.c.h.b16 %v172
  %v1214 = vunpack.c.l.b16 %v173
  %v1215 = vunpack.c.h.b16 %v173
  %v1216 = vunpack.c.l.b16 %v174
  %v1217 = vunpack.c.h.b16 %v174
  %v1218 = vunpack.c.l.b16 %v175
  %v1219 = vunpack.c.h.b16 %v175
  %v1220 = vunpack.c.l.b16 %v176
  %v1221 = vunpack.c.h.b16 %v176
  %v1222 = vunpack.c.l.b16 %v177
  %v1223 = vunpack.c.h.b16 %v177
  %v1224 = vunpack.c.l.b16 %v178
  %v1225 = vunpack.c.h.b16 %v178
  %v1226 = vunpack.c.l.b16 %v179
  %v1227 = vunpack.c.h.b16 %v179
  %v1228 = vunpack.c.l.b16 %v180
  %v1229 = vunpack.c.h.b16 %v180
  %v1230 = vunpack.c.l.b16 %v181
  %v1231 = vunpack.c.h.b16 %v181
  %v1232 = vunpack.c.l.b16 %v182
  %v1233 = vunpack.c.h.b16 %v182
  %v1234 = vunpack.c.l.b16 %v183
  %v1235 = vunpack.c.h.b16 %v183
  %v1236 = vunpack.c.l.b16 %v184
  %v1237 = vunpack.c.h.b16 %v184
  %v1238 = vunpack.c.l.b16 %v185
  %v1239 = vunpack.c.h.b16 %v185
  %v1240 = vunpack.c.l.b16 %v186
  %v1241 = vunpack.c.h.b16 %v186
  %v1242 = vunpack.c.l.b16 %v187
  %v1243 = vunpack.c.h.b16 %v187
  %v1244 = vunpack.c.l.b16 %v188
  %v1245 = vunpack.c.h.b16 %v188
  %v1246 = vunpack.c.l.b16 %v189
  %v1247 = vunpack.c.h.b16 %v189
  %v1248 = vunpack.c.l.b16 %v190
  %v1249 = vunpack.c.h.b16 %v190
  %v1250 = vunpack.c.l.b16 %v191
  %v1251 = vunpack.c.h.b16 %v191
  %v1252 = vunpack.c.l.b16 %v192
  %v1253 = vunpack.c.h.b16 %v192
  %v1254 = vunpack.c.l.b16 %v193
  %v1255 = vunpack.c.h.b16 %v193
  %v1256 = vunpack.c.l.b16 %v194
  %v1257 = vunpack.c.h.b16 %v194
  %v1258 = vunpack.c.l.b16 %v195
  %v1259 = vunpack.c.h.b16 %v195
  %v1260 = vunpack.c.l.b16 %v196
  %v1261 = vunpack.c.h.b16 %v196
  %v1262 = vunpack.c.l.b16 %v197
  %v1263 = vunpack.c.h.b16 %v197
  %v1264 = vunpack.c.l.b16 %v198
  %v1265 = vunpack.c.h.b16 %v198
  %v1266 = vunpack.c.l.b16 %v199
  %v1267 = vunpack.c.h.b16 %v199
  %v1268 = vunpack.c.l.b16 %v200
  %v1269 = vunpack.c.h.b16 %v200
  %v1270 = vunpack.c.l.b16 %v201
  %v1271 = vunpack.c.h.b16 %v201
  %v1272 = vunpack.c.l.b16 %v202
  %v1273 = vunpack.c.h.b16 %v202
  %v1274 = vunpack.c.l.b16 %v203
  %v1275 = vunpack.c.h.b16 %v203
  %v1276 = vunpack.c.l.b16 %v204
  %v1277 = vunpack.c.h.b16 %v204
  %v1278 = vunpack.c.l.b16 %v205
  %v1279 = vunpack.c.h.b16 %v205
  %v1280 = vunpack.c.l.b16 %v206
  %v1281 = vunpack.c.h.b16 %v206
  %v1282 = vunpack.c.l.b16 %v207
  %v1283 = vunpack.c.h.b16 %v207
  %v1284 = vunpack.c.l.b16 %v208
  %v1285 = vunpack.c.h.b16 %v208
  %v1286 = vunpack.c.l.b16 %v209
  %v1287 = vunpack.c.h.b16 %v209
  %v1288 = vunpack.c.l.b16 %v210
  %v1289 = vunpack.c.h.b16 %v210
  %v1290 = vunpack.c.l.b16 %v211
  %v1291 = vunpack.c.h.b16 %v211
  %v1292 = vunpack.c.l.b16 %v212
  %v1293 = vunpack.c.h.b16 %v212
  %v1294 = vunpack.c.l.b16 %v213
  %v1295 = vunpack.c.h.b16 %v213
  %v1296 = vunpack.c.l.b16 %v214
  %v1297 = vunpack.c.h.b16 %v214
  %v1298 = vunpack.c.l.b16 %v215
  %v1299 = vunpack.c.h.b16 %v215
  %v1300 = vunpack.c.l.b16 %v216
  %v1301 = vunpack.c.h.b16 %v216
  %v1302 = vunpack.c.l.b16 %v217
  %v1303 = vunpack.c.h.b16 %v217
  %v1304 = vunpack.c.l.b16 %v218
  %v1305 = vunpack.c.h.b16 %v218
  %v1306 = vunpack.c.l.b16 %v219
  %v1307 = vunpack.c.h.b16 %v219
  %v1308 = vunpack.c.l.b16 %v220
  %v1309 = vunpack.c.h.b16 %v220
  %v1310 = vunpack.c.l.b16 %v221
  %v1311 = vunpack.c.h.b16 %v221
  %v1312 = vunpack.c.l.b16 %v222
  %v1313 = vunpack.c.h.b16 %v222
  %v1314 = vunpack.c.l.b16 %v223
  %v1315 = vunpack.c.h.b16 %v223
  %v1316 = vunpack.c.l.b16 %v224
  %v1317 = vunpack.c.h.b16 %v224
  %v1318 = vunpack.c.l.b16 %v225
  %v1319 = vunpack.c.h.b16 %v225
  %v1320 = vunpack.c.l.b16 %v226
  %v1321 = vunpack.c.h.b16 %v226
  %v1322 = vunpack.c.l.b16 %v227
  %v1323 = vunpack.c.h.b16 %v227
  %v1324 = vunpack.c.l.b16 %v228
  %v1325 = vunpack.c.h.b16 %v228
  %v1326 = vunpack.c.l.b16 %v229
  %v1327 = vunpack.c.h.b16 %v229
  %v1328 = vunpack.c.l.b16 %v230
  %v1329 = vunpack.c.h.b16 %v230
  %v1330 = vunpack.c.l.b16 %v231
  %v1331 = vunpack.c.h.b16 %v231
  %v1332 = vunpack.c.l.b16 %v232
  %v1333 = vunpack.c.h.b16 %v232
  %v1334 = vunpack.c.l.b16 %v233
  %v1335 = vunpack.c.h.b16 %v233
  %v1336 = vunpack.c.l.b16 %v234
  %v1337 = vunpack.c.h.b16 %v234
  %v1338 = vunpack.c.l.b16 %v235
  %v1339 = vunpack.c.h.b16 %v235
  %v1340 = vunpack.c.l.b16 %v236
  %v1341 = vunpack.c.h.b16 %v236
  %v1342 = vunpack.c.l.b16 %v237
  %v1343 = vunpack.c.h.b16 %v237
  %v1344 = vunpack.c.l.b16 %v238
  %v1345 = vunpack.c.h.b16 %v238
  %v1346 = vunpack.c.l.b16 %v239
  %v1347 = vunpack.c.h.b16 %v239
  %v1348 = vunpack.c.l.b16 %v240
  %v1349 = vunpack.c.h.b16 %v240
  %v1350 = vunpack.c.l.b16 %v241
  %v1351 = vunpack.c.h.b16 %v241
  %v1352 = vunpack.c.l.b16 %v242
  %v1353 = vunpack.c.h.b16 %v242
  %v1354 = vunpack.c.l.b16 %v243
  %v1355 = vunpack.c.h.b16 %v243
  %v1356 = vunpack.c.l.b16 %v244
  %v1357 = vunpack.c.h.b16 %v244
  %v1358 = vunpack.c.l.b16 %v245
  %v1359 = vunpack.c.h.b16 %v245
  %v1360 = vunpack.c.l.b16 %v246
  %v1361 = vunpack.c.h.b16 %v246
  %v1362 = vunpack.c.l.b16 %v247
  %v1363 = vunpack.c.h.b16 %v247
  %v1364 = vunpack.c.l.b16 %v248
  %v1365 = vunpack.c.h.b16 %v248
  %v1366 = vunpack.c.l.b16 %v249
  %v1367 = vunpack.c.h.b16 %v249
  %v1368 = vunpack.c.l.b16 %v250
  %v1369 = vunpack.c.h.b16 %v250
  %v1370 = vunpack.c.l.b16 %v251
  %v1371 = vunpack.c.h.b16 %v251
  %v1372 = vunpack.c.l.b16 %v252
  %v1373 = vunpack.c.h.b16 %v252
  %v1374 = vunpack.c.l.b16 %v253
  %v1375 = vunpack.c.h.b16 %v253
  %v1376 = vunpack.c.l.b16 %v254
  %v1377 = vunpack.c.h.b16 %v254
  %v1378 = vunpack.c.l.b16 %v255
  %v1379 = vunpack.c.h.b16 %v255
  %v1380 = vunpack.c.l.b16 %v256
  %v1381 = vunpack.c.h.b16 %v256
  %v1382 = vunpack.c.l.b16 %v257
  %v1383 = vunpack.c.h.b16 %v257
  %v1384 = vunpack.c.l.b16 %v258
  %v1385 = vunpack.c.h.b16 %v258
  %v1386 = vunpack.c.l.b16 %v259
  %v1387 = vunpack.c.h.b16 %v259
  %v1388 = vunpack.c.l.b16 %v260
  %v1389 = vunpack.c.h.b16 %v260
  %v1390 = vunpack.c.l.b16 %v261
  %v1391 = vunpack.c.h.b16 %v261
  %v1392 = vunpack.c.l.b16 %v262
  %v1393 = vunpack.c.h.b16 %v262
  %v1394 = vunpack.c.l.b16 %v263
  %v1395 = vunpack.c.h.b16 %v263
  %v1396 = vunpack.c.l.b16 %v264
  %v1397 = vunpack.c.h.b16 %v264
  %v1398 = vunpack.c.l.b16 %v265
  %v1399 = vunpack.c.h.b16 %v265
  %v1400 = vunpack.c.l.b16 %v266
  %v1401 = vunpack.c.h.b16 %v266
  %v1402 = vunpack.c.l.b16 %v267
  %v1403 = vunpack.c.h.b16 %v267
  %v1404 = vunpack.c.l.b16 %v268
  %v1405 = vunpack.c.h.b16 %v268
  %v1406 = vunpack.c.l.b16 %v269
  %v1407 = vunpack.c.h.b16 %v269
  %v1408 = vunpack.c.l.b16 %v270
  %v1409 = vunpack.c.h.b16 %v270
  %v1410 = vunpack.c.l.b16 %v271
  %v1411 = vunpack.c.h.b16 %v271
  %v1412 = vunpack.c.l.b16 %v272
  %v1413 = vunpack.c.h.b16 %v272
  %v1414 = vunpack.c.l.b16 %v273
  %v1415 = vunpack.c.h.b16 %v273
  %v1416 = vunpack.c.l.b16 %v274
  %v1417 = vunpack.c.h.b16 %v274
  %v1418 = vunpack.c.l.b16 %v275
  %v1419 = vunpack.c.h.b16 %v275
  %v1420 = vunpack.c.l.b16 %v276
  %v1421 = vunpack.c.h.b16 %v276
  %v1422 = vunpack.c.l.b16 %v277
  %v1423 = vunpack.c.h.b16 %v277
  %v1424 = vunpack.c.l.b16 %v278
  %v1425 = vunpack.c.h.b16 %v278
  %v1426 = vunpack.c.l.b16 %v279
  %v1427 = vunpack.c.h.b16 %v279
  %v1428 = vunpack.c.l.b16 %v280
  %v1429 = vunpack.c.h.b16 %v280
  %v1430 = vunpack.c.l.b16 %v281
  %v1431 = vunpack.c.h.b16 %v281
  %v1432 = vunpack.c.l.b16 %v282
  %v1433 = vunpack.c.h.b16 %v282
  %v1434 = vunpack.c.l.b16 %v283
  %v1435 = vunpack.c.h.b16 %v283
  %v1436 = vunpack.c.l.b16 %v284
  %v1437 = vunpack.c.h.b16 %v284
  %v1438 = vunpack.c.l.b16 %v285
  %v1439 = vunpack.c.h.b16 %v285
  %v1440 = vunpack.c.l.b16 %v286
  %v1441 = vunpack.c.h.b16 %v286
  %v1442 = vunpack.c.l.b16 %v287
  %v1443 = vunpack.c.h.b16 %v287
  %v1444 = vunpack.c.l.b16 %v288
  %v1445 = vunpack.c.h.b16 %v288
  %v1446 = vunpack.c.l.b16 %v289
  %v1447 = vunpack.c.h.b16 %v289
  %v1448 = vunpack.c.l.b16 %v290
  %v1449 = vunpack.c.h.b16 %v290
  %v1450 = vunpack.c.l.b16 %v291
  %v1451 = vunpack.c.h.b16 %v291
  %v1452 = vunpack.c.l.b16 %v292
  %v1453 = vunpack.c.h.b16 %v292
  %v1454 = vunpack.c.l.b16 %v293
  %v1455 = vunpack.c.h.b16 %v293
  %v1456 = vunpack.c.l.b16 %v294
  %v1457 = vunpack.c.h.b16 %v294
  %v1458 = vunpack.c.l.b16 %v295
  %v1459 = vunpack.c.h.b16 %v295
  %v1460 = vunpack.c.l.b16 %v296
  %v1461 = vunpack.c.h.b16 %v296
  %v1462 = vunpack.c.l.b16 %v297
  %v1463 = vunpack.c.h.b16 %v297
  %v1464 = vunpack.c.l.b16 %v298
  %v1465 = vunpack.c.h.b16 %v298
  %v1466 = vunpack.c.l.b16 %v299
  %v1467 = vunpack.c.h.b16 %v299
  %v1468 = vunpack.c.l.b16 %v300
  %v1469 = vunpack.c.h.b16 %v300
  %v1470 = vunpack.c.l.b16 %v301
  %v1471 = vunpack.c.h.b16 %v301
  %v1472 = vunpack.c.l.b16 %v302
  %v1473 = vunpack.c.h.b16 %v302
  %v1474 = vunpack.c.l.b16 %v303
  %v1475 = vunpack.c.h.b16 %v303
  %v1476 = vunpack.c.l.b16 %v304
  %v1477 = vunpack.c.h.b16 %v304
  %v1478 = vunpack.c.l.b16 %v305
  %v1479 = vunpack.c.h.b16 %v305
  %v1480 = vunpack.c.l.b16 %v306
  %v1481 = vunpack.c.h.b16 %v306
  %v1482 = vunpack.c.l.b16 %v307
  %v1483 = vunpack.c.h.b16 %v307
  %v1484 = vunpack.c.l.b16 %v308
  %v1485 = vunpack.c.h.b16 %v308
  %v1486 = vunpack.c.l.b16 %v309
  %v1487 = vunpack.c.h.b16 %v309
  %v1488 = vunpack.c.l.b16 %v310
  %v1489 = vunpack.c.h.b16 %v310
  %v1490 = vunpack.c.l.b16 %v311
  %v1491 = vunpack.c.h.b16 %v311
  %v1492 = vunpack.c.l.b16 %v312
  %v1493 = vunpack.c.h.b16 %v312
  %v1494 = vunpack.c.l.b16 %v313
  %v1495 = vunpack.c.h.b16 %v313
  %v1496 = vunpack.c.l.b16 %v314
  %v1497 = vunpack.c.h.b16 %v314
  %v1498 = vunpack.c.l.b16 %v315
  %v1499 = vunpack.c.h.b16 %v315
  %v1500 = vunpack.c.l.b16 %v316
  %v1501 = vunpack.c.h.b16 %v316
  %v1502 = vunpack.c.l.b16 %v317
  %v1503 = vunpack.c.h.b16 %v317
  %v1504 = vunpack.c.l.b16 %v318
  %v1505 = vunpack.c.h.b16 %v318
  %v1506 = vunpack.c.l.b16 %v319
  %v1507 = vunpack.c.h.b16 %v319
  %v1508 = vunpack.c.l.b16 %v320
  %v1509 = vunpack.c.h.b16 %v320
  %v1510 = vunpack.c.l.b16 %v321
  %v1511 = vunpack.c.h.b16 %v321
  %v1512 = vunpack.c.l.b16 %v322
  %v1513 = vunpack.c.h.b16 %v322
  %v1514 = vunpack.c.l.b16 %v323
  %v1515 = vunpack.c.h.b16 %v323
  %v1516 = vunpack.c.l.b16 %v324
  %v1517 = vunpack.c.h.b16 %v324
  %v1518 = vunpack.c.l.b16 %v325
  %v1519 = vunpack.c.h.b16 %v325
  %v1520 = vunpack.c.l.b16 %v326
  %v1521 = vunpack.c.h.b16 %v326
  %v1522 = vunpack.c.l.b16 %v327
  %v1523 = vunpack.c.h.b16 %v327
  %v1524 = vunpack.c.l.b16 %v328
  %v1525 = vunpack.c.h.b16 %v328
  %v1526 = vunpack.c.l.b16 %v329
  %v1527 = vunpack.c.h.b16 %v329
  %v1528 = vunpack.c.l.b16 %v330
  %v1529 = vunpack.c.h.b16 %v330
  %v1530 = vunpack.c.l.b16 %v331
  %v1531 = vunpack.c.h.b16 %v331
  %v1532 = vunpack.c.l.b16 %v332
  %v1533 = vunpack.c.h.b16 %v332
  %v1534 = vunpack.c.l.b16 %v333
  %v1535 = vunpack.c.h.b16 %v333
  %v1536 = vunpack.c.l.b16 %v334
  %v1537 = vunpack.c.h.b16 %v334
  %v1538 = vunpack.c.l.b16 %v335
  %v1539 = vunpack.c.h.b16 %v335
  %v1540 = vunpack.c.l.b16 %v336
  %v1541 = vunpack.c.h.b16 %v336
  %v1542 = vunpack.c.l.b16 %v337
  %v1543 = vunpack.c.h.b16 %v337
  %v1544 = vunpack.c.l.b16 %v338
  %v1545 = vunpack.c.h.b16 %v338
  %v1546 = vunpack.c.l.b16 %v339
  %v1547 = vunpack.c.h.b16 %v339
  %v1548 = vunpack.c.l.b16 %v340
  %v1549 = vunpack.c.h.b16 %v340
  %v1550 = vunpack.c.l.b16 %v341
  %v1551 = vunpack.c.h.b16 %v341
  %v1552 = vunpack.c.l.b16 %v342
  %v1553 = vunpack.c.h.b16 %v342
  %v1554 = vunpack.c.l.b16 %v343
  %v1555 = vunpack.c.h.b16 %v343
  %v1556 = vunpack.c.l.b16 %v344
  %v1557 = vunpack.c.h.b16 %v344
  %v1558 = vunpack.c.l.b16 %v345
  %v1559 = vunpack.c.h.b16 %v345
  %v1560 = vunpack.c.l.b16 %v346
  %v1561 = vunpack.c.h.b16 %v346
  %v1562 = vunpack.c.l.b16 %v347
  %v1563 = vunpack.c.h.b16 %v347
  %v1564 = vunpack.c.l.b16 %v348
  %v1565 = vunpack.c.h.b16 %v348
  %v1566 = vunpack.c.l.b16 %v349
  %v1567 = vunpack.c.h.b16 %v349
  %v1568 = vunpack.c.l.b16 %v350
  %v1569 = vunpack.c.h.b16 %v350
  %v1570 = vunpack.c.l.b16 %v351
  %v1571 = vunpack.c.h.b16 %v351
  %v1572 = vunpack.c.l.b16 %v352
  %v1573 = vunpack.c.h.b16 %v352
  %v1574 = vunpack.c.l.b16 %v353
  %v1575 = vunpack.c.h.b16 %v353
  %v1576 = vunpack.c.l.b16 %v354
  %v1577 = vunpack.c.h.b16 %v354
  %v1578 = vunpack.c.l.b16 %v355
  %v1579 = vunpack.c.h.b16 %v355
  %v1580 = vunpack.c.l.b16 %v356
  %v1581 = vunpack.c.h.b16 %v356
  %v1582 = vunpack.c.l.b16 %v357
  %v1583 = vunpack.c.h.b16 %v357
  %v1584 = vunpack.c.l.b16 %v358
  %v1585 = vunpack.c.h.b16 %v358
  %v1586 = vunpack.c.l.b16 %v359
  %v1587 = vunpack.c.h.b16 %v359
  %v1588 = vunpack.c.l.b16 %v360
  %v1589 = vunpack.c.h.b16 %v360
  %v1590 = vunpack.c.l.b16 %v361
  %v1591 = vunpack.c.h.b16 %v361
  %v1592 = vunpack.c.l.b16 %v362
  %v1593 = vunpack.c.h.b16 %v362
  %v1594 = vunpack.c.l.b16 %v363
  %v1595 = vunpack.c.h.b16 %v363
  %v1596 = vunpack.c.l.b16 %v364
  %v1597 = vunpack.c.h.b16 %v364
  %v1598 = vunpack.c.l.b16 %v365
  %v1599 = vunpack.c.h.b16 %v365
  %v1600 = vunpack.c.l.b16 %v366
  %v1601 = vunpack.c.h.b16 %v366
  %v1602 = vunpack.c.l.b16 %v367
  %v1603 = vunpack.c.h.b16 %v367
  %v1604 = vunpack.c.l.b16 %v368
  %v1605 = vunpack.c.h.b16 %v368
  %v1606 = vunpack.c.l.b16 %v369
  %v1607 = vunpack.c.h.b16 %v369
  %v1608 = vunpack.c.l.b16 %v370
  %v1609 = vunpack.c.h.b16 %v370
  %v1610 = vunpack.c.l.b16 %v371
  %v1611 = vunpack.c.h.b16 %v371
  %v1612 = vunpack.c.l.b16 %v372
  %v1613 = vunpack.c.h.b16 %v372
  %v1614 = vunpack.c.l.b16 %v373
  %v1615 = vunpack.c.h.b16 %v373
  %v1616 = vunpack.c.l.b16 %v374
  %v1617 = vunpack.c.h.b16 %v374
  %v1618 = vunpack.c.l.b16 %v375
  %v1619 = vunpack.c.h.b16 %v375
  %v1620 = vunpack.c.l.b16 %v376
  %v1621 = vunpack.c.h.b16 %v376
  %v1622 = vunpack.c.l.b16 %v377
  %v1623 = vunpack.c.h.b16 %v377
  %v1624 = vunpack.c.l.b16 %v378
  %v1625 = vunpack.c.h.b16 %v378
  %v1626 = vunpack.c.l.b16 %v379
  %v1627 = vunpack.c.h.b16 %v379
  %v1628 = vunpack.c.l.b16 %v380
  %v1629 = vunpack.c.h.b16 %v380
  %v1630 = vunpack.c.l.b16 %v381
  %v1631 = vunpack.c.h.b16 %v381
  %v1632 = vunpack.c.l.b16 %v382
  %v1633 = vunpack.c.h.b16 %v382
  %v1634 = vunpack.c.l.b16 %v383
  %v1635 = vunpack.c.h.b16 %v383
  %v1636 = vunpack.c.l.b16 %v384
  %v1637 = vunpack.c.h.b16 %v384
  %v1638 = vunpack.c.l.b16 %v385
  %v1639 = vunpack.c.h.b16 %v385
  %v1640 = vunpack.c.l.b16 %v386
  %v1641 = vunpack.c.h.b16 %v386
  %v1642 = vunpack.c.l.b16 %v387
  %v1643 = vunpack.c.h.b16 %v387
  %v1644 = vunpack.c.l.b16 %v388
  %v1645 = vunpack.c.h.b16 %v388
  %v1646 = vunpack.c.l.b16 %v389
  %v1647 = vunpack.c.h.b16 %v389
  %v1648 = vunpack.c.l.b16 %v390
  %v1649 = vunpack.c.h.b16 %v390
  %v1650 = vunpack.c.l.b16 %v391
  %v1651 = vunpack.c.h.b16 %v391
  %v1652 = vunpack.c.l.b16 %v392
  %v1653 = vunpack.c.h.b16 %v392
  %v1654 = vunpack.c.l.b16 %v393
  %v1655 = vunpack.c.h.b16 %v393
  %v1656 = vunpack.c.l.b16 %v394
  %v1657 = vunpack.c.h.b16 %v394
  %v1658 = vunpack.c.l.b16 %v395
  %v1659 = vunpack.c.h.b16 %v395
  %v1660 = vunpack.c.l.b16 %v396
  %v1661 = vunpack.c.h.b16 %v396
  %v1662 = vunpack.c.l.b16 %v397
  %v1663 = vunpack.c.h.b16 %v397
  %v1664 = vunpack.c.l.b16 %v398
  %v1665 = vunpack.c.h.b16 %v398
  %v1666 = vunpack.c.l.b16 %v399
  %v1667 = vunpack.c.h.b16 %v399
  %v1668 = vunpack.c.l.b16 %v400
  %v1669 = vunpack.c.h.b16 %v400
  %v1670 = vunpack.c.l.b16 %v401
  %v1671 = vunpack.c.h.b16 %v401
  %v1672 = vunpack.c.l.b16 %v402
  %v1673 = vunpack.c.h.b16 %v402
  %v1674 = vunpack.c.l.b16 %v403
  %v1675 = vunpack.c.h.b16 %v403
  %v1676 = vunpack.c.l.b16 %v404
  %v1677 = vunpack.c.h.b16 %v404
  %v1678 = vunpack.c.l.b16 %v405
  %v1679 = vunpack.c.h.b16 %v405
  %v1680 = vunpack.c.l.b16 %v406
  %v1681 = vunpack.c.h.b16 %v406
  %v1682 = vunpack.c.l.b16 %v407
  %v1683 = vunpack.c.h.b16 %v407
  %v1684 = vunpack.c.l.b16 %v408
  %v1685 = vunpack.c.h.b16 %v408
  %v1686 = vunpack.c.l.b16 %v409
  %v1687 = vunpack.c.h.b16 %v409
  %v1688 = vunpack.c.l.b16 %v410
  %v1689 = vunpack.c.h.b16 %v410
  %v1690 = vunpack.c.l.b16 %v411
  %v1691 = vunpack.c.h.b16 %v411
  %v1692 = vunpack.c.l.b16 %v412
  %v1693 = vunpack.c.h.b16 %v412
  %v1694 = vunpack.c.l.b16 %v413
  %v1695 = vunpack.c.h.b16 %v413
  %v1696 = vunpack.c.l.b16 %v414
  %v1697 = vunpack.c.h.b16 %v414
  %v1698 = vunpack.c.l.b16 %v415
  %v1699 = vunpack.c.h.b16 %v415
  %v1700 = vunpack.c.l.b16 %v416
  %v1701 = vunpack.c.h.b16 %v416
  %v1702 = vunpack.c.l.b16 %v417
  %v1703 = vunpack.c.h.b16 %v417
  %v1704 = vunpack.c.l.b16 %v418
  %v1705 = vunpack.c.h.b16 %v418
  %v1706 = vunpack.c.l.b16 %v419
  %v1707 = vunpack.c.h.b16 %v419
  %v1708 = vunpack.c.l.b16 %v420
  %v1709 = vunpack.c.h.b16 %v420
  %v1710 = vunpack.c.l.b16 %v421
  %v1711 = vunpack.c.h.b16 %v421
  %v1712 = vunpack.c.l.b16 %v422
  %v1713 = vunpack.c.h.b16 %v422
  %v1714 = vunpack.c.l.b16 %v423
  %v1715 = vunpack.c.h.b16 %v423
  %v1716 = vunpack.c.l.b16 %v424
  %v1717 = vunpack.c.h.b16 %v424
  %v1718 = vunpack.c.l.b16 %v425
  %v1719 = vunpack.c.h.b16 %v425
  %v1720 = vunpack.c.l.b16 %v426
  %v1721 = vunpack.c.h.b16 %v426
  %v1722 = vunpack.c.l.b16 %v427
  %v1723 = vunpack.c.h.b16 %v427
  %v1724 = vunpack.c.l.b16 %v428
  %v1725 = vunpack.c.h.b16 %v428
  %v1726 = vunpack.c.l.b16 %v429
  %v1727 = vunpack.c.h.b16 %v429
  %v1728 = vunpack.c.l.b16 %v430
  %v1729 = vunpack.c.h.b16 %v430
  %v1730 = vunpack.c.l.b16 %v431
  %v1731 = vunpack.c.h.b16 %v431
  %v1732 = vunpack.c.l.b16 %v432
  %v1733 = vunpack.c.h.b16 %v432
  %v1734 = vunpack.c.l.b16 %v433
  %v1735 = vunpack.c.h.b16 %v433
  %v1736 = vunpack.c.l.b16 %v434
  %v1737 = vunpack.c.h.b16 %v434
  %v1738 = vunpack.c.l.b16 %v435
  %v1739 = vunpack.c.h.b16 %v435
  %v1740 = vunpack.c.l.b16 %v436
  %v1741 = vunpack.c.h.b16 %v436
  %v1742 = vunpack.c.l.b16 %v437
  %v1743 = vunpack.c.h.b16 %v437
  %v1744 = vunpack.c.l.b16 %v438
  %v1745 = vunpack.c.h.b16 %v438
  %v1746 = vpack.c.b16 %v964, %v962
  %v1747 = vpack.c.b16 %v965, %v963
  %v1748 = vpack.c.b16 %v968, %v966
  %v1749 = vpack.c.b16 %v969, %v967
  %v1750 = vpack.c.b16 %v972, %v970
  %v1751 = vpack.c.b16 %v973, %v971
  %v1752 = vpack.c.b16 %v976, %v974
  %v1753 = vpack.c.b16 %v977, %v975
  %v1754 = vpack.c.b16 %v980, %v978
  %v1755 = vpack.c.b16 %v981, %v979
  %v1756 = vpack.c.b16 %v984, %v982
  %v1757 = vpack.c.b16 %v985, %v983
  %v1758 = vpack.c.b16 %v988, %v986
  %v1759 = vpack.c.b16 %v989, %v987
  %v1760 = vpack.c.b16 %v992, %v990
  %v1761 = vpack.c.b16 %v993, %v991
  %v1762 = vpack.c.b16 %v996, %v994
  %v1763 = vpack.c.b16 %v997, %v995
  %v1764 = vpack.c.b16 %v1000, %v998
  %v1765 = vpack.c.b16 %v1001, %v999
  %v1766 = vpack.c.b16 %v1004, %v1002
  %v1767 = vpack.c.b16 %v1005, %v1003
  %v1768 = vpack.c.b16 %v1008, %v1006
  %v1769 = vpack.c.b16 %v1009, %v1007
  %v1770 = vpack.c.b16 %v1012, %v1010
  %v1771 = vpack.c.b16 %v1013, %v1011
  %v1772 = vpack.c.b16 %v1016, %v1014
  %v1773 = vpack.c.b16 %v1017, %v1015
  %v1774 = vpack.c.b16 %v1020, %v1018
  %v1775 = vpack.c.b16 %v1021, %v1019
  %v1776 = vpack.c.b16 %v1024, %v1022
  %v1777 = vpack.c.b16 %v1025, %v1023
  %v1778 = vpack.c.b16 %v1028, %v1026
  %v1779 = vpack.c.b16 %v1029, %v1027
  %v1780 = vpack.c.b16 %v1032, %v1030
  %v1781 = vpack.c.b16 %v1033, %v1031
  %v1782 = vpack.c.b16 %v1036, %v1034
  %v1783 = vpack.c.b16 %v1037, %v1035
  %v1784 = vpack.c.b16 %v1040, %v1038
  %v1785 = vpack.c.b16 %v1041, %v1039
  %v1786 = vpack.c.b16 %v1044, %v1042
  %v1787 = vpack.c.b16 %v1045, %v1043
  %v1788 = vpack.c.b16 %v1048, %v1046
  %v1789 = vpack.c.b16 %v1049, %v1047
  %v1790 = vpack.c.b16 %v1052, %v1050
  %v1791 = vpack.c.b16 %v1053, %v1051
  %v1792 = vpack.c.b16 %v1056, %v1054
  %v1793 = vpack.c.b16 %v1057, %v1055
  %v1794 = vpack.c.b16 %v1060, %v1058
  %v1795 = vpack.c.b16 %v1061, %v1059
  %v1796 = vpack.c.b16 %v1064, %v1062
  %v1797 = vpack.c.b16 %v1065, %v1063
  %v1798 = vpack.c.b16 %v1068, %v1066
  %v1799 = vpack.c.b16 %v1069, %v1067
  %v1800 = vpack.c.b16 %v1072, %v1070
  %v1801 = vpack.c.b16 %v1073, %v1071
  %v1802 = vpack.c.b16 %v1076, %v1074
  %v1803 = vpack.c.b16 %v1077, %v1075
  %v1804 = vpack.c.b16 %v1080, %v1078
  %v1805 = vpack.c.b16 %v1081, %v1079
  %v1806 = vpack.c.b16 %v1084, %v1082
  %v1807 = vpack.c.b16 %v1085, %v1083
  %v1808 = vpack.c.b16 %v1088, %v1086
  %v1809 = vpack.c.b16 %v1089, %v1087
  %v1810 = vpack.c.b16 %v1092, %v1090
  %v1811 = vpack.c.b16 %v1093, %v1091
  %v1812 = vpack.c.b16 %v1096, %v1094
  %v1813 = vpack.c.b16 %v1097, %v1095
  %v1814 = vpack.c.b16 %v1100, %v1098
  %v1815 = vpack.c.b16 %v1101, %v1099
  %v1816 = vpack.c.b16 %v1104, %v1102
  %v1817 = vpack.c.b16 %v1105, %v1103
  %v1818 = vpack.c.b16 %v1108, %v1106
  %v1819 = vpack.c.b16 %v1109, %v1107
  %v1820 = vpack.c.b16 %v1112, %v1110
  %v1821 = vpack.c.b16 %v1113, %v1111
  %v1822 = vpack.c.b16 %v1116, %v1114
  %v1823 = vpack.c.b16 %v1117, %v1115
  %v1824 = vpack.c.b16 %v1120, %v1118
  %v1825 = vpack.c.b16 %v1121, %v1119
  %v1826 = vpack.c.b16 %v1124, %v1122
  %v1827 = vpack.c.b16 %v1125, %v1123
  %v1828 = vpack.c.b16 %v1128, %v1126
  %v1829 = vpack.c.b16 %v1129, %v1127
  %v1830 = vpack.c.b16 %v1132, %v1130
  %v1831 = vpack.c.b16 %v1133, %v1131
  %v1832 = vpack.c.b16 %v1136, %v1134
  %v1833 = vpack.c.b16 %v1137, %v1135
  %v1834 = vpack.c.b16 %v1140, %v1138
  %v1835 = vpack.c.b16 %v1141, %v1139
  %v1836 = vpack.c.b16 %v1144, %v1142
  %v1837 = vpack.c.b16 %v1145, %v1143
  %v1838 = vpack.c.b16 %v1148, %v1146
  %v1839 = vpack.c.b16 %v1149, %v1147
  %v1840 = vpack.c.b16 %v1152, %v1150
  %v1841 = vpack.c.b16 %v1153, %v1151
  %v1842 = vpack.c.b16 %v1156, %v1154
  %v1843 = vpack.c.b16 %v1157, %v1155
  %v1844 = vpack.c.b16 %v1160, %v1158
  %v1845 = vpack.c.b16 %v1161, %v1159
  %v1846 = vpack.c.b16 %v1164, %v1162
  %v1847 = vpack.c.b16 %v1165, %v1163
  %v1848 = vpack.c.b16 %v1168, %v1166
  %v1849 = vpack.c.b16 %v1169, %v1167
  %v1850 = vpack.c.b16 %v1172, %v1170
  %v1851 = vpack.c.b16 %v1173, %v1171
  %v1852 = vpack.c.b16 %v1176, %v1174
  %v1853 = vpack.c.b16 %v1177, %v1175
  %v1854 = vpack.c.b16 %v1180, %v1178
  %v1855 = vpack.c.b16 %v1181, %v1179
  %v1856 = vpack.c.b16 %v1184, %v1182
  %v1857 = vpack.c.b16 %v1185, %v1183
  %v1858 = vpack.c.b16 %v1188, %v1186
  %v1859 = vpack.c.b16 %v1189, %v1187
  %v1860 = vpack.c.b16 %v1192, %v1190
  %v1861 = vpack.c.b16 %v1193, %v1191
  %v1862 = vpack.c.b16 %v1196, %v1194
  %v1863 = vpack.c.b16 %v1197, %v1195
  %v1864 = vpack.c.b16 %v1200, %v1198
  %v1865 = vpack.c.b16 %v1201, %v1199
  %v1866 = vpack.c.b16 %v1204, %v1202
  %v1867 = vpack.c.b16 %v1205, %v1203
  %v1868 = vpack.c.b16 %v1208, %v1206
  %v1869 = vpack.c.b16 %v1209, %v1207
  %v1870 = vpack.c.b16 %v1212, %v1210
  %v1871 = vpack.c.b16 %v1213, %v1211
  %v1872 = vpack.c.b16 %v1216, %v1214
  %v1873 = vpack.c.b16 %v1217, %v1215
  %v1874 = vpack.c.b16 %v1220, %v1218
  %v1875 = vpack.c.b16 %v1221, %v1219
  %v1876 = vpack.c.b16 %v1224, %v1222
  %v1877 = vpack.c.b16 %v1225, %v1223
  %v1878 = vpack.c.b16 %v1228, %v1226
  %v1879 = vpack.c.b16 %v1229, %v1227
  %v1880 = vpack.c.b16 %v1232, %v1230
  %v1881 = vpack.c.b16 %v1233, %v1231
  %v1882 = vpack.c.b16 %v1236, %v1234
  %v1883 = vpack.c.b16 %v1237, %v1235
  %v1884 = vpack.c.b16 %v1240, %v1238
  %v1885 = vpack.c.b16 %v1241, %v1239
  %v1886 = vpack.c.b16 %v1244, %v1242
  %v1887 = vpack.c.b16 %v1245, %v1243
  %v1888 = vpack.c.b16 %v1248, %v1246
  %v1889 = vpack.c.b16 %v1249, %v1247
  %v1890 = vpack.c.b16 %v1252, %v1250
  %v1891 = vpack.c.b16 %v1253, %v1251
  %v1892 = vpack.c.b16 %v1256, %v1254
  %v1893 = vpack.c.b16 %v1257, %v1255
  %v1894 = vpack.c.b16 %v1260, %v1258
  %v1895 = vpack.c.b16 %v1261, %v1259
  %v1896 = vpack.c.b16 %v1264, %v1262
  %v1897 = vpack.c.b16 %v1265, %v1263
  %v1898 = vpack.c.b16 %v1268, %v1266
  %v1899 = vpack.c.b16 %v1269, %v1267
  %v1900 = vpack.c.b16 %v1272, %v1270
  %v1901 = vpack.c.b16 %v1273, %v1271
  %v1902 = vpack.c.b16 %v1276, %v1274
  %v1903 = vpack.c.b16 %v1277, %v1275
  %v1904 = vpack.c.b16 %v1280, %v1278
  %v1905 = vpack.c.b16 %v1281, %v1279
  %v1906 = vpack.c.b16 %v1284, %v1282
  %v1907 = vpack.c.b16 %v1285, %v1283
  %v1908 = vpack.c.b16 %v1288, %v1286
  %v1909 = vpack.c.b16 %v1289, %v1287
  %v1910 = vpack.c.b16 %v1292, %v1290
  %v1911 = vpack.c.b16 %v1293, %v1291
  %v1912 = vpack.c.b16 %v1296, %v1294
  %v1913 = vpack.c.b16 %v1297, %v1295
  %v1914 = vpack.c.b16 %v1300, %v1298
  %v1915 = vpack.c.b16 %v1301, %v1299
  %v1916 = vpack.c.b16 %v1304, %v1302
  %v1917 = vpack.c.b16 %v1305, %v1303
  %v1918 = vpack.c.b16 %v1308, %v1306
  %v1919 = vpack.c.b16 %v1309, %v1307
  %v1920 = vpack.c.b16 %v1312, %v1310
  %v1921 = vpack.c.b16 %v1313, %v1311
  %v1922 = vpack.c.b16 %v1316, %v1314
  %v1923 = vpack.c.b16 %v1317, %v1315
  %v1924 = vpack.c.b16 %v1320, %v1318
  %v1925 = vpack.c.b16 %v1321, %v1319
  %v1926 = vpack.c.b16 %v1324, %v1322
  %v1927 = vpack.c.b16 %v1325, %v1323
  %v1928 = vpack.c.b16 %v1328, %v1326
  %v1929 = vpack.c.b16 %v1329, %v1327
  %v1930 = vpack.c.b16 %v1332, %v1330
  %v1931 = vpack.c.b16 %v1333, %v1331
  %v1932 = vpack.c.b16 %v1336, %v1334
  %v1933 = vpack.c.b16 %v1337, %v1335
  %v1934 = vpack.c.b16 %v1340, %v1338
  %v1935 = vpack.c.b16 %v1341, %v1339
  %v1936 = vpack.c.b16 %v1344, %v1342
  %v1937 = vpack.c.b16 %v1345, %v1343
  %v1938 = vpack.c.b16 %v1348, %v1346
  %v1939 = vpack.c.b16 %v1349, %v1347
  %v1940 = vpack.c.b16 %v1352, %v1350
  %v1941 = vpack.c.b16 %v1353, %v1351
  %v1942 = vpack.c.b16 %v1356, %v1354
  %v1943 = vpack.c.b16 %v1357, %v1355
  %v1944 = vpack.c.b16 %v1360, %v1358
  %v1945 = vpack.c.b16 %v1361, %v1359
  %v1946 = vpack.c.b16 %v1364, %v1362
  %v1947 = vpack.c.b16 %v1365, %v1363
  %v1948 = vpack.c.b16 %v1368, %v1366
  %v1949 = vpack.c.b16 %v1369, %v1367
  %v1950 = vpack.c.b16 %v1372, %v1370
  %v1951 = vpack.c.b16 %v1373, %v1371
  %v1952 = vpack.c.b16 %v1376, %v1374
  %v1953 = vpack.c.b16 %v1377, %v1375
  %v1954 = vpack.c.b16 %v1380, %v1378
  %v1955 = vpack.c.b16 %v1381, %v1379
  %v1956 = vpack.c.b16 %v1384, %v1382
  %v1957 = vpack.c.b16 %v1385, %v1383
  %v1958 = vpack.c.b16 %v1388, %v1386
  %v1959 = vpack.c.b16 %v1389, %v1387
  %v1960 = vpack.c.b16 %v1392, %v1390
  %v1961 = vpack.c.b16 %v1393, %v1391
  %v1962 = vpack.c.b16 %v1396, %v1394
  %v1963 = vpack.c.b16 %v1397, %v1395
  %v1964 = vpack.c.b16 %v1400, %v1398
  %v1965 = vpack.c.b16 %v1401, %v1399
  %v1966 = vpack.c.b16 %v1404, %v1402
  %v1967 = vpack.c.b16 %v1405, %v1403
  %v1968 = vpack.c.b16 %v1408, %v1406
  %v1969 = vpack.c.b16 %v1409, %v1407
  %v1970 = vpack.c.b16 %v1412, %v1410
  %v1971 = vpack.c.b16 %v1413, %v1411
  %v1972 = vpack.c.b16 %v1416, %v1414
  %v1973 = vpack.c.b16 %v1417, %v1415
  %v1974 = vpack.c.b16 %v1420, %v1418
  %v1975 = vpack.c.b16 %v1421, %v1419
  %v1976 = vpack.c.b16 %v1424, %v1422
  %v1977 = vpack.c.b16 %v1425, %v1423
  %v1978 = vpack.c.b16 %v1428, %v1426
  %v1979 = vpack.c.b16 %v1429, %v1427
  %v1980 = vpack.c.b16 %v1432, %v1430
  %v1981 = vpack.c.b16 %v1433, %v1431
  %v1982 = vpack.c.b16 %v1436, %v1434
  %v1983 = vpack.c.b16 %v1437, %v1435
  %v1984 = vpack.c.b16 %v1440, %v1438
  %v1985 = vpack.c.b16 %v1441, %v1439
  %v1986 = vpack.c.b16 %v1444, %v1442
  %v1987 = vpack.c.b16 %v1445, %v1443
  %v1988 = vpack.c.b16 %v1448, %v1446
  %v1989 = vpack.c.b16 %v1449, %v1447
  %v1990 = vpack.c.b16 %v1452, %v1450
  %v1991 = vpack.c.b16 %v1453, %v1451
  %v1992 = vpack.c.b16 %v1456, %v1454
  %v1993 = vpack.c.b16 %v1457, %v1455
  %v1994 = vpack.c.b16 %v1460, %v1458
  %v1995 = vpack.c.b16 %v1461, %v1459
  %v1996 = vpack.c.b16 %v1464, %v1462
  %v1997 = vpack.c.b16 %v1465, %v1463
  %v1998 = vpack.c.b16 %v1468, %v1466
  %v1999 = vpack.c.b16 %v1469, %v1467
  %v2000 = vpack.c.b16 %v1472, %v1470
  %v2001 = vpack.c.b16 %v1473, %v1471
  %v2002 = vpack.c.b16 %v1476, %v1474
  %v2003 = vpack.c.b16 %v1477, %v1475
  %v2004 = vpack.c.b16 %v1480, %v1478
  %v2005 = vpack.c.b16 %v1481, %v1479
  %v2006 = vpack.c.b16 %v1484, %v1482
  %v2007 = vpack.c.b16 %v1485, %v1483
  %v2008 = vpack.c.b16 %v1488, %v1486
  %v2009 = vpack.c.b16 %v1489, %v1487
  %v2010 = vpack.c.b16 %v1492, %v1490
  %v2011 = vpack.c.b16 %v1493, %v1491
  %v2012 = vpack.c.b16 %v1496, %v1494
  %v2013 = vpack.c.b16 %v1497, %v1495
  %v2014 = vpack.c.b16 %v1500, %v1498
  %v2015 = vpack.c.b16 %v1501, %v1499
  %v2016 = vpack.c.b16 %v1504, %v1502
  %v2017 = vpack.c.b16 %v1505, %v1503
  %v2018 = vpack.c.b16 %v1508, %v1506
  %v2019 = vpack.c.b16 %v1509, %v1507
  %v2020 = vpack.c.b16 %v1512, %v1510
  %v2021 = vpack.c.b16 %v1513, %v1511
  %v2022 = vpack.c.b16 %v1516, %v1514
  %v2023 = vpack.c.b16 %v1517, %v1515
  %v2024 = vpack.c.b16 %v1520, %v1518
  %v2025 = vpack.c.b16 %v1521, %v1519
  %v2026 = vpack.c.b16 %v1524, %v1522
  %v2027 = vpack.c.b16 %v1525, %v1523
  %v2028 = vpack.c.b16 %v1528, %v1526
  %v2029 = vpack.c.b16 %v1529, %v1527
  %v2030 = vpack.c.b16 %v1532, %v1530
  %v2031 = vpack.c.b16 %v1533, %v1531
  %v2032 = vpack.c.b16 %v1536, %v1534
  %v2033 = vpack.c.b16 %v1537, %v1535
  %v2034 = vpack.c.b16 %v1540, %v1538
  %v2035 = vpack.c.b16 %v1541, %v1539
  %v2036 = vpack.c.b16 %v1544, %v1542
  %v2037 = vpack.c.b16 %v1545, %v1543
  %v2038 = vpack.c.b16 %v1548, %v1546
  %v2039 = vpack.c.b16 %v1549, %v1547
  %v2040 = vpack.c.b16 %v1552, %v1550
  %v2041 = vpack.c.b16 %v1553, %v1551
  %v2042 = vpack.c.b16 %v1556, %v1554
  %v2043 = vpack.c.b16 %v1557, %v1555
  %v2044 = vpack.c.b16 %v1560, %v1558
  %v2045 = vpack.c.b16 %v1561, %v1559
  %v2046 = vpack.c.b16 %v1564, %v1562
  %v2047 = vpack.c.b16 %v1565, %v1563
  %v2048 = vpack.c.b16 %v1568, %v1566
  %v2049 = vpack.c.b16 %v1569, %v1567
  %v2050 = vpack.c.b16 %v1572, %v1570
  %v2051 = vpack.c.b16 %v1573, %v1571
  %v2052 = vpack.c.b16 %v1576, %v1574
  %v2053 = vpack.c.b16 %v1577, %v1575
  %v2054 = vpack.c.b16 %v1580, %v1578
  %v2055 = vpack.c.b16 %v1581, %v1579
  %v2056 = vpack.c.b16 %v1584, %v1582
  %v2057 = vpack.c.b16 %v1585, %v1583
  %v2058 = vpack.c.b16 %v1588, %v1586
  %v2059 = vpack.c.b16 %v1589, %v1587
  %v2060 = vpack.c.b16 %v1592, %v1590
  %v2061 = vpack.c.b16 %v1593, %v1591
  %v2062 = vpack.c.b16 %v1596, %v1594
  %v2063 = vpack.c.b16 %v1597, %v1595
  %v2064 = vpack.c.b16 %v1600, %v1598
  %v2065 = vpack.c.b16 %v1601, %v1599
  %v2066 = vpack.c.b16 %v1604, %v1602
  %v2067 = vpack.c.b16 %v1605, %v1603
  %v2068 = vpack.c.b16 %v1608, %v1606
  %v2069 = vpack.c.b16 %v1609, %v1607
  %v2070 = vpack.c.b16 %v1612, %v1610
  %v2071 = vpack.c.b16 %v1613, %v1611
  %v2072 = vpack.c.b16 %v1616, %v1614
  %v2073 = vpack.c.b16 %v1617, %v1615
  %v2074 = vpack.c.b16 %v1620, %v1618
  %v2075 = vpack.c.b16 %v1621, %v1619
  %v2076 = vpack.c.b16 %v1624, %v1622
  %v2077 = vpack.c.b16 %v1625, %v1623
  %v2078 = vpack.c.b16 %v1628, %v1626
  %v2079 = vpack.c.b16 %v1629, %v1627
  %v2080 = vpack.c.b16 %v1632, %v1630
  %v2081 = vpack.c.b16 %v1633, %v1631
  %v2082 = vpack.c.b16 %v1636, %v1634
  %v2083 = vpack.c.b16 %v1637, %v1635
  %v2084 = vpack.c.b16 %v1640, %v1638
  %v2085 = vpack.c.b16 %v1641, %v1639
  %v2086 = vpack.c.b16 %v1644, %v1642
  %v2087 = vpack.c.b16 %v1645, %v1643
  %v2088 = vpack.c.b16 %v1648, %v1646
  %v2089 = vpack.c.b16 %v1649, %v1647
  %v2090 = vpack.c.b16 %v1652, %v1650
  %v2091 = vpack.c.b16 %v1653, %v1651
  %v2092 = vpack.c.b16 %v1656, %v1654
  %v2093 = vpack.c.b16 %v1657, %v1655
  %v2094 = vpack.c.b16 %v1660, %v1658
  %v2095 = vpack.c.b16 %v1661, %v1659
  %v2096 = vpack.c.b16 %v1664, %v1662
  %v2097 = vpack.c.b16 %v1665, %v1663
  %v2098 = vpack.c.b16 %v1668, %v1666
  %v2099 = vpack.c.b16 %v1669, %v1667
  %v2100 = vpack.c.b16 %v1672, %v1670
  %v2101 = vpack.c.b16 %v1673, %v1671
  %v2102 = vpack.c.b16 %v1676, %v1674
  %v2103 = vpack.c.b16 %v1677, %v1675
  %v2104 = vpack.c.b16 %v1680, %v1678
  %v2105 = vpack.c.b16 %v1681, %v1679
  %v2106 = vpack.c.b16 %v1684, %v1682
  %v2107 = vpack.c.b16 %v1685, %v1683
  %v2108 = vpack.c.b16 %v1688, %v1686
  %v2109 = vpack.c.b16 %v1689, %v1687
  %v2110 = vpack.c.b16 %v1692, %v1690
  %v2111 = vpack.c.b16 %v1693, %v1691
  %v2112 = vpack.c.b16 %v1696, %v1694
  %v2113 = vpack.c.b16 %v1697, %v1695
  %v2114 = vpack.c.b16 %v1700, %v1698
  %v2115 = vpack.c.b16 %v1701, %v1699
  %v2116 = vpack.c.b16 %v1704, %v1702
  %v2117 = vpack.c.b16 %v1705, %v1703
  %v2118 = vpack.c.b16 %v1708, %v1706
  %v2119 = vpack.c.b16 %v1709, %v1707
  %v2120 = vpack.c.b16 %v1712, %v1710
  %v2121 = vpack.c.b16 %v1713, %v1711
  %v2122 = vpack.c.b16 %v1716, %v1714
  %v2123 = vpack.c.b16 %v1717, %v1715
  %v2124 = vpack.c.b16 %v1720, %v1718
  %v2125 = vpack.c.b16 %v1721, %v1719
  %v2126 = vpack.c.b16 %v1724, %v1722
  %v2127 = vpack.c.b16 %v1725, %v1723
  %v2128 = vpack.c.b16 %v1728, %v1726
  %v2129 = vpack.c.b16 %v1729, %v1727
  %v2130 = vpack.c.b16 %v1732, %v1730
  %v2131 = vpack.c.b16 %v1733, %v1731
  %v2132 = vpack.c.b16 %v1736, %v1734
  %v2133 = vpack.c.b16 %v1737, %v1735
  %v2134 = vpack.c.b16 %v1740, %v1738
  %v2135 = vpack.c.b16 %v1741, %v1739
  %v2136 = vpack.c.b16 %v1744, %v1742
  %v2137 = vpack.c.b16 %v1745, %v1743
  %vm2530 = vcmask 523264
  %v2532 = vsel %vm2530, %v545, 0
  %2534 = vmatpush.bf16.msra.mxu0 %v1760
  %2535 = vmatpush.bf16.msra.mxu0 %v1758
  %2536 = vmatpush.bf16.msra.mxu0 %v1756
  %2537 = vmatpush.bf16.msra.mxu0 %v1754
  %2538 = vmatpush.bf16.msra.mxu0 %v1752
  %2539 = vmatpush.bf16.msra.mxu0 %v1750
  %2540 = vmatpush.bf16.msra.mxu0 %v1748
  %2541 = vmatpush.bf16.msra.mxu0 %v1746
  %2542 = vmatmul.bf16.gmra.mxu0 %v521
  %v2543 = vpop.f32.mrf.mxu0
  %v2544 = vadd.f32 %v441, %v2543
  %v2545 = vpop.f32.mrf.mxu0
  %v2546 = vadd.f32 %v441, %v2545
  %2547 = vdwg.mxu0
  %2548 = vmatpush.bf16.msra.mxu0 %v1776
  %2549 = vmatpush.bf16.msra.mxu0 %v1774
  %2550 = vmatpush.bf16.msra.mxu0 %v1772
  %2551 = vmatpush.bf16.msra.mxu0 %v1770
  %2552 = vmatpush.bf16.msra.mxu0 %v1768
  %2553 = vmatpush.bf16.msra.mxu0 %v1766
  %2554 = vmatpush.bf16.msra.mxu0 %v1764
  %2555 = vmatpush.bf16.msra.mxu0 %v1762
  %2556 = vmatmul.bf16.gmra.mxu0 %v522
  %v2557 = vpop.f32.mrf.mxu0
  %v2558 = vadd.f32 %v2544, %v2557
  %v2559 = vpop.f32.mrf.mxu0
  %v2560 = vadd.f32 %v2546, %v2559
  %2561 = vdwg.mxu0
  %2562 = vmatpush.bf16.msra.mxu0 %v1792
  %2563 = vmatpush.bf16.msra.mxu0 %v1790
  %2564 = vmatpush.bf16.msra.mxu0 %v1788
  %2565 = vmatpush.bf16.msra.mxu0 %v1786
  %2566 = vmatpush.bf16.msra.mxu0 %v1784
  %2567 = vmatpush.bf16.msra.mxu0 %v1782
  %2568 = vmatpush.bf16.msra.mxu0 %v1780
  %2569 = vmatpush.bf16.msra.mxu0 %v1778
  %2570 = vmatmul.bf16.gmra.mxu0 %v523
  %v2571 = vpop.f32.mrf.mxu0
  %v2572 = vadd.f32 %v2558, %v2571
  %v2573 = vpop.f32.mrf.mxu0
  %v2574 = vadd.f32 %v2560, %v2573
  %2575 = vdwg.mxu0
  %2576 = vmatpush.bf16.msra.mxu0 %v1808
  %2577 = vmatpush.bf16.msra.mxu0 %v1806
  %2578 = vmatpush.bf16.msra.mxu0 %v1804
  %2579 = vmatpush.bf16.msra.mxu0 %v1802
  %2580 = vmatpush.bf16.msra.mxu0 %v1800
  %2581 = vmatpush.bf16.msra.mxu0 %v1798
  %2582 = vmatpush.bf16.msra.mxu0 %v1796
  %2583 = vmatpush.bf16.msra.mxu0 %v1794
  %2584 = vmatmul.bf16.gmra.mxu0 %v524
  %v2585 = vpop.f32.mrf.mxu0
  %v2586 = vadd.f32 %v2572, %v2585
  %v2587 = vpop.f32.mrf.mxu0
  %v2588 = vadd.f32 %v2574, %v2587
  %2589 = vdwg.mxu0
  %2590 = vmatpush.bf16.msra.mxu0 %v1824
  %2591 = vmatpush.bf16.msra.mxu0 %v1822
  %2592 = vmatpush.bf16.msra.mxu0 %v1820
  %2593 = vmatpush.bf16.msra.mxu0 %v1818
  %2594 = vmatpush.bf16.msra.mxu0 %v1816
  %2595 = vmatpush.bf16.msra.mxu0 %v1814
  %2596 = vmatpush.bf16.msra.mxu0 %v1812
  %2597 = vmatpush.bf16.msra.mxu0 %v1810
  %2598 = vmatmul.bf16.gmra.mxu0 %v525
  %v2599 = vpop.f32.mrf.mxu0
  %v2600 = vadd.f32 %v2586, %v2599
  %v2601 = vpop.f32.mrf.mxu0
  %v2602 = vadd.f32 %v2588, %v2601
  %2603 = vdwg.mxu0
  %2604 = vmatpush.bf16.msra.mxu0 %v1840
  %2605 = vmatpush.bf16.msra.mxu0 %v1838
  %2606 = vmatpush.bf16.msra.mxu0 %v1836
  %2607 = vmatpush.bf16.msra.mxu0 %v1834
  %2608 = vmatpush.bf16.msra.mxu0 %v1832
  %2609 = vmatpush.bf16.msra.mxu0 %v1830
  %2610 = vmatpush.bf16.msra.mxu0 %v1828
  %2611 = vmatpush.bf16.msra.mxu0 %v1826
  %2612 = vmatmul.bf16.gmra.mxu0 %v526
  %v2613 = vpop.f32.mrf.mxu0
  %v2614 = vadd.f32 %v2600, %v2613
  %v2615 = vpop.f32.mrf.mxu0
  %v2616 = vadd.f32 %v2602, %v2615
  %2617 = vdwg.mxu0
  %2618 = vmatpush.bf16.msra.mxu0 %v1856
  %2619 = vmatpush.bf16.msra.mxu0 %v1854
  %2620 = vmatpush.bf16.msra.mxu0 %v1852
  %2621 = vmatpush.bf16.msra.mxu0 %v1850
  %2622 = vmatpush.bf16.msra.mxu0 %v1848
  %2623 = vmatpush.bf16.msra.mxu0 %v1846
  %2624 = vmatpush.bf16.msra.mxu0 %v1844
  %2625 = vmatpush.bf16.msra.mxu0 %v1842
  %2626 = vmatmul.bf16.gmra.mxu0 %v527
  %v2627 = vpop.f32.mrf.mxu0
  %v2628 = vadd.f32 %v2614, %v2627
  %v2629 = vpop.f32.mrf.mxu0
  %v2630 = vadd.f32 %v2616, %v2629
  %2631 = vdwg.mxu0
  %2632 = vmatpush.bf16.msra.mxu0 %v1872
  %2633 = vmatpush.bf16.msra.mxu0 %v1870
  %2634 = vmatpush.bf16.msra.mxu0 %v1868
  %2635 = vmatpush.bf16.msra.mxu0 %v1866
  %2636 = vmatpush.bf16.msra.mxu0 %v1864
  %2637 = vmatpush.bf16.msra.mxu0 %v1862
  %2638 = vmatpush.bf16.msra.mxu0 %v1860
  %2639 = vmatpush.bf16.msra.mxu0 %v1858
  %2640 = vmatmul.bf16.gmra.mxu0 %v528
  %v2641 = vpop.f32.mrf.mxu0
  %v2642 = vadd.f32 %v2628, %v2641
  %v2643 = vpop.f32.mrf.mxu0
  %v2644 = vadd.f32 %v2630, %v2643
  %2645 = vdwg.mxu0
  %2646 = vmatpush.bf16.msra.mxu0 %v1888
  %2647 = vmatpush.bf16.msra.mxu0 %v1886
  %2648 = vmatpush.bf16.msra.mxu0 %v1884
  %2649 = vmatpush.bf16.msra.mxu0 %v1882
  %2650 = vmatpush.bf16.msra.mxu0 %v1880
  %2651 = vmatpush.bf16.msra.mxu0 %v1878
  %2652 = vmatpush.bf16.msra.mxu0 %v1876
  %2653 = vmatpush.bf16.msra.mxu0 %v1874
  %2654 = vmatmul.bf16.gmra.mxu0 %v529
  %v2655 = vpop.f32.mrf.mxu0
  %v2656 = vadd.f32 %v2642, %v2655
  %v2657 = vpop.f32.mrf.mxu0
  %v2658 = vadd.f32 %v2644, %v2657
  %2659 = vdwg.mxu0
  %2660 = vmatpush.bf16.msra.mxu0 %v1904
  %2661 = vmatpush.bf16.msra.mxu0 %v1902
  %2662 = vmatpush.bf16.msra.mxu0 %v1900
  %2663 = vmatpush.bf16.msra.mxu0 %v1898
  %2664 = vmatpush.bf16.msra.mxu0 %v1896
  %2665 = vmatpush.bf16.msra.mxu0 %v1894
  %2666 = vmatpush.bf16.msra.mxu0 %v1892
  %2667 = vmatpush.bf16.msra.mxu0 %v1890
  %2668 = vmatmul.bf16.gmra.mxu0 %v530
  %v2669 = vpop.f32.mrf.mxu0
  %v2670 = vadd.f32 %v2656, %v2669
  %v2671 = vpop.f32.mrf.mxu0
  %v2672 = vadd.f32 %v2658, %v2671
  %2673 = vdwg.mxu0
  %2674 = vmatpush.bf16.msra.mxu0 %v1920
  %2675 = vmatpush.bf16.msra.mxu0 %v1918
  %2676 = vmatpush.bf16.msra.mxu0 %v1916
  %2677 = vmatpush.bf16.msra.mxu0 %v1914
  %2678 = vmatpush.bf16.msra.mxu0 %v1912
  %2679 = vmatpush.bf16.msra.mxu0 %v1910
  %2680 = vmatpush.bf16.msra.mxu0 %v1908
  %2681 = vmatpush.bf16.msra.mxu0 %v1906
  %2682 = vmatmul.bf16.gmra.mxu0 %v531
  %v2683 = vpop.f32.mrf.mxu0
  %v2684 = vadd.f32 %v2670, %v2683
  %v2685 = vpop.f32.mrf.mxu0
  %v2686 = vadd.f32 %v2672, %v2685
  %2687 = vdwg.mxu0
  %2688 = vmatpush.bf16.msra.mxu0 %v1936
  %2689 = vmatpush.bf16.msra.mxu0 %v1934
  %2690 = vmatpush.bf16.msra.mxu0 %v1932
  %2691 = vmatpush.bf16.msra.mxu0 %v1930
  %2692 = vmatpush.bf16.msra.mxu0 %v1928
  %2693 = vmatpush.bf16.msra.mxu0 %v1926
  %2694 = vmatpush.bf16.msra.mxu0 %v1924
  %2695 = vmatpush.bf16.msra.mxu0 %v1922
  %2696 = vmatmul.bf16.gmra.mxu0 %v532
  %v2697 = vpop.f32.mrf.mxu0
  %v2698 = vadd.f32 %v2684, %v2697
  %v2699 = vpop.f32.mrf.mxu0
  %v2700 = vadd.f32 %v2686, %v2699
  %2701 = vdwg.mxu0
  %2702 = vmatpush.bf16.msra.mxu0 %v1952
  %2703 = vmatpush.bf16.msra.mxu0 %v1950
  %2704 = vmatpush.bf16.msra.mxu0 %v1948
  %2705 = vmatpush.bf16.msra.mxu0 %v1946
  %2706 = vmatpush.bf16.msra.mxu0 %v1944
  %2707 = vmatpush.bf16.msra.mxu0 %v1942
  %2708 = vmatpush.bf16.msra.mxu0 %v1940
  %2709 = vmatpush.bf16.msra.mxu0 %v1938
  %2710 = vmatmul.bf16.gmra.mxu0 %v533
  %v2711 = vpop.f32.mrf.mxu0
  %v2712 = vadd.f32 %v2698, %v2711
  %v2713 = vpop.f32.mrf.mxu0
  %v2714 = vadd.f32 %v2700, %v2713
  %2715 = vdwg.mxu0
  %2716 = vmatpush.bf16.msra.mxu0 %v1968
  %2717 = vmatpush.bf16.msra.mxu0 %v1966
  %2718 = vmatpush.bf16.msra.mxu0 %v1964
  %2719 = vmatpush.bf16.msra.mxu0 %v1962
  %2720 = vmatpush.bf16.msra.mxu0 %v1960
  %2721 = vmatpush.bf16.msra.mxu0 %v1958
  %2722 = vmatpush.bf16.msra.mxu0 %v1956
  %2723 = vmatpush.bf16.msra.mxu0 %v1954
  %2724 = vmatmul.bf16.gmra.mxu0 %v534
  %v2725 = vpop.f32.mrf.mxu0
  %v2726 = vadd.f32 %v2712, %v2725
  %v2727 = vpop.f32.mrf.mxu0
  %v2728 = vadd.f32 %v2714, %v2727
  %2729 = vdwg.mxu0
  %2730 = vmatpush.bf16.msra.mxu0 %v1984
  %2731 = vmatpush.bf16.msra.mxu0 %v1982
  %2732 = vmatpush.bf16.msra.mxu0 %v1980
  %2733 = vmatpush.bf16.msra.mxu0 %v1978
  %2734 = vmatpush.bf16.msra.mxu0 %v1976
  %2735 = vmatpush.bf16.msra.mxu0 %v1974
  %2736 = vmatpush.bf16.msra.mxu0 %v1972
  %2737 = vmatpush.bf16.msra.mxu0 %v1970
  %2738 = vmatmul.bf16.gmra.mxu0 %v535
  %v2739 = vpop.f32.mrf.mxu0
  %v2740 = vadd.f32 %v2726, %v2739
  %v2741 = vpop.f32.mrf.mxu0
  %v2742 = vadd.f32 %v2728, %v2741
  %2743 = vdwg.mxu0
  %2744 = vmatpush.bf16.msra.mxu0 %v2000
  %2745 = vmatpush.bf16.msra.mxu0 %v1998
  %2746 = vmatpush.bf16.msra.mxu0 %v1996
  %2747 = vmatpush.bf16.msra.mxu0 %v1994
  %2748 = vmatpush.bf16.msra.mxu0 %v1992
  %2749 = vmatpush.bf16.msra.mxu0 %v1990
  %2750 = vmatpush.bf16.msra.mxu0 %v1988
  %2751 = vmatpush.bf16.msra.mxu0 %v1986
  %2752 = vmatmul.bf16.gmra.mxu0 %v536
  %v2753 = vpop.f32.mrf.mxu0
  %v2754 = vadd.f32 %v2740, %v2753
  %v2755 = vpop.f32.mrf.mxu0
  %v2756 = vadd.f32 %v2742, %v2755
  %2757 = vdwg.mxu0
  %2758 = vmatpush.bf16.msra.mxu0 %v2016
  %2759 = vmatpush.bf16.msra.mxu0 %v2014
  %2760 = vmatpush.bf16.msra.mxu0 %v2012
  %2761 = vmatpush.bf16.msra.mxu0 %v2010
  %2762 = vmatpush.bf16.msra.mxu0 %v2008
  %2763 = vmatpush.bf16.msra.mxu0 %v2006
  %2764 = vmatpush.bf16.msra.mxu0 %v2004
  %2765 = vmatpush.bf16.msra.mxu0 %v2002
  %2766 = vmatmul.bf16.gmra.mxu0 %v537
  %v2767 = vpop.f32.mrf.mxu0
  %v2768 = vadd.f32 %v2754, %v2767
  %v2769 = vpop.f32.mrf.mxu0
  %v2770 = vadd.f32 %v2756, %v2769
  %2771 = vdwg.mxu0
  %2772 = vmatpush.bf16.msra.mxu0 %v2032
  %2773 = vmatpush.bf16.msra.mxu0 %v2030
  %2774 = vmatpush.bf16.msra.mxu0 %v2028
  %2775 = vmatpush.bf16.msra.mxu0 %v2026
  %2776 = vmatpush.bf16.msra.mxu0 %v2024
  %2777 = vmatpush.bf16.msra.mxu0 %v2022
  %2778 = vmatpush.bf16.msra.mxu0 %v2020
  %2779 = vmatpush.bf16.msra.mxu0 %v2018
  %2780 = vmatmul.bf16.gmra.mxu0 %v538
  %v2781 = vpop.f32.mrf.mxu0
  %v2782 = vadd.f32 %v2768, %v2781
  %v2783 = vpop.f32.mrf.mxu0
  %v2784 = vadd.f32 %v2770, %v2783
  %2785 = vdwg.mxu0
  %2786 = vmatpush.bf16.msra.mxu0 %v2048
  %2787 = vmatpush.bf16.msra.mxu0 %v2046
  %2788 = vmatpush.bf16.msra.mxu0 %v2044
  %2789 = vmatpush.bf16.msra.mxu0 %v2042
  %2790 = vmatpush.bf16.msra.mxu0 %v2040
  %2791 = vmatpush.bf16.msra.mxu0 %v2038
  %2792 = vmatpush.bf16.msra.mxu0 %v2036
  %2793 = vmatpush.bf16.msra.mxu0 %v2034
  %2794 = vmatmul.bf16.gmra.mxu0 %v539
  %v2795 = vpop.f32.mrf.mxu0
  %v2796 = vadd.f32 %v2782, %v2795
  %v2797 = vpop.f32.mrf.mxu0
  %v2798 = vadd.f32 %v2784, %v2797
  %2799 = vdwg.mxu0
  %2800 = vmatpush.bf16.msra.mxu0 %v2064
  %2801 = vmatpush.bf16.msra.mxu0 %v2062
  %2802 = vmatpush.bf16.msra.mxu0 %v2060
  %2803 = vmatpush.bf16.msra.mxu0 %v2058
  %2804 = vmatpush.bf16.msra.mxu0 %v2056
  %2805 = vmatpush.bf16.msra.mxu0 %v2054
  %2806 = vmatpush.bf16.msra.mxu0 %v2052
  %2807 = vmatpush.bf16.msra.mxu0 %v2050
  %2808 = vmatmul.bf16.gmra.mxu0 %v540
  %v2809 = vpop.f32.mrf.mxu0
  %v2810 = vadd.f32 %v2796, %v2809
  %v2811 = vpop.f32.mrf.mxu0
  %v2812 = vadd.f32 %v2798, %v2811
  %2813 = vdwg.mxu0
  %2814 = vmatpush.bf16.msra.mxu0 %v2080
  %2815 = vmatpush.bf16.msra.mxu0 %v2078
  %2816 = vmatpush.bf16.msra.mxu0 %v2076
  %2817 = vmatpush.bf16.msra.mxu0 %v2074
  %2818 = vmatpush.bf16.msra.mxu0 %v2072
  %2819 = vmatpush.bf16.msra.mxu0 %v2070
  %2820 = vmatpush.bf16.msra.mxu0 %v2068
  %2821 = vmatpush.bf16.msra.mxu0 %v2066
  %2822 = vmatmul.bf16.gmra.mxu0 %v541
  %v2823 = vpop.f32.mrf.mxu0
  %v2824 = vadd.f32 %v2810, %v2823
  %v2825 = vpop.f32.mrf.mxu0
  %v2826 = vadd.f32 %v2812, %v2825
  %2827 = vdwg.mxu0
  %2828 = vmatpush.bf16.msra.mxu0 %v2096
  %2829 = vmatpush.bf16.msra.mxu0 %v2094
  %2830 = vmatpush.bf16.msra.mxu0 %v2092
  %2831 = vmatpush.bf16.msra.mxu0 %v2090
  %2832 = vmatpush.bf16.msra.mxu0 %v2088
  %2833 = vmatpush.bf16.msra.mxu0 %v2086
  %2834 = vmatpush.bf16.msra.mxu0 %v2084
  %2835 = vmatpush.bf16.msra.mxu0 %v2082
  %2836 = vmatmul.bf16.gmra.mxu0 %v542
  %v2837 = vpop.f32.mrf.mxu0
  %v2838 = vadd.f32 %v2824, %v2837
  %v2839 = vpop.f32.mrf.mxu0
  %v2840 = vadd.f32 %v2826, %v2839
  %2841 = vdwg.mxu0
  %2842 = vmatpush.bf16.msra.mxu0 %v2112
  %2843 = vmatpush.bf16.msra.mxu0 %v2110
  %2844 = vmatpush.bf16.msra.mxu0 %v2108
  %2845 = vmatpush.bf16.msra.mxu0 %v2106
  %2846 = vmatpush.bf16.msra.mxu0 %v2104
  %2847 = vmatpush.bf16.msra.mxu0 %v2102
  %2848 = vmatpush.bf16.msra.mxu0 %v2100
  %2849 = vmatpush.bf16.msra.mxu0 %v2098
  %2850 = vmatmul.bf16.gmra.mxu0 %v543
  %v2851 = vpop.f32.mrf.mxu0
  %v2852 = vadd.f32 %v2838, %v2851
  %v2853 = vpop.f32.mrf.mxu0
  %v2854 = vadd.f32 %v2840, %v2853
  %2855 = vdwg.mxu0
  %2856 = vmatpush.bf16.msra.mxu0 %v2128
  %2857 = vmatpush.bf16.msra.mxu0 %v2126
  %2858 = vmatpush.bf16.msra.mxu0 %v2124
  %2859 = vmatpush.bf16.msra.mxu0 %v2122
  %2860 = vmatpush.bf16.msra.mxu0 %v2120
  %2861 = vmatpush.bf16.msra.mxu0 %v2118
  %2862 = vmatpush.bf16.msra.mxu0 %v2116
  %2863 = vmatpush.bf16.msra.mxu0 %v2114
  %2864 = vmatmul.bf16.gmra.mxu0 %v544
  %v2865 = vpop.f32.mrf.mxu0
  %v2866 = vadd.f32 %v2852, %v2865
  %v2867 = vpop.f32.mrf.mxu0
  %v2868 = vadd.f32 %v2854, %v2867
  %2869 = vdwg.mxu0
  %2870 = vmatpush.bf16.msra.mxu0 0
  %2871 = vmatpush.bf16.msra.mxu0 0
  %2872 = vmatpush.bf16.msra.mxu0 0
  %2873 = vmatpush.bf16.msra.mxu0 0
  %2874 = vmatpush.bf16.msra.mxu0 %v2136
  %2875 = vmatpush.bf16.msra.mxu0 %v2134
  %2876 = vmatpush.bf16.msra.mxu0 %v2132
  %2877 = vmatpush.bf16.msra.mxu0 %v2130
  %2878 = vmatmul.bf16.gmra.mxu0 %v2532
  %v2879 = vpop.f32.mrf.mxu0
  %v2880 = vadd.f32 %v2866, %v2879
  %v2881 = vpop.f32.mrf.mxu0
  %v2882 = vadd.f32 %v2868, %v2881
  %2883 = vdwg.mxu0
  %2884 = vmatpush.bf16.msra.mxu0 %v1761
  %2885 = vmatpush.bf16.msra.mxu0 %v1759
  %2886 = vmatpush.bf16.msra.mxu0 %v1757
  %2887 = vmatpush.bf16.msra.mxu0 %v1755
  %2888 = vmatpush.bf16.msra.mxu0 %v1753
  %2889 = vmatpush.bf16.msra.mxu0 %v1751
  %2890 = vmatpush.bf16.msra.mxu0 %v1749
  %2891 = vmatpush.bf16.msra.mxu0 %v1747
  %2892 = vmatmul.bf16.gmra.mxu0 %v521
  %v2893 = vpop.f32.mrf.mxu0
  %v2894 = vadd.f32 %v442, %v2893
  %v2895 = vpop.f32.mrf.mxu0
  %v2896 = vadd.f32 %v442, %v2895
  %2897 = vdwg.mxu0
  %2898 = vmatpush.bf16.msra.mxu0 %v1777
  %2899 = vmatpush.bf16.msra.mxu0 %v1775
  %2900 = vmatpush.bf16.msra.mxu0 %v1773
  %2901 = vmatpush.bf16.msra.mxu0 %v1771
  %2902 = vmatpush.bf16.msra.mxu0 %v1769
  %2903 = vmatpush.bf16.msra.mxu0 %v1767
  %2904 = vmatpush.bf16.msra.mxu0 %v1765
  %2905 = vmatpush.bf16.msra.mxu0 %v1763
  %2906 = vmatmul.bf16.gmra.mxu0 %v522
  %v2907 = vpop.f32.mrf.mxu0
  %v2908 = vadd.f32 %v2894, %v2907
  %v2909 = vpop.f32.mrf.mxu0
  %v2910 = vadd.f32 %v2896, %v2909
  %2911 = vdwg.mxu0
  %2912 = vmatpush.bf16.msra.mxu0 %v1793
  %2913 = vmatpush.bf16.msra.mxu0 %v1791
  %2914 = vmatpush.bf16.msra.mxu0 %v1789
  %2915 = vmatpush.bf16.msra.mxu0 %v1787
  %2916 = vmatpush.bf16.msra.mxu0 %v1785
  %2917 = vmatpush.bf16.msra.mxu0 %v1783
  %2918 = vmatpush.bf16.msra.mxu0 %v1781
  %2919 = vmatpush.bf16.msra.mxu0 %v1779
  %2920 = vmatmul.bf16.gmra.mxu0 %v523
  %v2921 = vpop.f32.mrf.mxu0
  %v2922 = vadd.f32 %v2908, %v2921
  %v2923 = vpop.f32.mrf.mxu0
  %v2924 = vadd.f32 %v2910, %v2923
  %2925 = vdwg.mxu0
  %2926 = vmatpush.bf16.msra.mxu0 %v1809
  %2927 = vmatpush.bf16.msra.mxu0 %v1807
  %2928 = vmatpush.bf16.msra.mxu0 %v1805
  %2929 = vmatpush.bf16.msra.mxu0 %v1803
  %2930 = vmatpush.bf16.msra.mxu0 %v1801
  %2931 = vmatpush.bf16.msra.mxu0 %v1799
  %2932 = vmatpush.bf16.msra.mxu0 %v1797
  %2933 = vmatpush.bf16.msra.mxu0 %v1795
  %2934 = vmatmul.bf16.gmra.mxu0 %v524
  %v2935 = vpop.f32.mrf.mxu0
  %v2936 = vadd.f32 %v2922, %v2935
  %v2937 = vpop.f32.mrf.mxu0
  %v2938 = vadd.f32 %v2924, %v2937
  %2939 = vdwg.mxu0
  %2940 = vmatpush.bf16.msra.mxu0 %v1825
  %2941 = vmatpush.bf16.msra.mxu0 %v1823
  %2942 = vmatpush.bf16.msra.mxu0 %v1821
  %2943 = vmatpush.bf16.msra.mxu0 %v1819
  %2944 = vmatpush.bf16.msra.mxu0 %v1817
  %2945 = vmatpush.bf16.msra.mxu0 %v1815
  %2946 = vmatpush.bf16.msra.mxu0 %v1813
  %2947 = vmatpush.bf16.msra.mxu0 %v1811
  %2948 = vmatmul.bf16.gmra.mxu0 %v525
  %v2949 = vpop.f32.mrf.mxu0
  %v2950 = vadd.f32 %v2936, %v2949
  %v2951 = vpop.f32.mrf.mxu0
  %v2952 = vadd.f32 %v2938, %v2951
  %2953 = vdwg.mxu0
  %2954 = vmatpush.bf16.msra.mxu0 %v1841
  %2955 = vmatpush.bf16.msra.mxu0 %v1839
  %2956 = vmatpush.bf16.msra.mxu0 %v1837
  %2957 = vmatpush.bf16.msra.mxu0 %v1835
  %2958 = vmatpush.bf16.msra.mxu0 %v1833
  %2959 = vmatpush.bf16.msra.mxu0 %v1831
  %2960 = vmatpush.bf16.msra.mxu0 %v1829
  %2961 = vmatpush.bf16.msra.mxu0 %v1827
  %2962 = vmatmul.bf16.gmra.mxu0 %v526
  %v2963 = vpop.f32.mrf.mxu0
  %v2964 = vadd.f32 %v2950, %v2963
  %v2965 = vpop.f32.mrf.mxu0
  %v2966 = vadd.f32 %v2952, %v2965
  %2967 = vdwg.mxu0
  %2968 = vmatpush.bf16.msra.mxu0 %v1857
  %2969 = vmatpush.bf16.msra.mxu0 %v1855
  %2970 = vmatpush.bf16.msra.mxu0 %v1853
  %2971 = vmatpush.bf16.msra.mxu0 %v1851
  %2972 = vmatpush.bf16.msra.mxu0 %v1849
  %2973 = vmatpush.bf16.msra.mxu0 %v1847
  %2974 = vmatpush.bf16.msra.mxu0 %v1845
  %2975 = vmatpush.bf16.msra.mxu0 %v1843
  %2976 = vmatmul.bf16.gmra.mxu0 %v527
  %v2977 = vpop.f32.mrf.mxu0
  %v2978 = vadd.f32 %v2964, %v2977
  %v2979 = vpop.f32.mrf.mxu0
  %v2980 = vadd.f32 %v2966, %v2979
  %2981 = vdwg.mxu0
  %2982 = vmatpush.bf16.msra.mxu0 %v1873
  %2983 = vmatpush.bf16.msra.mxu0 %v1871
  %2984 = vmatpush.bf16.msra.mxu0 %v1869
  %2985 = vmatpush.bf16.msra.mxu0 %v1867
  %2986 = vmatpush.bf16.msra.mxu0 %v1865
  %2987 = vmatpush.bf16.msra.mxu0 %v1863
  %2988 = vmatpush.bf16.msra.mxu0 %v1861
  %2989 = vmatpush.bf16.msra.mxu0 %v1859
  %2990 = vmatmul.bf16.gmra.mxu0 %v528
  %v2991 = vpop.f32.mrf.mxu0
  %v2992 = vadd.f32 %v2978, %v2991
  %v2993 = vpop.f32.mrf.mxu0
  %v2994 = vadd.f32 %v2980, %v2993
  %2995 = vdwg.mxu0
  %2996 = vmatpush.bf16.msra.mxu0 %v1889
  %2997 = vmatpush.bf16.msra.mxu0 %v1887
  %2998 = vmatpush.bf16.msra.mxu0 %v1885
  %2999 = vmatpush.bf16.msra.mxu0 %v1883
  %3000 = vmatpush.bf16.msra.mxu0 %v1881
  %3001 = vmatpush.bf16.msra.mxu0 %v1879
  %3002 = vmatpush.bf16.msra.mxu0 %v1877
  %3003 = vmatpush.bf16.msra.mxu0 %v1875
  %3004 = vmatmul.bf16.gmra.mxu0 %v529
  %v3005 = vpop.f32.mrf.mxu0
  %v3006 = vadd.f32 %v2992, %v3005
  %v3007 = vpop.f32.mrf.mxu0
  %v3008 = vadd.f32 %v2994, %v3007
  %3009 = vdwg.mxu0
  %3010 = vmatpush.bf16.msra.mxu0 %v1905
  %3011 = vmatpush.bf16.msra.mxu0 %v1903
  %3012 = vmatpush.bf16.msra.mxu0 %v1901
  %3013 = vmatpush.bf16.msra.mxu0 %v1899
  %3014 = vmatpush.bf16.msra.mxu0 %v1897
  %3015 = vmatpush.bf16.msra.mxu0 %v1895
  %3016 = vmatpush.bf16.msra.mxu0 %v1893
  %3017 = vmatpush.bf16.msra.mxu0 %v1891
  %3018 = vmatmul.bf16.gmra.mxu0 %v530
  %v3019 = vpop.f32.mrf.mxu0
  %v3020 = vadd.f32 %v3006, %v3019
  %v3021 = vpop.f32.mrf.mxu0
  %v3022 = vadd.f32 %v3008, %v3021
  %3023 = vdwg.mxu0
  %3024 = vmatpush.bf16.msra.mxu0 %v1921
  %3025 = vmatpush.bf16.msra.mxu0 %v1919
  %3026 = vmatpush.bf16.msra.mxu0 %v1917
  %3027 = vmatpush.bf16.msra.mxu0 %v1915
  %3028 = vmatpush.bf16.msra.mxu0 %v1913
  %3029 = vmatpush.bf16.msra.mxu0 %v1911
  %3030 = vmatpush.bf16.msra.mxu0 %v1909
  %3031 = vmatpush.bf16.msra.mxu0 %v1907
  %3032 = vmatmul.bf16.gmra.mxu0 %v531
  %v3033 = vpop.f32.mrf.mxu0
  %v3034 = vadd.f32 %v3020, %v3033
  %v3035 = vpop.f32.mrf.mxu0
  %v3036 = vadd.f32 %v3022, %v3035
  %3037 = vdwg.mxu0
  %3038 = vmatpush.bf16.msra.mxu0 %v1937
  %3039 = vmatpush.bf16.msra.mxu0 %v1935
  %3040 = vmatpush.bf16.msra.mxu0 %v1933
  %3041 = vmatpush.bf16.msra.mxu0 %v1931
  %3042 = vmatpush.bf16.msra.mxu0 %v1929
  %3043 = vmatpush.bf16.msra.mxu0 %v1927
  %3044 = vmatpush.bf16.msra.mxu0 %v1925
  %3045 = vmatpush.bf16.msra.mxu0 %v1923
  %3046 = vmatmul.bf16.gmra.mxu0 %v532
  %v3047 = vpop.f32.mrf.mxu0
  %v3048 = vadd.f32 %v3034, %v3047
  %v3049 = vpop.f32.mrf.mxu0
  %v3050 = vadd.f32 %v3036, %v3049
  %3051 = vdwg.mxu0
  %3052 = vmatpush.bf16.msra.mxu0 %v1953
  %3053 = vmatpush.bf16.msra.mxu0 %v1951
  %3054 = vmatpush.bf16.msra.mxu0 %v1949
  %3055 = vmatpush.bf16.msra.mxu0 %v1947
  %3056 = vmatpush.bf16.msra.mxu0 %v1945
  %3057 = vmatpush.bf16.msra.mxu0 %v1943
  %3058 = vmatpush.bf16.msra.mxu0 %v1941
  %3059 = vmatpush.bf16.msra.mxu0 %v1939
  %3060 = vmatmul.bf16.gmra.mxu0 %v533
  %v3061 = vpop.f32.mrf.mxu0
  %v3062 = vadd.f32 %v3048, %v3061
  %v3063 = vpop.f32.mrf.mxu0
  %v3064 = vadd.f32 %v3050, %v3063
  %3065 = vdwg.mxu0
  %3066 = vmatpush.bf16.msra.mxu0 %v1969
  %3067 = vmatpush.bf16.msra.mxu0 %v1967
  %3068 = vmatpush.bf16.msra.mxu0 %v1965
  %3069 = vmatpush.bf16.msra.mxu0 %v1963
  %3070 = vmatpush.bf16.msra.mxu0 %v1961
  %3071 = vmatpush.bf16.msra.mxu0 %v1959
  %3072 = vmatpush.bf16.msra.mxu0 %v1957
  %3073 = vmatpush.bf16.msra.mxu0 %v1955
  %3074 = vmatmul.bf16.gmra.mxu0 %v534
  %v3075 = vpop.f32.mrf.mxu0
  %v3076 = vadd.f32 %v3062, %v3075
  %v3077 = vpop.f32.mrf.mxu0
  %v3078 = vadd.f32 %v3064, %v3077
  %3079 = vdwg.mxu0
  %3080 = vmatpush.bf16.msra.mxu0 %v1985
  %3081 = vmatpush.bf16.msra.mxu0 %v1983
  %3082 = vmatpush.bf16.msra.mxu0 %v1981
  %3083 = vmatpush.bf16.msra.mxu0 %v1979
  %3084 = vmatpush.bf16.msra.mxu0 %v1977
  %3085 = vmatpush.bf16.msra.mxu0 %v1975
  %3086 = vmatpush.bf16.msra.mxu0 %v1973
  %3087 = vmatpush.bf16.msra.mxu0 %v1971
  %3088 = vmatmul.bf16.gmra.mxu0 %v535
  %v3089 = vpop.f32.mrf.mxu0
  %v3090 = vadd.f32 %v3076, %v3089
  %v3091 = vpop.f32.mrf.mxu0
  %v3092 = vadd.f32 %v3078, %v3091
  %3093 = vdwg.mxu0
  %3094 = vmatpush.bf16.msra.mxu0 %v2001
  %3095 = vmatpush.bf16.msra.mxu0 %v1999
  %3096 = vmatpush.bf16.msra.mxu0 %v1997
  %3097 = vmatpush.bf16.msra.mxu0 %v1995
  %3098 = vmatpush.bf16.msra.mxu0 %v1993
  %3099 = vmatpush.bf16.msra.mxu0 %v1991
  %3100 = vmatpush.bf16.msra.mxu0 %v1989
  %3101 = vmatpush.bf16.msra.mxu0 %v1987
  %3102 = vmatmul.bf16.gmra.mxu0 %v536
  %v3103 = vpop.f32.mrf.mxu0
  %v3104 = vadd.f32 %v3090, %v3103
  %v3105 = vpop.f32.mrf.mxu0
  %v3106 = vadd.f32 %v3092, %v3105
  %3107 = vdwg.mxu0
  %3108 = vmatpush.bf16.msra.mxu0 %v2017
  %3109 = vmatpush.bf16.msra.mxu0 %v2015
  %3110 = vmatpush.bf16.msra.mxu0 %v2013
  %3111 = vmatpush.bf16.msra.mxu0 %v2011
  %3112 = vmatpush.bf16.msra.mxu0 %v2009
  %3113 = vmatpush.bf16.msra.mxu0 %v2007
  %3114 = vmatpush.bf16.msra.mxu0 %v2005
  %3115 = vmatpush.bf16.msra.mxu0 %v2003
  %3116 = vmatmul.bf16.gmra.mxu0 %v537
  %v3117 = vpop.f32.mrf.mxu0
  %v3118 = vadd.f32 %v3104, %v3117
  %v3119 = vpop.f32.mrf.mxu0
  %v3120 = vadd.f32 %v3106, %v3119
  %3121 = vdwg.mxu0
  %3122 = vmatpush.bf16.msra.mxu0 %v2033
  %3123 = vmatpush.bf16.msra.mxu0 %v2031
  %3124 = vmatpush.bf16.msra.mxu0 %v2029
  %3125 = vmatpush.bf16.msra.mxu0 %v2027
  %3126 = vmatpush.bf16.msra.mxu0 %v2025
  %3127 = vmatpush.bf16.msra.mxu0 %v2023
  %3128 = vmatpush.bf16.msra.mxu0 %v2021
  %3129 = vmatpush.bf16.msra.mxu0 %v2019
  %3130 = vmatmul.bf16.gmra.mxu0 %v538
  %v3131 = vpop.f32.mrf.mxu0
  %v3132 = vadd.f32 %v3118, %v3131
  %v3133 = vpop.f32.mrf.mxu0
  %v3134 = vadd.f32 %v3120, %v3133
  %3135 = vdwg.mxu0
  %3136 = vmatpush.bf16.msra.mxu0 %v2049
  %3137 = vmatpush.bf16.msra.mxu0 %v2047
  %3138 = vmatpush.bf16.msra.mxu0 %v2045
  %3139 = vmatpush.bf16.msra.mxu0 %v2043
  %3140 = vmatpush.bf16.msra.mxu0 %v2041
  %3141 = vmatpush.bf16.msra.mxu0 %v2039
  %3142 = vmatpush.bf16.msra.mxu0 %v2037
  %3143 = vmatpush.bf16.msra.mxu0 %v2035
  %3144 = vmatmul.bf16.gmra.mxu0 %v539
  %v3145 = vpop.f32.mrf.mxu0
  %v3146 = vadd.f32 %v3132, %v3145
  %v3147 = vpop.f32.mrf.mxu0
  %v3148 = vadd.f32 %v3134, %v3147
  %3149 = vdwg.mxu0
  %3150 = vmatpush.bf16.msra.mxu0 %v2065
  %3151 = vmatpush.bf16.msra.mxu0 %v2063
  %3152 = vmatpush.bf16.msra.mxu0 %v2061
  %3153 = vmatpush.bf16.msra.mxu0 %v2059
  %3154 = vmatpush.bf16.msra.mxu0 %v2057
  %3155 = vmatpush.bf16.msra.mxu0 %v2055
  %3156 = vmatpush.bf16.msra.mxu0 %v2053
  %3157 = vmatpush.bf16.msra.mxu0 %v2051
  %3158 = vmatmul.bf16.gmra.mxu0 %v540
  %v3159 = vpop.f32.mrf.mxu0
  %v3160 = vadd.f32 %v3146, %v3159
  %v3161 = vpop.f32.mrf.mxu0
  %v3162 = vadd.f32 %v3148, %v3161
  %3163 = vdwg.mxu0
  %3164 = vmatpush.bf16.msra.mxu0 %v2081
  %3165 = vmatpush.bf16.msra.mxu0 %v2079
  %3166 = vmatpush.bf16.msra.mxu0 %v2077
  %3167 = vmatpush.bf16.msra.mxu0 %v2075
  %3168 = vmatpush.bf16.msra.mxu0 %v2073
  %3169 = vmatpush.bf16.msra.mxu0 %v2071
  %3170 = vmatpush.bf16.msra.mxu0 %v2069
  %3171 = vmatpush.bf16.msra.mxu0 %v2067
  %3172 = vmatmul.bf16.gmra.mxu0 %v541
  %v3173 = vpop.f32.mrf.mxu0
  %v3174 = vadd.f32 %v3160, %v3173
  %v3175 = vpop.f32.mrf.mxu0
  %v3176 = vadd.f32 %v3162, %v3175
  %3177 = vdwg.mxu0
  %3178 = vmatpush.bf16.msra.mxu0 %v2097
  %3179 = vmatpush.bf16.msra.mxu0 %v2095
  %3180 = vmatpush.bf16.msra.mxu0 %v2093
  %3181 = vmatpush.bf16.msra.mxu0 %v2091
  %3182 = vmatpush.bf16.msra.mxu0 %v2089
  %3183 = vmatpush.bf16.msra.mxu0 %v2087
  %3184 = vmatpush.bf16.msra.mxu0 %v2085
  %3185 = vmatpush.bf16.msra.mxu0 %v2083
  %3186 = vmatmul.bf16.gmra.mxu0 %v542
  %v3187 = vpop.f32.mrf.mxu0
  %v3188 = vadd.f32 %v3174, %v3187
  %v3189 = vpop.f32.mrf.mxu0
  %v3190 = vadd.f32 %v3176, %v3189
  %3191 = vdwg.mxu0
  %3192 = vmatpush.bf16.msra.mxu0 %v2113
  %3193 = vmatpush.bf16.msra.mxu0 %v2111
  %3194 = vmatpush.bf16.msra.mxu0 %v2109
  %3195 = vmatpush.bf16.msra.mxu0 %v2107
  %3196 = vmatpush.bf16.msra.mxu0 %v2105
  %3197 = vmatpush.bf16.msra.mxu0 %v2103
  %3198 = vmatpush.bf16.msra.mxu0 %v2101
  %3199 = vmatpush.bf16.msra.mxu0 %v2099
  %3200 = vmatmul.bf16.gmra.mxu0 %v543
  %v3201 = vpop.f32.mrf.mxu0
  %v3202 = vadd.f32 %v3188, %v3201
  %v3203 = vpop.f32.mrf.mxu0
  %v3204 = vadd.f32 %v3190, %v3203
  %3205 = vdwg.mxu0
  %3206 = vmatpush.bf16.msra.mxu0 %v2129
  %3207 = vmatpush.bf16.msra.mxu0 %v2127
  %3208 = vmatpush.bf16.msra.mxu0 %v2125
  %3209 = vmatpush.bf16.msra.mxu0 %v2123
  %3210 = vmatpush.bf16.msra.mxu0 %v2121
  %3211 = vmatpush.bf16.msra.mxu0 %v2119
  %3212 = vmatpush.bf16.msra.mxu0 %v2117
  %3213 = vmatpush.bf16.msra.mxu0 %v2115
  %3214 = vmatmul.bf16.gmra.mxu0 %v544
  %v3215 = vpop.f32.mrf.mxu0
  %v3216 = vadd.f32 %v3202, %v3215
  %v3217 = vpop.f32.mrf.mxu0
  %v3218 = vadd.f32 %v3204, %v3217
  %3219 = vdwg.mxu0
  %3220 = vmatpush.bf16.msra.mxu0 0
  %3221 = vmatpush.bf16.msra.mxu0 0
  %3222 = vmatpush.bf16.msra.mxu0 0
  %3223 = vmatpush.bf16.msra.mxu0 0
  %3224 = vmatpush.bf16.msra.mxu0 %v2137
  %3225 = vmatpush.bf16.msra.mxu0 %v2135
  %3226 = vmatpush.bf16.msra.mxu0 %v2133
  %3227 = vmatpush.bf16.msra.mxu0 %v2131
  %3228 = vmatmul.bf16.gmra.mxu0 %v2532
  %v3229 = vpop.f32.mrf.mxu0
  %v3230 = vadd.f32 %v3216, %v3229
  %v3231 = vpop.f32.mrf.mxu0
  %v3232 = vadd.f32 %v3218, %v3231
  %3233 = vdwg.mxu0
  %3234 = vst [vmem:[%s4] sm:$0xff] %v2880
  %3235 = vst [vmem:[%s4 + $0x8] sm:$0xff] %v2882
  %3236 = vst [vmem:[%s5] sm:$0xff] %v3230
  %3237 = vst [vmem:[%s5 + $0x8] sm:$0xff] %v3232
  %v3238 = vld [vmem:[%s3] sm:$0xff]
  %v3239 = vld [vmem:[%s3 + $0x8] sm:$0xff]
  %v3240 = vmul.f32 %v3230, 0.5
  %v3241 = vmul.f32 %v3232, 0.5
  %v3242 = vmul.f32 %v3240, 1.442695
  %v3243 = vpow.pop %v3242
  %v3244 = vmul.f32 %v3241, 1.442695
  %v3245 = vpow.pop %v3244
  %v3246 = vmul.f32 %v3238, %v3243
  %v3247 = vmul.f32 %v3239, %v3245
  %v3248 = vadd.f32 %v2880, %v3246
  %v3249 = vadd.f32 %v2882, %v3247
  %3250 = vst [vmem:[%s6] sm:$0xff] %v3248
  %3251 = vst [vmem:[%s6 + $0x8] sm:$0xff] %v3249
  // Predicated region
  $region18: #{vae_forward.8} parent=0 // pred_check
    _
  $region19: #{vae_forward.8} parent=0 // pred_check_branch
    %3253 = sbr.rel (0) target = $region21
  $region20: #{vae_forward.8} parent=0 // pred_region
    _
  $region21: #{vae_forward.8} parent=0 // pred_fallthru
    _
  // Predicated region
  $region22: #{vae_forward.8} parent=0 // pred_check
    _
  $region23: #{vae_forward.8} parent=0 // pred_check_branch
    %3255 = sbr.rel (0) target = $region25
  $region24: #{vae_forward.8} parent=0 // pred_region
    _
  $region25: #{vae_forward.8} parent=0 // pred_fallthru
    _
  // Predicated region
  $region26: #{vae_forward.8} parent=0 // pred_check
    _
  $region27: #{vae_forward.8} parent=0 // pred_check_branch
    %3257 = sbr.rel (0) target = $region29
  $region28: #{vae_forward.8} parent=0 // pred_region
    _
  $region29: #{vae_forward.8} parent=0 // pred_fallthru
    _
  // Predicated region
  $region30: #{vae_forward.8} parent=0 // pred_check
    _
  $region31: #{vae_forward.8} parent=0 // pred_check_branch
    %3259 = sbr.rel (0) target = $region33
  $region32: #{vae_forward.8} parent=0 // pred_region
    _
  $region33: #{vae_forward.8} parent=0 // pred_fallthru
    _
  // Predicated region
  $region34: #{vae_forward.8} parent=0 // pred_check
    _
  $region35: #{vae_forward.8} parent=0 // pred_check_branch
    %3261 = sbr.rel (0) target = $region37
  $region36: #{vae_forward.8} parent=0 // pred_region
    _
  $region37: #{vae_forward.8} parent=0 // pred_fallthru
    _
  // Predicated region
  $region38: #{vae_forward.8} parent=0 // pred_check
    _
  $region39: #{vae_forward.8} parent=0 // pred_check_branch
    %3263 = sbr.rel (0) target = $region41
  $region40: #{vae_forward.8} parent=0 // pred_region
    _
  $region41: #{vae_forward.8} parent=0 // pred_fallthru
    _

// kernel: tile.13
$region0: #{tile.13}
  #allocation0 [shape = 's32[1]{0}', space=sflag, size = 0x4, scoped, tag = 'scoped memory for tile.13']
  %s0 = inlined_call_operand.vmem [shape: f32[32], index: 0, kind: input, shape index: {}]
  %s1 = inlined_call_operand.vmem [shape: f32[4,32], index: 1, kind: output, shape index: {}]
  // Predicated region
  $region2: #{tile.13} parent=0 // pred_check
    _
  $region3: #{tile.13} parent=0 // pred_check_branch
    %3 = sbr.rel (0) target = $region5
  $region4: #{tile.13} parent=0 // pred_region
    _
  $region5: #{tile.13} parent=0 // pred_fallthru
    _
  %v4 = vld [vmem:[%s0] ss:$0 sm:$0xff]
  %5 = vst [vmem:[%s1] sm:$0xf] %v4

// kernel: vae_forward.9
$region0: #{vae_forward.9}
  #allocation0 [shape = 'u32[]', space=smem, size = 0x4, offset = 0x4, fixed_abs, tag = 'smem constant byte address 0x4 - core index']
  #allocation1 [shape = 'u32[72,128]{1,0:T(1,128)}', space=vmem, size = 0x9000, scoped, tag = 'internal scratch']
  %s0 = inlined_call_operand.vmem [shape: bf16[16,128], index: 0, kind: input, shape index: {}]
  %s1 = inlined_call_operand.vmem [shape: bf16[128,3200], index: 1, kind: input, shape index: {}]
  %s2 = inlined_call_operand.vmem [shape: f32[1,3200], index: 2, kind: input, shape index: {}]
  %s3 = inlined_call_operand.vmem [shape: f32[16,3200], index: 3, kind: output, shape index: {}]
  %s4 = sld [smem:[#allocation0]]
  $region22: #{vae_forward.9} parent=0
    _
  %s6 = ssub.s32 1, %s4
  %s7 = scalar_select 0, %s6, %s4
  // Predicated region
  $region2: #{vae_forward.9} parent=0 // pred_check
    _
  $region3: #{vae_forward.9} parent=0 // pred_check_branch
    %9 = sbr.rel (0) target = $region5
  $region4: #{vae_forward.9} parent=0 // pred_region
    _
  $region5: #{vae_forward.9} parent=0 // pred_fallthru
    _
  // Predicated region
  $region6: #{vae_forward.9} parent=0 // pred_check
    _
  $region7: #{vae_forward.9} parent=0 // pred_check_branch
    %11 = sbr.rel (0) target = $region9
  $region8: #{vae_forward.9} parent=0 // pred_region
    _
  $region9: #{vae_forward.9} parent=0 // pred_fallthru
    _
  // Predicated region
  $region10: #{vae_forward.9} parent=0 // pred_check
    _
  $region11: #{vae_forward.9} parent=0 // pred_check_branch
    %13 = sbr.rel (0) target = $region13
  $region12: #{vae_forward.9} parent=0 // pred_region
    _
  $region13: #{vae_forward.9} parent=0 // pred_fallthru
    _
  %v14 = vld [vmem:[%s0] sm:$0xf]
  %v15 = vld [vmem:[%s0 + $0x4] sm:$0xf]
  %v16 = vld [vmem:[%s1] sm:$0xff]
  %v17 = vld [vmem:[%s1 + $0x8] sm:$0xff]
  %v18 = vld [vmem:[%s1 + $0x10] sm:$0xff]
  %v19 = vld [vmem:[%s1 + $0x18] sm:$0xff]
  %v20 = vld [vmem:[%s1 + $0x20] sm:$0xff]
  %v21 = vld [vmem:[%s1 + $0x28] sm:$0xff]
  %v22 = vld [vmem:[%s1 + $0x30] sm:$0xff]
  %v23 = vld [vmem:[%s1 + $0x38] sm:$0xff]
  %v24 = vld [vmem:[%s1 + $0x40] sm:$0xff]
  %v25 = vld [vmem:[%s1 + $0x48] sm:$0xff]
  %v26 = vld [vmem:[%s1 + $0x50] sm:$0xff]
  %v27 = vld [vmem:[%s1 + $0x58] sm:$0xff]
  %v28 = vld [vmem:[%s1 + $0x60] sm:$0xf]
  %v29 = vld [vmem:[%s1 + $0x64] sm:$0xff]
  %v30 = vld [vmem:[%s1 + $0x6c] sm:$0xff]
  %v31 = vld [vmem:[%s1 + $0x74] sm:$0xff]
  %v32 = vld [vmem:[%s1 + $0x7c] sm:$0xff]
  %v33 = vld [vmem:[%s1 + $0x84] sm:$0xff]
  %v34 = vld [vmem:[%s1 + $0x8c] sm:$0xff]
  %v35 = vld [vmem:[%s1 + $0x94] sm:$0xff]
  %v36 = vld [vmem:[%s1 + $0x9c] sm:$0xff]
  %v37 = vld [vmem:[%s1 + $0xa4] sm:$0xff]
  %v38 = vld [vmem:[%s1 + $0xac] sm:$0xff]
  %v39 = vld [vmem:[%s1 + $0xb4] sm:$0xff]
  %v40 = vld [vmem:[%s1 + $0xbc] sm:$0xff]
  %v41 = vld [vmem:[%s1 + $0xc4] sm:$0xf]
  %v42 = vld [vmem:[%s1 + $0xc8] sm:$0xff]
  %v43 = vld [vmem:[%s1 + $0xd0] sm:$0xff]
  %v44 = vld [vmem:[%s1 + $0xd8] sm:$0xff]
  %v45 = vld [vmem:[%s1 + $0xe0] sm:$0xff]
  %v46 = vld [vmem:[%s1 + $0xe8] sm:$0xff]
  %v47 = vld [vmem:[%s1 + $0xf0] sm:$0xff]
  %v48 = vld [vmem:[%s1 + $0xf8] sm:$0xff]
  %v49 = vld [vmem:[%s1 + $0x100] sm:$0xff]
  %v50 = vld [vmem:[%s1 + $0x108] sm:$0xff]
  %v51 = vld [vmem:[%s1 + $0x110] sm:$0xff]
  %v52 = vld [vmem:[%s1 + $0x118] sm:$0xff]
  %v53 = vld [vmem:[%s1 + $0x120] sm:$0xff]
  %v54 = vld [vmem:[%s1 + $0x128] sm:$0xf]
  %v55 = vld [vmem:[%s1 + $0x12c] sm:$0xff]
  %v56 = vld [vmem:[%s1 + $0x134] sm:$0xff]
  %v57 = vld [vmem:[%s1 + $0x13c] sm:$0xff]
  %v58 = vld [vmem:[%s1 + $0x144] sm:$0xff]
  %v59 = vld [vmem:[%s1 + $0x14c] sm:$0xff]
  %v60 = vld [vmem:[%s1 + $0x154] sm:$0xff]
  %v61 = vld [vmem:[%s1 + $0x15c] sm:$0xff]
  %v62 = vld [vmem:[%s1 + $0x164] sm:$0xff]
  %v63 = vld [vmem:[%s1 + $0x16c] sm:$0xff]
  %v64 = vld [vmem:[%s1 + $0x174] sm:$0xff]
  %v65 = vld [vmem:[%s1 + $0x17c] sm:$0xff]
  %v66 = vld [vmem:[%s1 + $0x184] sm:$0xff]
  %v67 = vld [vmem:[%s1 + $0x18c] sm:$0xf]
  %v68 = vld [vmem:[%s1 + $0x190] sm:$0xff]
  %v69 = vld [vmem:[%s1 + $0x198] sm:$0xff]
  %v70 = vld [vmem:[%s1 + $0x1a0] sm:$0xff]
  %v71 = vld [vmem:[%s1 + $0x1a8] sm:$0xff]
  %v72 = vld [vmem:[%s1 + $0x1b0] sm:$0xff]
  %v73 = vld [vmem:[%s1 + $0x1b8] sm:$0xff]
  %v74 = vld [vmem:[%s1 + $0x1c0] sm:$0xff]
  %v75 = vld [vmem:[%s1 + $0x1c8] sm:$0xff]
  %v76 = vld [vmem:[%s1 + $0x1d0] sm:$0xff]
  %v77 = vld [vmem:[%s1 + $0x1d8] sm:$0xff]
  %v78 = vld [vmem:[%s1 + $0x1e0] sm:$0xff]
  %v79 = vld [vmem:[%s1 + $0x1e8] sm:$0xff]
  %v80 = vld [vmem:[%s1 + $0x1f0] sm:$0xf]
  %v81 = vld [vmem:[%s1 + $0x1f4] sm:$0xff]
  %v82 = vld [vmem:[%s1 + $0x1fc] sm:$0xff]
  %v83 = vld [vmem:[%s1 + $0x204] sm:$0xff]
  %v84 = vld [vmem:[%s1 + $0x20c] sm:$0xff]
  %v85 = vld [vmem:[%s1 + $0x214] sm:$0xff]
  %v86 = vld [vmem:[%s1 + $0x21c] sm:$0xff]
  %v87 = vld [vmem:[%s1 + $0x224] sm:$0xff]
  %v88 = vld [vmem:[%s1 + $0x22c] sm:$0xff]
  %v89 = vld [vmem:[%s1 + $0x234] sm:$0xff]
  %v90 = vld [vmem:[%s1 + $0x23c] sm:$0xff]
  %v91 = vld [vmem:[%s1 + $0x244] sm:$0xff]
  %v92 = vld [vmem:[%s1 + $0x24c] sm:$0xff]
  %v93 = vld [vmem:[%s1 + $0x254] sm:$0xf]
  %v94 = vld [vmem:[%s1 + $0x258] sm:$0xff]
  %v95 = vld [vmem:[%s1 + $0x260] sm:$0xff]
  %v96 = vld [vmem:[%s1 + $0x268] sm:$0xff]
  %v97 = vld [vmem:[%s1 + $0x270] sm:$0xff]
  %v98 = vld [vmem:[%s1 + $0x278] sm:$0xff]
  %v99 = vld [vmem:[%s1 + $0x280] sm:$0xff]
  %v100 = vld [vmem:[%s1 + $0x288] sm:$0xff]
  %v101 = vld [vmem:[%s1 + $0x290] sm:$0xff]
  %v102 = vld [vmem:[%s1 + $0x298] sm:$0xff]
  %v103 = vld [vmem:[%s1 + $0x2a0] sm:$0xff]
  %v104 = vld [vmem:[%s1 + $0x2a8] sm:$0xff]
  %v105 = vld [vmem:[%s1 + $0x2b0] sm:$0xff]
  %v106 = vld [vmem:[%s1 + $0x2b8] sm:$0xf]
  %v107 = vld [vmem:[%s1 + $0x2bc] sm:$0xff]
  %v108 = vld [vmem:[%s1 + $0x2c4] sm:$0xff]
  %v109 = vld [vmem:[%s1 + $0x2cc] sm:$0xff]
  %v110 = vld [vmem:[%s1 + $0x2d4] sm:$0xff]
  %v111 = vld [vmem:[%s1 + $0x2dc] sm:$0xff]
  %v112 = vld [vmem:[%s1 + $0x2e4] sm:$0xff]
  %v113 = vld [vmem:[%s1 + $0x2ec] sm:$0xff]
  %v114 = vld [vmem:[%s1 + $0x2f4] sm:$0xff]
  %v115 = vld [vmem:[%s1 + $0x2fc] sm:$0xff]
  %v116 = vld [vmem:[%s1 + $0x304] sm:$0xff]
  %v117 = vld [vmem:[%s1 + $0x30c] sm:$0xff]
  %v118 = vld [vmem:[%s1 + $0x314] sm:$0xff]
  %v119 = vld [vmem:[%s1 + $0x31c] sm:$0xf]
  %v120 = vld [vmem:[%s1 + $0x320] sm:$0xff]
  %v121 = vld [vmem:[%s1 + $0x328] sm:$0xff]
  %v122 = vld [vmem:[%s1 + $0x330] sm:$0xff]
  %v123 = vld [vmem:[%s1 + $0x338] sm:$0xff]
  %v124 = vld [vmem:[%s1 + $0x340] sm:$0xff]
  %v125 = vld [vmem:[%s1 + $0x348] sm:$0xff]
  %v126 = vld [vmem:[%s1 + $0x350] sm:$0xff]
  %v127 = vld [vmem:[%s1 + $0x358] sm:$0xff]
  %v128 = vld [vmem:[%s1 + $0x360] sm:$0xff]
  %v129 = vld [vmem:[%s1 + $0x368] sm:$0xff]
  %v130 = vld [vmem:[%s1 + $0x370] sm:$0xff]
  %v131 = vld [vmem:[%s1 + $0x378] sm:$0xff]
  %v132 = vld [vmem:[%s1 + $0x380] sm:$0xf]
  %v133 = vld [vmem:[%s1 + $0x384] sm:$0xff]
  %v134 = vld [vmem:[%s1 + $0x38c] sm:$0xff]
  %v135 = vld [vmem:[%s1 + $0x394] sm:$0xff]
  %v136 = vld [vmem:[%s1 + $0x39c] sm:$0xff]
  %v137 = vld [vmem:[%s1 + $0x3a4] sm:$0xff]
  %v138 = vld [vmem:[%s1 + $0x3ac] sm:$0xff]
  %v139 = vld [vmem:[%s1 + $0x3b4] sm:$0xff]
  %v140 = vld [vmem:[%s1 + $0x3bc] sm:$0xff]
  %v141 = vld [vmem:[%s1 + $0x3c4] sm:$0xff]
  %v142 = vld [vmem:[%s1 + $0x3cc] sm:$0xff]
  %v143 = vld [vmem:[%s1 + $0x3d4] sm:$0xff]
  %v144 = vld [vmem:[%s1 + $0x3dc] sm:$0xff]
  %v145 = vld [vmem:[%s1 + $0x3e4] sm:$0xf]
  %v146 = vld [vmem:[%s1 + $0x3e8] sm:$0xff]
  %v147 = vld [vmem:[%s1 + $0x3f0] sm:$0xff]
  %v148 = vld [vmem:[%s1 + $0x3f8] sm:$0xff]
  %v149 = vld [vmem:[%s1 + $0x400] sm:$0xff]
  %v150 = vld [vmem:[%s1 + $0x408] sm:$0xff]
  %v151 = vld [vmem:[%s1 + $0x410] sm:$0xff]
  %v152 = vld [vmem:[%s1 + $0x418] sm:$0xff]
  %v153 = vld [vmem:[%s1 + $0x420] sm:$0xff]
  %v154 = vld [vmem:[%s1 + $0x428] sm:$0xff]
  %v155 = vld [vmem:[%s1 + $0x430] sm:$0xff]
  %v156 = vld [vmem:[%s1 + $0x438] sm:$0xff]
  %v157 = vld [vmem:[%s1 + $0x440] sm:$0xff]
  %v158 = vld [vmem:[%s1 + $0x448] sm:$0xf]
  %v159 = vld [vmem:[%s1 + $0x44c] sm:$0xff]
  %v160 = vld [vmem:[%s1 + $0x454] sm:$0xff]
  %v161 = vld [vmem:[%s1 + $0x45c] sm:$0xff]
  %v162 = vld [vmem:[%s1 + $0x464] sm:$0xff]
  %v163 = vld [vmem:[%s1 + $0x46c] sm:$0xff]
  %v164 = vld [vmem:[%s1 + $0x474] sm:$0xff]
  %v165 = vld [vmem:[%s1 + $0x47c] sm:$0xff]
  %v166 = vld [vmem:[%s1 + $0x484] sm:$0xff]
  %v167 = vld [vmem:[%s1 + $0x48c] sm:$0xff]
  %v168 = vld [vmem:[%s1 + $0x494] sm:$0xff]
  %v169 = vld [vmem:[%s1 + $0x49c] sm:$0xff]
  %v170 = vld [vmem:[%s1 + $0x4a4] sm:$0xff]
  %v171 = vld [vmem:[%s1 + $0x4ac] sm:$0xf]
  %v172 = vld [vmem:[%s1 + $0x4b0] sm:$0xff]
  %v173 = vld [vmem:[%s1 + $0x4b8] sm:$0xff]
  %v174 = vld [vmem:[%s1 + $0x4c0] sm:$0xff]
  %v175 = vld [vmem:[%s1 + $0x4c8] sm:$0xff]
  %v176 = vld [vmem:[%s1 + $0x4d0] sm:$0xff]
  %v177 = vld [vmem:[%s1 + $0x4d8] sm:$0xff]
  %v178 = vld [vmem:[%s1 + $0x4e0] sm:$0xff]
  %v179 = vld [vmem:[%s1 + $0x4e8] sm:$0xff]
  %v180 = vld [vmem:[%s1 + $0x4f0] sm:$0xff]
  %v181 = vld [vmem:[%s1 + $0x4f8] sm:$0xff]
  %v182 = vld [vmem:[%s1 + $0x500] sm:$0xff]
  %v183 = vld [vmem:[%s1 + $0x508] sm:$0xff]
  %v184 = vld [vmem:[%s1 + $0x510] sm:$0xf]
  %v185 = vld [vmem:[%s1 + $0x514] sm:$0xff]
  %v186 = vld [vmem:[%s1 + $0x51c] sm:$0xff]
  %v187 = vld [vmem:[%s1 + $0x524] sm:$0xff]
  %v188 = vld [vmem:[%s1 + $0x52c] sm:$0xff]
  %v189 = vld [vmem:[%s1 + $0x534] sm:$0xff]
  %v190 = vld [vmem:[%s1 + $0x53c] sm:$0xff]
  %v191 = vld [vmem:[%s1 + $0x544] sm:$0xff]
  %v192 = vld [vmem:[%s1 + $0x54c] sm:$0xff]
  %v193 = vld [vmem:[%s1 + $0x554] sm:$0xff]
  %v194 = vld [vmem:[%s1 + $0x55c] sm:$0xff]
  %v195 = vld [vmem:[%s1 + $0x564] sm:$0xff]
  %v196 = vld [vmem:[%s1 + $0x56c] sm:$0xff]
  %v197 = vld [vmem:[%s1 + $0x574] sm:$0xf]
  %v198 = vld [vmem:[%s1 + $0x578] sm:$0xff]
  %v199 = vld [vmem:[%s1 + $0x580] sm:$0xff]
  %v200 = vld [vmem:[%s1 + $0x588] sm:$0xff]
  %v201 = vld [vmem:[%s1 + $0x590] sm:$0xff]
  %v202 = vld [vmem:[%s1 + $0x598] sm:$0xff]
  %v203 = vld [vmem:[%s1 + $0x5a0] sm:$0xff]
  %v204 = vld [vmem:[%s1 + $0x5a8] sm:$0xff]
  %v205 = vld [vmem:[%s1 + $0x5b0] sm:$0xff]
  %v206 = vld [vmem:[%s1 + $0x5b8] sm:$0xff]
  %v207 = vld [vmem:[%s1 + $0x5c0] sm:$0xff]
  %v208 = vld [vmem:[%s1 + $0x5c8] sm:$0xff]
  %v209 = vld [vmem:[%s1 + $0x5d0] sm:$0xff]
  %v210 = vld [vmem:[%s1 + $0x5d8] sm:$0xf]
  %v211 = vld [vmem:[%s1 + $0x5dc] sm:$0xff]
  %v212 = vld [vmem:[%s1 + $0x5e4] sm:$0xff]
  %v213 = vld [vmem:[%s1 + $0x5ec] sm:$0xff]
  %v214 = vld [vmem:[%s1 + $0x5f4] sm:$0xff]
  %v215 = vld [vmem:[%s1 + $0x5fc] sm:$0xff]
  %v216 = vld [vmem:[%s1 + $0x604] sm:$0xff]
  %v217 = vld [vmem:[%s1 + $0x60c] sm:$0xff]
  %v218 = vld [vmem:[%s1 + $0x614] sm:$0xff]
  %v219 = vld [vmem:[%s1 + $0x61c] sm:$0xff]
  %v220 = vld [vmem:[%s1 + $0x624] sm:$0xff]
  %v221 = vld [vmem:[%s1 + $0x62c] sm:$0xff]
  %v222 = vld [vmem:[%s1 + $0x634] sm:$0xff]
  %v223 = vld [vmem:[%s1 + $0x63c] sm:$0xf]
  %v224 = vld [vmem:[%s2] sm:$0xff]
  %v225 = vld [vmem:[%s2 + $0x8] sm:$0xff]
  %v226 = vld [vmem:[%s2 + $0x10] sm:$0xff]
  %v227 = vld [vmem:[%s2 + $0x18] sm:$0x1]
  %v232 = vperm.slane %v224, 0
  %v233 = vperm.slane %v224, 1
  %v234 = vperm.slane %v224, 2
  %v235 = vperm.slane %v224, 3
  %v236 = vperm.slane %v224, 4
  %v237 = vperm.slane %v224, 5
  %v238 = vperm.slane %v224, 6
  %v239 = vperm.slane %v224, 7
  %v240 = vperm.slane %v225, 0
  %v241 = vperm.slane %v225, 1
  %v242 = vperm.slane %v225, 2
  %v243 = vperm.slane %v225, 3
  %v244 = vperm.slane %v225, 4
  %v245 = vperm.slane %v225, 5
  %v246 = vperm.slane %v225, 6
  %v247 = vperm.slane %v225, 7
  %v248 = vperm.slane %v226, 0
  %v249 = vperm.slane %v226, 1
  %v250 = vperm.slane %v226, 2
  %v251 = vperm.slane %v226, 3
  %v252 = vperm.slane %v226, 4
  %v253 = vperm.slane %v226, 5
  %v254 = vperm.slane %v226, 6
  %v255 = vperm.slane %v226, 7
  %v256 = vperm.slane %v227, 0
  %v284 = vunpack.c.l.b16 %v14
  %v285 = vunpack.c.l.b16 %v15
  %v286 = vpack.c.b16 %v285, %v284
  %v496 = vunpack.c.l.b16 %v16
  %v497 = vunpack.c.h.b16 %v16
  %v498 = vunpack.c.l.b16 %v17
  %v499 = vunpack.c.h.b16 %v17
  %v500 = vunpack.c.l.b16 %v18
  %v501 = vunpack.c.h.b16 %v18
  %v502 = vunpack.c.l.b16 %v19
  %v503 = vunpack.c.h.b16 %v19
  %v504 = vunpack.c.l.b16 %v20
  %v505 = vunpack.c.h.b16 %v20
  %v506 = vunpack.c.l.b16 %v21
  %v507 = vunpack.c.h.b16 %v21
  %v508 = vunpack.c.l.b16 %v22
  %v509 = vunpack.c.h.b16 %v22
  %v510 = vunpack.c.l.b16 %v23
  %v511 = vunpack.c.h.b16 %v23
  %v512 = vunpack.c.l.b16 %v24
  %v513 = vunpack.c.h.b16 %v24
  %v514 = vunpack.c.l.b16 %v25
  %v515 = vunpack.c.h.b16 %v25
  %v516 = vunpack.c.l.b16 %v26
  %v517 = vunpack.c.h.b16 %v26
  %v518 = vunpack.c.l.b16 %v27
  %v519 = vunpack.c.h.b16 %v27
  %v520 = vunpack.c.l.b16 %v28
  %v521 = vunpack.c.l.b16 %v29
  %v522 = vunpack.c.h.b16 %v29
  %v523 = vunpack.c.l.b16 %v30
  %v524 = vunpack.c.h.b16 %v30
  %v525 = vunpack.c.l.b16 %v31
  %v526 = vunpack.c.h.b16 %v31
  %v527 = vunpack.c.l.b16 %v32
  %v528 = vunpack.c.h.b16 %v32
  %v529 = vunpack.c.l.b16 %v33
  %v530 = vunpack.c.h.b16 %v33
  %v531 = vunpack.c.l.b16 %v34
  %v532 = vunpack.c.h.b16 %v34
  %v533 = vunpack.c.l.b16 %v35
  %v534 = vunpack.c.h.b16 %v35
  %v535 = vunpack.c.l.b16 %v36
  %v536 = vunpack.c.h.b16 %v36
  %v537 = vunpack.c.l.b16 %v37
  %v538 = vunpack.c.h.b16 %v37
  %v539 = vunpack.c.l.b16 %v38
  %v540 = vunpack.c.h.b16 %v38
  %v541 = vunpack.c.l.b16 %v39
  %v542 = vunpack.c.h.b16 %v39
  %v543 = vunpack.c.l.b16 %v40
  %v544 = vunpack.c.h.b16 %v40
  %v545 = vunpack.c.l.b16 %v41
  %v546 = vunpack.c.l.b16 %v42
  %v547 = vunpack.c.h.b16 %v42
  %v548 = vunpack.c.l.b16 %v43
  %v549 = vunpack.c.h.b16 %v43
  %v550 = vunpack.c.l.b16 %v44
  %v551 = vunpack.c.h.b16 %v44
  %v552 = vunpack.c.l.b16 %v45
  %v553 = vunpack.c.h.b16 %v45
  %v554 = vunpack.c.l.b16 %v46
  %v555 = vunpack.c.h.b16 %v46
  %v556 = vunpack.c.l.b16 %v47
  %v557 = vunpack.c.h.b16 %v47
  %v558 = vunpack.c.l.b16 %v48
  %v559 = vunpack.c.h.b16 %v48
  %v560 = vunpack.c.l.b16 %v49
  %v561 = vunpack.c.h.b16 %v49
  %v562 = vunpack.c.l.b16 %v50
  %v563 = vunpack.c.h.b16 %v50
  %v564 = vunpack.c.l.b16 %v51
  %v565 = vunpack.c.h.b16 %v51
  %v566 = vunpack.c.l.b16 %v52
  %v567 = vunpack.c.h.b16 %v52
  %v568 = vunpack.c.l.b16 %v53
  %v569 = vunpack.c.h.b16 %v53
  %v570 = vunpack.c.l.b16 %v54
  %v571 = vunpack.c.l.b16 %v55
  %v572 = vunpack.c.h.b16 %v55
  %v573 = vunpack.c.l.b16 %v56
  %v574 = vunpack.c.h.b16 %v56
  %v575 = vunpack.c.l.b16 %v57
  %v576 = vunpack.c.h.b16 %v57
  %v577 = vunpack.c.l.b16 %v58
  %v578 = vunpack.c.h.b16 %v58
  %v579 = vunpack.c.l.b16 %v59
  %v580 = vunpack.c.h.b16 %v59
  %v581 = vunpack.c.l.b16 %v60
  %v582 = vunpack.c.h.b16 %v60
  %v583 = vunpack.c.l.b16 %v61
  %v584 = vunpack.c.h.b16 %v61
  %v585 = vunpack.c.l.b16 %v62
  %v586 = vunpack.c.h.b16 %v62
  %v587 = vunpack.c.l.b16 %v63
  %v588 = vunpack.c.h.b16 %v63
  %v589 = vunpack.c.l.b16 %v64
  %v590 = vunpack.c.h.b16 %v64
  %v591 = vunpack.c.l.b16 %v65
  %v592 = vunpack.c.h.b16 %v65
  %v593 = vunpack.c.l.b16 %v66
  %v594 = vunpack.c.h.b16 %v66
  %v595 = vunpack.c.l.b16 %v67
  %v596 = vunpack.c.l.b16 %v68
  %v597 = vunpack.c.h.b16 %v68
  %v598 = vunpack.c.l.b16 %v69
  %v599 = vunpack.c.h.b16 %v69
  %v600 = vunpack.c.l.b16 %v70
  %v601 = vunpack.c.h.b16 %v70
  %v602 = vunpack.c.l.b16 %v71
  %v603 = vunpack.c.h.b16 %v71
  %v604 = vunpack.c.l.b16 %v72
  %v605 = vunpack.c.h.b16 %v72
  %v606 = vunpack.c.l.b16 %v73
  %v607 = vunpack.c.h.b16 %v73
  %v608 = vunpack.c.l.b16 %v74
  %v609 = vunpack.c.h.b16 %v74
  %v610 = vunpack.c.l.b16 %v75
  %v611 = vunpack.c.h.b16 %v75
  %v612 = vunpack.c.l.b16 %v76
  %v613 = vunpack.c.h.b16 %v76
  %v614 = vunpack.c.l.b16 %v77
  %v615 = vunpack.c.h.b16 %v77
  %v616 = vunpack.c.l.b16 %v78
  %v617 = vunpack.c.h.b16 %v78
  %v618 = vunpack.c.l.b16 %v79
  %v619 = vunpack.c.h.b16 %v79
  %v620 = vunpack.c.l.b16 %v80
  %v621 = vunpack.c.l.b16 %v81
  %v622 = vunpack.c.h.b16 %v81
  %v623 = vunpack.c.l.b16 %v82
  %v624 = vunpack.c.h.b16 %v82
  %v625 = vunpack.c.l.b16 %v83
  %v626 = vunpack.c.h.b16 %v83
  %v627 = vunpack.c.l.b16 %v84
  %v628 = vunpack.c.h.b16 %v84
  %v629 = vunpack.c.l.b16 %v85
  %v630 = vunpack.c.h.b16 %v85
  %v631 = vunpack.c.l.b16 %v86
  %v632 = vunpack.c.h.b16 %v86
  %v633 = vunpack.c.l.b16 %v87
  %v634 = vunpack.c.h.b16 %v87
  %v635 = vunpack.c.l.b16 %v88
  %v636 = vunpack.c.h.b16 %v88
  %v637 = vunpack.c.l.b16 %v89
  %v638 = vunpack.c.h.b16 %v89
  %v639 = vunpack.c.l.b16 %v90
  %v640 = vunpack.c.h.b16 %v90
  %v641 = vunpack.c.l.b16 %v91
  %v642 = vunpack.c.h.b16 %v91
  %v643 = vunpack.c.l.b16 %v92
  %v644 = vunpack.c.h.b16 %v92
  %v645 = vunpack.c.l.b16 %v93
  %v646 = vunpack.c.l.b16 %v94
  %v647 = vunpack.c.h.b16 %v94
  %v648 = vunpack.c.l.b16 %v95
  %v649 = vunpack.c.h.b16 %v95
  %v650 = vunpack.c.l.b16 %v96
  %v651 = vunpack.c.h.b16 %v96
  %v652 = vunpack.c.l.b16 %v97
  %v653 = vunpack.c.h.b16 %v97
  %v654 = vunpack.c.l.b16 %v98
  %v655 = vunpack.c.h.b16 %v98
  %v656 = vunpack.c.l.b16 %v99
  %v657 = vunpack.c.h.b16 %v99
  %v658 = vunpack.c.l.b16 %v100
  %v659 = vunpack.c.h.b16 %v100
  %v660 = vunpack.c.l.b16 %v101
  %v661 = vunpack.c.h.b16 %v101
  %v662 = vunpack.c.l.b16 %v102
  %v663 = vunpack.c.h.b16 %v102
  %v664 = vunpack.c.l.b16 %v103
  %v665 = vunpack.c.h.b16 %v103
  %v666 = vunpack.c.l.b16 %v104
  %v667 = vunpack.c.h.b16 %v104
  %v668 = vunpack.c.l.b16 %v105
  %v669 = vunpack.c.h.b16 %v105
  %v670 = vunpack.c.l.b16 %v106
  %v671 = vunpack.c.l.b16 %v107
  %v672 = vunpack.c.h.b16 %v107
  %v673 = vunpack.c.l.b16 %v108
  %v674 = vunpack.c.h.b16 %v108
  %v675 = vunpack.c.l.b16 %v109
  %v676 = vunpack.c.h.b16 %v109
  %v677 = vunpack.c.l.b16 %v110
  %v678 = vunpack.c.h.b16 %v110
  %v679 = vunpack.c.l.b16 %v111
  %v680 = vunpack.c.h.b16 %v111
  %v681 = vunpack.c.l.b16 %v112
  %v682 = vunpack.c.h.b16 %v112
  %v683 = vunpack.c.l.b16 %v113
  %v684 = vunpack.c.h.b16 %v113
  %v685 = vunpack.c.l.b16 %v114
  %v686 = vunpack.c.h.b16 %v114
  %v687 = vunpack.c.l.b16 %v115
  %v688 = vunpack.c.h.b16 %v115
  %v689 = vunpack.c.l.b16 %v116
  %v690 = vunpack.c.h.b16 %v116
  %v691 = vunpack.c.l.b16 %v117
  %v692 = vunpack.c.h.b16 %v117
  %v693 = vunpack.c.l.b16 %v118
  %v694 = vunpack.c.h.b16 %v118
  %v695 = vunpack.c.l.b16 %v119
  %v696 = vunpack.c.l.b16 %v120
  %v697 = vunpack.c.h.b16 %v120
  %v698 = vunpack.c.l.b16 %v121
  %v699 = vunpack.c.h.b16 %v121
  %v700 = vunpack.c.l.b16 %v122
  %v701 = vunpack.c.h.b16 %v122
  %v702 = vunpack.c.l.b16 %v123
  %v703 = vunpack.c.h.b16 %v123
  %v704 = vunpack.c.l.b16 %v124
  %v705 = vunpack.c.h.b16 %v124
  %v706 = vunpack.c.l.b16 %v125
  %v707 = vunpack.c.h.b16 %v125
  %v708 = vunpack.c.l.b16 %v126
  %v709 = vunpack.c.h.b16 %v126
  %v710 = vunpack.c.l.b16 %v127
  %v711 = vunpack.c.h.b16 %v127
  %v712 = vunpack.c.l.b16 %v128
  %v713 = vunpack.c.h.b16 %v128
  %v714 = vunpack.c.l.b16 %v129
  %v715 = vunpack.c.h.b16 %v129
  %v716 = vunpack.c.l.b16 %v130
  %v717 = vunpack.c.h.b16 %v130
  %v718 = vunpack.c.l.b16 %v131
  %v719 = vunpack.c.h.b16 %v131
  %v720 = vunpack.c.l.b16 %v132
  %v721 = vunpack.c.l.b16 %v133
  %v722 = vunpack.c.h.b16 %v133
  %v723 = vunpack.c.l.b16 %v134
  %v724 = vunpack.c.h.b16 %v134
  %v725 = vunpack.c.l.b16 %v135
  %v726 = vunpack.c.h.b16 %v135
  %v727 = vunpack.c.l.b16 %v136
  %v728 = vunpack.c.h.b16 %v136
  %v729 = vunpack.c.l.b16 %v137
  %v730 = vunpack.c.h.b16 %v137
  %v731 = vunpack.c.l.b16 %v138
  %v732 = vunpack.c.h.b16 %v138
  %v733 = vunpack.c.l.b16 %v139
  %v734 = vunpack.c.h.b16 %v139
  %v735 = vunpack.c.l.b16 %v140
  %v736 = vunpack.c.h.b16 %v140
  %v737 = vunpack.c.l.b16 %v141
  %v738 = vunpack.c.h.b16 %v141
  %v739 = vunpack.c.l.b16 %v142
  %v740 = vunpack.c.h.b16 %v142
  %v741 = vunpack.c.l.b16 %v143
  %v742 = vunpack.c.h.b16 %v143
  %v743 = vunpack.c.l.b16 %v144
  %v744 = vunpack.c.h.b16 %v144
  %v745 = vunpack.c.l.b16 %v145
  %v746 = vunpack.c.l.b16 %v146
  %v747 = vunpack.c.h.b16 %v146
  %v748 = vunpack.c.l.b16 %v147
  %v749 = vunpack.c.h.b16 %v147
  %v750 = vunpack.c.l.b16 %v148
  %v751 = vunpack.c.h.b16 %v148
  %v752 = vunpack.c.l.b16 %v149
  %v753 = vunpack.c.h.b16 %v149
  %v754 = vunpack.c.l.b16 %v150
  %v755 = vunpack.c.h.b16 %v150
  %v756 = vunpack.c.l.b16 %v151
  %v757 = vunpack.c.h.b16 %v151
  %v758 = vunpack.c.l.b16 %v152
  %v759 = vunpack.c.h.b16 %v152
  %v760 = vunpack.c.l.b16 %v153
  %v761 = vunpack.c.h.b16 %v153
  %v762 = vunpack.c.l.b16 %v154
  %v763 = vunpack.c.h.b16 %v154
  %v764 = vunpack.c.l.b16 %v155
  %v765 = vunpack.c.h.b16 %v155
  %v766 = vunpack.c.l.b16 %v156
  %v767 = vunpack.c.h.b16 %v156
  %v768 = vunpack.c.l.b16 %v157
  %v769 = vunpack.c.h.b16 %v157
  %v770 = vunpack.c.l.b16 %v158
  %v771 = vunpack.c.l.b16 %v159
  %v772 = vunpack.c.h.b16 %v159
  %v773 = vunpack.c.l.b16 %v160
  %v774 = vunpack.c.h.b16 %v160
  %v775 = vunpack.c.l.b16 %v161
  %v776 = vunpack.c.h.b16 %v161
  %v777 = vunpack.c.l.b16 %v162
  %v778 = vunpack.c.h.b16 %v162
  %v779 = vunpack.c.l.b16 %v163
  %v780 = vunpack.c.h.b16 %v163
  %v781 = vunpack.c.l.b16 %v164
  %v782 = vunpack.c.h.b16 %v164
  %v783 = vunpack.c.l.b16 %v165
  %v784 = vunpack.c.h.b16 %v165
  %v785 = vunpack.c.l.b16 %v166
  %v786 = vunpack.c.h.b16 %v166
  %v787 = vunpack.c.l.b16 %v167
  %v788 = vunpack.c.h.b16 %v167
  %v789 = vunpack.c.l.b16 %v168
  %v790 = vunpack.c.h.b16 %v168
  %v791 = vunpack.c.l.b16 %v169
  %v792 = vunpack.c.h.b16 %v169
  %v793 = vunpack.c.l.b16 %v170
  %v794 = vunpack.c.h.b16 %v170
  %v795 = vunpack.c.l.b16 %v171
  %v796 = vunpack.c.l.b16 %v172
  %v797 = vunpack.c.h.b16 %v172
  %v798 = vunpack.c.l.b16 %v173
  %v799 = vunpack.c.h.b16 %v173
  %v800 = vunpack.c.l.b16 %v174
  %v801 = vunpack.c.h.b16 %v174
  %v802 = vunpack.c.l.b16 %v175
  %v803 = vunpack.c.h.b16 %v175
  %v804 = vunpack.c.l.b16 %v176
  %v805 = vunpack.c.h.b16 %v176
  %v806 = vunpack.c.l.b16 %v177
  %v807 = vunpack.c.h.b16 %v177
  %v808 = vunpack.c.l.b16 %v178
  %v809 = vunpack.c.h.b16 %v178
  %v810 = vunpack.c.l.b16 %v179
  %v811 = vunpack.c.h.b16 %v179
  %v812 = vunpack.c.l.b16 %v180
  %v813 = vunpack.c.h.b16 %v180
  %v814 = vunpack.c.l.b16 %v181
  %v815 = vunpack.c.h.b16 %v181
  %v816 = vunpack.c.l.b16 %v182
  %v817 = vunpack.c.h.b16 %v182
  %v818 = vunpack.c.l.b16 %v183
  %v819 = vunpack.c.h.b16 %v183
  %v820 = vunpack.c.l.b16 %v184
  %v821 = vunpack.c.l.b16 %v185
  %v822 = vunpack.c.h.b16 %v185
  %v823 = vunpack.c.l.b16 %v186
  %v824 = vunpack.c.h.b16 %v186
  %v825 = vunpack.c.l.b16 %v187
  %v826 = vunpack.c.h.b16 %v187
  %v827 = vunpack.c.l.b16 %v188
  %v828 = vunpack.c.h.b16 %v188
  %v829 = vunpack.c.l.b16 %v189
  %v830 = vunpack.c.h.b16 %v189
  %v831 = vunpack.c.l.b16 %v190
  %v832 = vunpack.c.h.b16 %v190
  %v833 = vunpack.c.l.b16 %v191
  %v834 = vunpack.c.h.b16 %v191
  %v835 = vunpack.c.l.b16 %v192
  %v836 = vunpack.c.h.b16 %v192
  %v837 = vunpack.c.l.b16 %v193
  %v838 = vunpack.c.h.b16 %v193
  %v839 = vunpack.c.l.b16 %v194
  %v840 = vunpack.c.h.b16 %v194
  %v841 = vunpack.c.l.b16 %v195
  %v842 = vunpack.c.h.b16 %v195
  %v843 = vunpack.c.l.b16 %v196
  %v844 = vunpack.c.h.b16 %v196
  %v845 = vunpack.c.l.b16 %v197
  %v846 = vunpack.c.l.b16 %v198
  %v847 = vunpack.c.h.b16 %v198
  %v848 = vunpack.c.l.b16 %v199
  %v849 = vunpack.c.h.b16 %v199
  %v850 = vunpack.c.l.b16 %v200
  %v851 = vunpack.c.h.b16 %v200
  %v852 = vunpack.c.l.b16 %v201
  %v853 = vunpack.c.h.b16 %v201
  %v854 = vunpack.c.l.b16 %v202
  %v855 = vunpack.c.h.b16 %v202
  %v856 = vunpack.c.l.b16 %v203
  %v857 = vunpack.c.h.b16 %v203
  %v858 = vunpack.c.l.b16 %v204
  %v859 = vunpack.c.h.b16 %v204
  %v860 = vunpack.c.l.b16 %v205
  %v861 = vunpack.c.h.b16 %v205
  %v862 = vunpack.c.l.b16 %v206
  %v863 = vunpack.c.h.b16 %v206
  %v864 = vunpack.c.l.b16 %v207
  %v865 = vunpack.c.h.b16 %v207
  %v866 = vunpack.c.l.b16 %v208
  %v867 = vunpack.c.h.b16 %v208
  %v868 = vunpack.c.l.b16 %v209
  %v869 = vunpack.c.h.b16 %v209
  %v870 = vunpack.c.l.b16 %v210
  %v871 = vunpack.c.l.b16 %v211
  %v872 = vunpack.c.h.b16 %v211
  %v873 = vunpack.c.l.b16 %v212
  %v874 = vunpack.c.h.b16 %v212
  %v875 = vunpack.c.l.b16 %v213
  %v876 = vunpack.c.h.b16 %v213
  %v877 = vunpack.c.l.b16 %v214
  %v878 = vunpack.c.h.b16 %v214
  %v879 = vunpack.c.l.b16 %v215
  %v880 = vunpack.c.h.b16 %v215
  %v881 = vunpack.c.l.b16 %v216
  %v882 = vunpack.c.h.b16 %v216
  %v883 = vunpack.c.l.b16 %v217
  %v884 = vunpack.c.h.b16 %v217
  %v885 = vunpack.c.l.b16 %v218
  %v886 = vunpack.c.h.b16 %v218
  %v887 = vunpack.c.l.b16 %v219
  %v888 = vunpack.c.h.b16 %v219
  %v889 = vunpack.c.l.b16 %v220
  %v890 = vunpack.c.h.b16 %v220
  %v891 = vunpack.c.l.b16 %v221
  %v892 = vunpack.c.h.b16 %v221
  %v893 = vunpack.c.l.b16 %v222
  %v894 = vunpack.c.h.b16 %v222
  %v895 = vunpack.c.l.b16 %v223
  %v896 = vpack.c.b16 %v521, %v496
  %v897 = vpack.c.b16 %v522, %v497
  %v898 = vpack.c.b16 %v523, %v498
  %v899 = vpack.c.b16 %v524, %v499
  %v900 = vpack.c.b16 %v525, %v500
  %v901 = vpack.c.b16 %v526, %v501
  %v902 = vpack.c.b16 %v527, %v502
  %v903 = vpack.c.b16 %v528, %v503
  %v904 = vpack.c.b16 %v529, %v504
  %v905 = vpack.c.b16 %v530, %v505
  %v906 = vpack.c.b16 %v531, %v506
  %v907 = vpack.c.b16 %v532, %v507
  %v908 = vpack.c.b16 %v533, %v508
  %v909 = vpack.c.b16 %v534, %v509
  %v910 = vpack.c.b16 %v535, %v510
  %v911 = vpack.c.b16 %v536, %v511
  %v912 = vpack.c.b16 %v537, %v512
  %v913 = vpack.c.b16 %v538, %v513
  %v914 = vpack.c.b16 %v539, %v514
  %v915 = vpack.c.b16 %v540, %v515
  %v916 = vpack.c.b16 %v541, %v516
  %v917 = vpack.c.b16 %v542, %v517
  %v918 = vpack.c.b16 %v543, %v518
  %v919 = vpack.c.b16 %v544, %v519
  %v920 = vpack.c.b16 %v545, %v520
  %v921 = vpack.c.b16 %v571, %v546
  %v922 = vpack.c.b16 %v572, %v547
  %v923 = vpack.c.b16 %v573, %v548
  %v924 = vpack.c.b16 %v574, %v549
  %v925 = vpack.c.b16 %v575, %v550
  %v926 = vpack.c.b16 %v576, %v551
  %v927 = vpack.c.b16 %v577, %v552
  %v928 = vpack.c.b16 %v578, %v553
  %v929 = vpack.c.b16 %v579, %v554
  %v930 = vpack.c.b16 %v580, %v555
  %v931 = vpack.c.b16 %v581, %v556
  %v932 = vpack.c.b16 %v582, %v557
  %v933 = vpack.c.b16 %v583, %v558
  %v934 = vpack.c.b16 %v584, %v559
  %v935 = vpack.c.b16 %v585, %v560
  %v936 = vpack.c.b16 %v586, %v561
  %v937 = vpack.c.b16 %v587, %v562
  %v938 = vpack.c.b16 %v588, %v563
  %v939 = vpack.c.b16 %v589, %v564
  %v940 = vpack.c.b16 %v590, %v565
  %v941 = vpack.c.b16 %v591, %v566
  %v942 = vpack.c.b16 %v592, %v567
  %v943 = vpack.c.b16 %v593, %v568
  %v944 = vpack.c.b16 %v594, %v569
  %v945 = vpack.c.b16 %v595, %v570
  %v946 = vpack.c.b16 %v621, %v596
  %v947 = vpack.c.b16 %v622, %v597
  %v948 = vpack.c.b16 %v623, %v598
  %v949 = vpack.c.b16 %v624, %v599
  %v950 = vpack.c.b16 %v625, %v600
  %v951 = vpack.c.b16 %v626, %v601
  %v952 = vpack.c.b16 %v627, %v602
  %v953 = vpack.c.b16 %v628, %v603
  %v954 = vpack.c.b16 %v629, %v604
  %v955 = vpack.c.b16 %v630, %v605
  %v956 = vpack.c.b16 %v631, %v606
  %v957 = vpack.c.b16 %v632, %v607
  %v958 = vpack.c.b16 %v633, %v608
  %v959 = vpack.c.b16 %v634, %v609
  %v960 = vpack.c.b16 %v635, %v610
  %v961 = vpack.c.b16 %v636, %v611
  %v962 = vpack.c.b16 %v637, %v612
  %v963 = vpack.c.b16 %v638, %v613
  %v964 = vpack.c.b16 %v639, %v614
  %v965 = vpack.c.b16 %v640, %v615
  %v966 = vpack.c.b16 %v641, %v616
  %v967 = vpack.c.b16 %v642, %v617
  %v968 = vpack.c.b16 %v643, %v618
  %v969 = vpack.c.b16 %v644, %v619
  %v970 = vpack.c.b16 %v645, %v620
  %v971 = vpack.c.b16 %v671, %v646
  %v972 = vpack.c.b16 %v672, %v647
  %v973 = vpack.c.b16 %v673, %v648
  %v974 = vpack.c.b16 %v674, %v649
  %v975 = vpack.c.b16 %v675, %v650
  %v976 = vpack.c.b16 %v676, %v651
  %v977 = vpack.c.b16 %v677, %v652
  %v978 = vpack.c.b16 %v678, %v653
  %v979 = vpack.c.b16 %v679, %v654
  %v980 = vpack.c.b16 %v680, %v655
  %v981 = vpack.c.b16 %v681, %v656
  %v982 = vpack.c.b16 %v682, %v657
  %v983 = vpack.c.b16 %v683, %v658
  %v984 = vpack.c.b16 %v684, %v659
  %v985 = vpack.c.b16 %v685, %v660
  %v986 = vpack.c.b16 %v686, %v661
  %v987 = vpack.c.b16 %v687, %v662
  %v988 = vpack.c.b16 %v688, %v663
  %v989 = vpack.c.b16 %v689, %v664
  %v990 = vpack.c.b16 %v690, %v665
  %v991 = vpack.c.b16 %v691, %v666
  %v992 = vpack.c.b16 %v692, %v667
  %v993 = vpack.c.b16 %v693, %v668
  %v994 = vpack.c.b16 %v694, %v669
  %v995 = vpack.c.b16 %v695, %v670
  %v996 = vpack.c.b16 %v721, %v696
  %v997 = vpack.c.b16 %v722, %v697
  %v998 = vpack.c.b16 %v723, %v698
  %v999 = vpack.c.b16 %v724, %v699
  %v1000 = vpack.c.b16 %v725, %v700
  %v1001 = vpack.c.b16 %v726, %v701
  %v1002 = vpack.c.b16 %v727, %v702
  %v1003 = vpack.c.b16 %v728, %v703
  %v1004 = vpack.c.b16 %v729, %v704
  %v1005 = vpack.c.b16 %v730, %v705
  %v1006 = vpack.c.b16 %v731, %v706
  %v1007 = vpack.c.b16 %v732, %v707
  %v1008 = vpack.c.b16 %v733, %v708
  %v1009 = vpack.c.b16 %v734, %v709
  %v1010 = vpack.c.b16 %v735, %v710
  %v1011 = vpack.c.b16 %v736, %v711
  %v1012 = vpack.c.b16 %v737, %v712
  %v1013 = vpack.c.b16 %v738, %v713
  %v1014 = vpack.c.b16 %v739, %v714
  %v1015 = vpack.c.b16 %v740, %v715
  %v1016 = vpack.c.b16 %v741, %v716
  %v1017 = vpack.c.b16 %v742, %v717
  %v1018 = vpack.c.b16 %v743, %v718
  %v1019 = vpack.c.b16 %v744, %v719
  %v1020 = vpack.c.b16 %v745, %v720
  %v1021 = vpack.c.b16 %v771, %v746
  %v1022 = vpack.c.b16 %v772, %v747
  %v1023 = vpack.c.b16 %v773, %v748
  %v1024 = vpack.c.b16 %v774, %v749
  %v1025 = vpack.c.b16 %v775, %v750
  %v1026 = vpack.c.b16 %v776, %v751
  %v1027 = vpack.c.b16 %v777, %v752
  %v1028 = vpack.c.b16 %v778, %v753
  %v1029 = vpack.c.b16 %v779, %v754
  %v1030 = vpack.c.b16 %v780, %v755
  %v1031 = vpack.c.b16 %v781, %v756
  %v1032 = vpack.c.b16 %v782, %v757
  %v1033 = vpack.c.b16 %v783, %v758
  %v1034 = vpack.c.b16 %v784, %v759
  %v1035 = vpack.c.b16 %v785, %v760
  %v1036 = vpack.c.b16 %v786, %v761
  %v1037 = vpack.c.b16 %v787, %v762
  %v1038 = vpack.c.b16 %v788, %v763
  %v1039 = vpack.c.b16 %v789, %v764
  %v1040 = vpack.c.b16 %v790, %v765
  %v1041 = vpack.c.b16 %v791, %v766
  %v1042 = vpack.c.b16 %v792, %v767
  %v1043 = vpack.c.b16 %v793, %v768
  %v1044 = vpack.c.b16 %v794, %v769
  %v1045 = vpack.c.b16 %v795, %v770
  %v1046 = vpack.c.b16 %v821, %v796
  %v1047 = vpack.c.b16 %v822, %v797
  %v1048 = vpack.c.b16 %v823, %v798
  %v1049 = vpack.c.b16 %v824, %v799
  %v1050 = vpack.c.b16 %v825, %v800
  %v1051 = vpack.c.b16 %v826, %v801
  %v1052 = vpack.c.b16 %v827, %v802
  %v1053 = vpack.c.b16 %v828, %v803
  %v1054 = vpack.c.b16 %v829, %v804
  %v1055 = vpack.c.b16 %v830, %v805
  %v1056 = vpack.c.b16 %v831, %v806
  %v1057 = vpack.c.b16 %v832, %v807
  %v1058 = vpack.c.b16 %v833, %v808
  %v1059 = vpack.c.b16 %v834, %v809
  %v1060 = vpack.c.b16 %v835, %v810
  %v1061 = vpack.c.b16 %v836, %v811
  %v1062 = vpack.c.b16 %v837, %v812
  %v1063 = vpack.c.b16 %v838, %v813
  %v1064 = vpack.c.b16 %v839, %v814
  %v1065 = vpack.c.b16 %v840, %v815
  %v1066 = vpack.c.b16 %v841, %v816
  %v1067 = vpack.c.b16 %v842, %v817
  %v1068 = vpack.c.b16 %v843, %v818
  %v1069 = vpack.c.b16 %v844, %v819
  %v1070 = vpack.c.b16 %v845, %v820
  %v1071 = vpack.c.b16 %v871, %v846
  %v1072 = vpack.c.b16 %v872, %v847
  %v1073 = vpack.c.b16 %v873, %v848
  %v1074 = vpack.c.b16 %v874, %v849
  %v1075 = vpack.c.b16 %v875, %v850
  %v1076 = vpack.c.b16 %v876, %v851
  %v1077 = vpack.c.b16 %v877, %v852
  %v1078 = vpack.c.b16 %v878, %v853
  %v1079 = vpack.c.b16 %v879, %v854
  %v1080 = vpack.c.b16 %v880, %v855
  %v1081 = vpack.c.b16 %v881, %v856
  %v1082 = vpack.c.b16 %v882, %v857
  %v1083 = vpack.c.b16 %v883, %v858
  %v1084 = vpack.c.b16 %v884, %v859
  %v1085 = vpack.c.b16 %v885, %v860
  %v1086 = vpack.c.b16 %v886, %v861
  %v1087 = vpack.c.b16 %v887, %v862
  %v1088 = vpack.c.b16 %v888, %v863
  %v1089 = vpack.c.b16 %v889, %v864
  %v1090 = vpack.c.b16 %v890, %v865
  %v1091 = vpack.c.b16 %v891, %v866
  %v1092 = vpack.c.b16 %v892, %v867
  %v1093 = vpack.c.b16 %v893, %v868
  %v1094 = vpack.c.b16 %v894, %v869
  %v1095 = vpack.c.b16 %v895, %v870
  %1296 = vmatpush.bf16.msra.mxu0 %v1071
  %1297 = vmatpush.bf16.msra.mxu0 %v1046
  %1298 = vmatpush.bf16.msra.mxu0 %v1021
  %1299 = vmatpush.bf16.msra.mxu0 %v996
  %1300 = vmatpush.bf16.msra.mxu0 %v971
  %1301 = vmatpush.bf16.msra.mxu0 %v946
  %1302 = vmatpush.bf16.msra.mxu0 %v921
  %1303 = vmatpush.bf16.msra.mxu0 %v896
  %1304 = vmatmul.bf16.gmra.mxu0 %v286
  %v1305 = vpop.f32.mrf.mxu0
  %v1306 = vadd.f32 %v232, %v1305
  %v1307 = vpop.f32.mrf.mxu0
  %v1308 = vadd.f32 %v232, %v1307
  %1309 = vdwg.mxu0
  %1310 = vmatpush.bf16.msra.mxu0 %v1072
  %1311 = vmatpush.bf16.msra.mxu0 %v1047
  %1312 = vmatpush.bf16.msra.mxu0 %v1022
  %1313 = vmatpush.bf16.msra.mxu0 %v997
  %1314 = vmatpush.bf16.msra.mxu0 %v972
  %1315 = vmatpush.bf16.msra.mxu0 %v947
  %1316 = vmatpush.bf16.msra.mxu0 %v922
  %1317 = vmatpush.bf16.msra.mxu0 %v897
  %1318 = vmatmul.bf16.gmra.mxu0 %v286
  %v1319 = vpop.f32.mrf.mxu0
  %v1320 = vadd.f32 %v233, %v1319
  %v1321 = vpop.f32.mrf.mxu0
  %v1322 = vadd.f32 %v233, %v1321
  %1323 = vdwg.mxu0
  %1324 = vmatpush.bf16.msra.mxu0 %v1073
  %1325 = vmatpush.bf16.msra.mxu0 %v1048
  %1326 = vmatpush.bf16.msra.mxu0 %v1023
  %1327 = vmatpush.bf16.msra.mxu0 %v998
  %1328 = vmatpush.bf16.msra.mxu0 %v973
  %1329 = vmatpush.bf16.msra.mxu0 %v948
  %1330 = vmatpush.bf16.msra.mxu0 %v923
  %1331 = vmatpush.bf16.msra.mxu0 %v898
  %1332 = vmatmul.bf16.gmra.mxu0 %v286
  %v1333 = vpop.f32.mrf.mxu0
  %v1334 = vadd.f32 %v234, %v1333
  %v1335 = vpop.f32.mrf.mxu0
  %v1336 = vadd.f32 %v234, %v1335
  %1337 = vdwg.mxu0
  %1338 = vmatpush.bf16.msra.mxu0 %v1074
  %1339 = vmatpush.bf16.msra.mxu0 %v1049
  %1340 = vmatpush.bf16.msra.mxu0 %v1024
  %1341 = vmatpush.bf16.msra.mxu0 %v999
  %1342 = vmatpush.bf16.msra.mxu0 %v974
  %1343 = vmatpush.bf16.msra.mxu0 %v949
  %1344 = vmatpush.bf16.msra.mxu0 %v924
  %1345 = vmatpush.bf16.msra.mxu0 %v899
  %1346 = vmatmul.bf16.gmra.mxu0 %v286
  %v1347 = vpop.f32.mrf.mxu0
  %v1348 = vadd.f32 %v235, %v1347
  %v1349 = vpop.f32.mrf.mxu0
  %v1350 = vadd.f32 %v235, %v1349
  %1351 = vdwg.mxu0
  %1352 = vmatpush.bf16.msra.mxu0 %v1075
  %1353 = vmatpush.bf16.msra.mxu0 %v1050
  %1354 = vmatpush.bf16.msra.mxu0 %v1025
  %1355 = vmatpush.bf16.msra.mxu0 %v1000
  %1356 = vmatpush.bf16.msra.mxu0 %v975
  %1357 = vmatpush.bf16.msra.mxu0 %v950
  %1358 = vmatpush.bf16.msra.mxu0 %v925
  %1359 = vmatpush.bf16.msra.mxu0 %v900
  %1360 = vmatmul.bf16.gmra.mxu0 %v286
  %v1361 = vpop.f32.mrf.mxu0
  %v1362 = vadd.f32 %v236, %v1361
  %v1363 = vpop.f32.mrf.mxu0
  %v1364 = vadd.f32 %v236, %v1363
  %1365 = vdwg.mxu0
  %1366 = vmatpush.bf16.msra.mxu0 %v1076
  %1367 = vmatpush.bf16.msra.mxu0 %v1051
  %1368 = vmatpush.bf16.msra.mxu0 %v1026
  %1369 = vmatpush.bf16.msra.mxu0 %v1001
  %1370 = vmatpush.bf16.msra.mxu0 %v976
  %1371 = vmatpush.bf16.msra.mxu0 %v951
  %1372 = vmatpush.bf16.msra.mxu0 %v926
  %1373 = vmatpush.bf16.msra.mxu0 %v901
  %1374 = vmatmul.bf16.gmra.mxu0 %v286
  %v1375 = vpop.f32.mrf.mxu0
  %v1376 = vadd.f32 %v237, %v1375
  %v1377 = vpop.f32.mrf.mxu0
  %v1378 = vadd.f32 %v237, %v1377
  %1379 = vdwg.mxu0
  %1380 = vmatpush.bf16.msra.mxu0 %v1077
  %1381 = vmatpush.bf16.msra.mxu0 %v1052
  %1382 = vmatpush.bf16.msra.mxu0 %v1027
  %1383 = vmatpush.bf16.msra.mxu0 %v1002
  %1384 = vmatpush.bf16.msra.mxu0 %v977
  %1385 = vmatpush.bf16.msra.mxu0 %v952
  %1386 = vmatpush.bf16.msra.mxu0 %v927
  %1387 = vmatpush.bf16.msra.mxu0 %v902
  %1388 = vmatmul.bf16.gmra.mxu0 %v286
  %v1389 = vpop.f32.mrf.mxu0
  %v1390 = vadd.f32 %v238, %v1389
  %v1391 = vpop.f32.mrf.mxu0
  %v1392 = vadd.f32 %v238, %v1391
  %1393 = vdwg.mxu0
  %1394 = vmatpush.bf16.msra.mxu0 %v1078
  %1395 = vmatpush.bf16.msra.mxu0 %v1053
  %1396 = vmatpush.bf16.msra.mxu0 %v1028
  %1397 = vmatpush.bf16.msra.mxu0 %v1003
  %1398 = vmatpush.bf16.msra.mxu0 %v978
  %1399 = vmatpush.bf16.msra.mxu0 %v953
  %1400 = vmatpush.bf16.msra.mxu0 %v928
  %1401 = vmatpush.bf16.msra.mxu0 %v903
  %1402 = vmatmul.bf16.gmra.mxu0 %v286
  %v1403 = vpop.f32.mrf.mxu0
  %v1404 = vadd.f32 %v239, %v1403
  %v1405 = vpop.f32.mrf.mxu0
  %v1406 = vadd.f32 %v239, %v1405
  %1407 = vdwg.mxu0
  %1408 = vmatpush.bf16.msra.mxu0 %v1079
  %1409 = vmatpush.bf16.msra.mxu0 %v1054
  %1410 = vmatpush.bf16.msra.mxu0 %v1029
  %1411 = vmatpush.bf16.msra.mxu0 %v1004
  %1412 = vmatpush.bf16.msra.mxu0 %v979
  %1413 = vmatpush.bf16.msra.mxu0 %v954
  %1414 = vmatpush.bf16.msra.mxu0 %v929
  %1415 = vmatpush.bf16.msra.mxu0 %v904
  %1416 = vmatmul.bf16.gmra.mxu0 %v286
  %v1417 = vpop.f32.mrf.mxu0
  %v1418 = vadd.f32 %v240, %v1417
  %v1419 = vpop.f32.mrf.mxu0
  %v1420 = vadd.f32 %v240, %v1419
  %1421 = vdwg.mxu0
  %1422 = vmatpush.bf16.msra.mxu0 %v1080
  %1423 = vmatpush.bf16.msra.mxu0 %v1055
  %1424 = vmatpush.bf16.msra.mxu0 %v1030
  %1425 = vmatpush.bf16.msra.mxu0 %v1005
  %1426 = vmatpush.bf16.msra.mxu0 %v980
  %1427 = vmatpush.bf16.msra.mxu0 %v955
  %1428 = vmatpush.bf16.msra.mxu0 %v930
  %1429 = vmatpush.bf16.msra.mxu0 %v905
  %1430 = vmatmul.bf16.gmra.mxu0 %v286
  %v1431 = vpop.f32.mrf.mxu0
  %v1432 = vadd.f32 %v241, %v1431
  %v1433 = vpop.f32.mrf.mxu0
  %v1434 = vadd.f32 %v241, %v1433
  %1435 = vdwg.mxu0
  %1436 = vmatpush.bf16.msra.mxu0 %v1081
  %1437 = vmatpush.bf16.msra.mxu0 %v1056
  %1438 = vmatpush.bf16.msra.mxu0 %v1031
  %1439 = vmatpush.bf16.msra.mxu0 %v1006
  %1440 = vmatpush.bf16.msra.mxu0 %v981
  %1441 = vmatpush.bf16.msra.mxu0 %v956
  %1442 = vmatpush.bf16.msra.mxu0 %v931
  %1443 = vmatpush.bf16.msra.mxu0 %v906
  %1444 = vmatmul.bf16.gmra.mxu0 %v286
  %v1445 = vpop.f32.mrf.mxu0
  %v1446 = vadd.f32 %v242, %v1445
  %v1447 = vpop.f32.mrf.mxu0
  %v1448 = vadd.f32 %v242, %v1447
  %1449 = vdwg.mxu0
  %1450 = vmatpush.bf16.msra.mxu0 %v1082
  %1451 = vmatpush.bf16.msra.mxu0 %v1057
  %1452 = vmatpush.bf16.msra.mxu0 %v1032
  %1453 = vmatpush.bf16.msra.mxu0 %v1007
  %1454 = vmatpush.bf16.msra.mxu0 %v982
  %1455 = vmatpush.bf16.msra.mxu0 %v957
  %1456 = vmatpush.bf16.msra.mxu0 %v932
  %1457 = vmatpush.bf16.msra.mxu0 %v907
  %1458 = vmatmul.bf16.gmra.mxu0 %v286
  %v1459 = vpop.f32.mrf.mxu0
  %v1460 = vadd.f32 %v243, %v1459
  %v1461 = vpop.f32.mrf.mxu0
  %v1462 = vadd.f32 %v243, %v1461
  %1463 = vdwg.mxu0
  %1464 = vmatpush.bf16.msra.mxu0 %v1083
  %1465 = vmatpush.bf16.msra.mxu0 %v1058
  %1466 = vmatpush.bf16.msra.mxu0 %v1033
  %1467 = vmatpush.bf16.msra.mxu0 %v1008
  %1468 = vmatpush.bf16.msra.mxu0 %v983
  %1469 = vmatpush.bf16.msra.mxu0 %v958
  %1470 = vmatpush.bf16.msra.mxu0 %v933
  %1471 = vmatpush.bf16.msra.mxu0 %v908
  %1472 = vmatmul.bf16.gmra.mxu0 %v286
  %v1473 = vpop.f32.mrf.mxu0
  %v1474 = vadd.f32 %v244, %v1473
  %v1475 = vpop.f32.mrf.mxu0
  %v1476 = vadd.f32 %v244, %v1475
  %1477 = vdwg.mxu0
  %1478 = vmatpush.bf16.msra.mxu0 %v1084
  %1479 = vmatpush.bf16.msra.mxu0 %v1059
  %1480 = vmatpush.bf16.msra.mxu0 %v1034
  %1481 = vmatpush.bf16.msra.mxu0 %v1009
  %1482 = vmatpush.bf16.msra.mxu0 %v984
  %1483 = vmatpush.bf16.msra.mxu0 %v959
  %1484 = vmatpush.bf16.msra.mxu0 %v934
  %1485 = vmatpush.bf16.msra.mxu0 %v909
  %1486 = vmatmul.bf16.gmra.mxu0 %v286
  %v1487 = vpop.f32.mrf.mxu0
  %v1488 = vadd.f32 %v245, %v1487
  %v1489 = vpop.f32.mrf.mxu0
  %v1490 = vadd.f32 %v245, %v1489
  %1491 = vdwg.mxu0
  %1492 = vmatpush.bf16.msra.mxu0 %v1085
  %1493 = vmatpush.bf16.msra.mxu0 %v1060
  %1494 = vmatpush.bf16.msra.mxu0 %v1035
  %1495 = vmatpush.bf16.msra.mxu0 %v1010
  %1496 = vmatpush.bf16.msra.mxu0 %v985
  %1497 = vmatpush.bf16.msra.mxu0 %v960
  %1498 = vmatpush.bf16.msra.mxu0 %v935
  %1499 = vmatpush.bf16.msra.mxu0 %v910
  %1500 = vmatmul.bf16.gmra.mxu0 %v286
  %v1501 = vpop.f32.mrf.mxu0
  %v1502 = vadd.f32 %v246, %v1501
  %v1503 = vpop.f32.mrf.mxu0
  %v1504 = vadd.f32 %v246, %v1503
  %1505 = vdwg.mxu0
  %1506 = vmatpush.bf16.msra.mxu0 %v1086
  %1507 = vmatpush.bf16.msra.mxu0 %v1061
  %1508 = vmatpush.bf16.msra.mxu0 %v1036
  %1509 = vmatpush.bf16.msra.mxu0 %v1011
  %1510 = vmatpush.bf16.msra.mxu0 %v986
  %1511 = vmatpush.bf16.msra.mxu0 %v961
  %1512 = vmatpush.bf16.msra.mxu0 %v936
  %1513 = vmatpush.bf16.msra.mxu0 %v911
  %1514 = vmatmul.bf16.gmra.mxu0 %v286
  %v1515 = vpop.f32.mrf.mxu0
  %v1516 = vadd.f32 %v247, %v1515
  %v1517 = vpop.f32.mrf.mxu0
  %v1518 = vadd.f32 %v247, %v1517
  %1519 = vdwg.mxu0
  %1520 = vmatpush.bf16.msra.mxu0 %v1087
  %1521 = vmatpush.bf16.msra.mxu0 %v1062
  %1522 = vmatpush.bf16.msra.mxu0 %v1037
  %1523 = vmatpush.bf16.msra.mxu0 %v1012
  %1524 = vmatpush.bf16.msra.mxu0 %v987
  %1525 = vmatpush.bf16.msra.mxu0 %v962
  %1526 = vmatpush.bf16.msra.mxu0 %v937
  %1527 = vmatpush.bf16.msra.mxu0 %v912
  %1528 = vmatmul.bf16.gmra.mxu0 %v286
  %v1529 = vpop.f32.mrf.mxu0
  %v1530 = vadd.f32 %v248, %v1529
  %v1531 = vpop.f32.mrf.mxu0
  %v1532 = vadd.f32 %v248, %v1531
  %1533 = vdwg.mxu0
  %1534 = vmatpush.bf16.msra.mxu0 %v1088
  %1535 = vmatpush.bf16.msra.mxu0 %v1063
  %1536 = vmatpush.bf16.msra.mxu0 %v1038
  %1537 = vmatpush.bf16.msra.mxu0 %v1013
  %1538 = vmatpush.bf16.msra.mxu0 %v988
  %1539 = vmatpush.bf16.msra.mxu0 %v963
  %1540 = vmatpush.bf16.msra.mxu0 %v938
  %1541 = vmatpush.bf16.msra.mxu0 %v913
  %1542 = vmatmul.bf16.gmra.mxu0 %v286
  %v1543 = vpop.f32.mrf.mxu0
  %v1544 = vadd.f32 %v249, %v1543
  %v1545 = vpop.f32.mrf.mxu0
  %v1546 = vadd.f32 %v249, %v1545
  %1547 = vdwg.mxu0
  %1548 = vmatpush.bf16.msra.mxu0 %v1089
  %1549 = vmatpush.bf16.msra.mxu0 %v1064
  %1550 = vmatpush.bf16.msra.mxu0 %v1039
  %1551 = vmatpush.bf16.msra.mxu0 %v1014
  %1552 = vmatpush.bf16.msra.mxu0 %v989
  %1553 = vmatpush.bf16.msra.mxu0 %v964
  %1554 = vmatpush.bf16.msra.mxu0 %v939
  %1555 = vmatpush.bf16.msra.mxu0 %v914
  %1556 = vmatmul.bf16.gmra.mxu0 %v286
  %v1557 = vpop.f32.mrf.mxu0
  %v1558 = vadd.f32 %v250, %v1557
  %v1559 = vpop.f32.mrf.mxu0
  %v1560 = vadd.f32 %v250, %v1559
  %1561 = vdwg.mxu0
  %1562 = vmatpush.bf16.msra.mxu0 %v1090
  %1563 = vmatpush.bf16.msra.mxu0 %v1065
  %1564 = vmatpush.bf16.msra.mxu0 %v1040
  %1565 = vmatpush.bf16.msra.mxu0 %v1015
  %1566 = vmatpush.bf16.msra.mxu0 %v990
  %1567 = vmatpush.bf16.msra.mxu0 %v965
  %1568 = vmatpush.bf16.msra.mxu0 %v940
  %1569 = vmatpush.bf16.msra.mxu0 %v915
  %1570 = vmatmul.bf16.gmra.mxu0 %v286
  %v1571 = vpop.f32.mrf.mxu0
  %v1572 = vadd.f32 %v251, %v1571
  %v1573 = vpop.f32.mrf.mxu0
  %v1574 = vadd.f32 %v251, %v1573
  %1575 = vdwg.mxu0
  %1576 = vmatpush.bf16.msra.mxu0 %v1091
  %1577 = vmatpush.bf16.msra.mxu0 %v1066
  %1578 = vmatpush.bf16.msra.mxu0 %v1041
  %1579 = vmatpush.bf16.msra.mxu0 %v1016
  %1580 = vmatpush.bf16.msra.mxu0 %v991
  %1581 = vmatpush.bf16.msra.mxu0 %v966
  %1582 = vmatpush.bf16.msra.mxu0 %v941
  %1583 = vmatpush.bf16.msra.mxu0 %v916
  %1584 = vmatmul.bf16.gmra.mxu0 %v286
  %v1585 = vpop.f32.mrf.mxu0
  %v1586 = vadd.f32 %v252, %v1585
  %v1587 = vpop.f32.mrf.mxu0
  %v1588 = vadd.f32 %v252, %v1587
  %1589 = vdwg.mxu0
  %1590 = vmatpush.bf16.msra.mxu0 %v1092
  %1591 = vmatpush.bf16.msra.mxu0 %v1067
  %1592 = vmatpush.bf16.msra.mxu0 %v1042
  %1593 = vmatpush.bf16.msra.mxu0 %v1017
  %1594 = vmatpush.bf16.msra.mxu0 %v992
  %1595 = vmatpush.bf16.msra.mxu0 %v967
  %1596 = vmatpush.bf16.msra.mxu0 %v942
  %1597 = vmatpush.bf16.msra.mxu0 %v917
  %1598 = vmatmul.bf16.gmra.mxu0 %v286
  %v1599 = vpop.f32.mrf.mxu0
  %v1600 = vadd.f32 %v253, %v1599
  %v1601 = vpop.f32.mrf.mxu0
  %v1602 = vadd.f32 %v253, %v1601
  %1603 = vdwg.mxu0
  %1604 = vmatpush.bf16.msra.mxu0 %v1093
  %1605 = vmatpush.bf16.msra.mxu0 %v1068
  %1606 = vmatpush.bf16.msra.mxu0 %v1043
  %1607 = vmatpush.bf16.msra.mxu0 %v1018
  %1608 = vmatpush.bf16.msra.mxu0 %v993
  %1609 = vmatpush.bf16.msra.mxu0 %v968
  %1610 = vmatpush.bf16.msra.mxu0 %v943
  %1611 = vmatpush.bf16.msra.mxu0 %v918
  %1612 = vmatmul.bf16.gmra.mxu0 %v286
  %v1613 = vpop.f32.mrf.mxu0
  %v1614 = vadd.f32 %v254, %v1613
  %v1615 = vpop.f32.mrf.mxu0
  %v1616 = vadd.f32 %v254, %v1615
  %1617 = vdwg.mxu0
  %1618 = vmatpush.bf16.msra.mxu0 %v1094
  %1619 = vmatpush.bf16.msra.mxu0 %v1069
  %1620 = vmatpush.bf16.msra.mxu0 %v1044
  %1621 = vmatpush.bf16.msra.mxu0 %v1019
  %1622 = vmatpush.bf16.msra.mxu0 %v994
  %1623 = vmatpush.bf16.msra.mxu0 %v969
  %1624 = vmatpush.bf16.msra.mxu0 %v944
  %1625 = vmatpush.bf16.msra.mxu0 %v919
  %1626 = vmatmul.bf16.gmra.mxu0 %v286
  %v1627 = vpop.f32.mrf.mxu0
  %v1628 = vadd.f32 %v255, %v1627
  %v1629 = vpop.f32.mrf.mxu0
  %v1630 = vadd.f32 %v255, %v1629
  %1631 = vdwg.mxu0
  %1632 = vmatpush.bf16.msra.mxu0 %v1095
  %1633 = vmatpush.bf16.msra.mxu0 %v1070
  %1634 = vmatpush.bf16.msra.mxu0 %v1045
  %1635 = vmatpush.bf16.msra.mxu0 %v1020
  %1636 = vmatpush.bf16.msra.mxu0 %v995
  %1637 = vmatpush.bf16.msra.mxu0 %v970
  %1638 = vmatpush.bf16.msra.mxu0 %v945
  %1639 = vmatpush.bf16.msra.mxu0 %v920
  %1640 = vmatmul.bf16.gmra.mxu0 %v286
  %v1641 = vpop.f32.mrf.mxu0
  %v1642 = vadd.f32 %v256, %v1641
  %v1643 = vpop.f32.mrf.mxu0
  %v1644 = vadd.f32 %v256, %v1643
  %1645 = vdwg.mxu0
  %1646 = vst [vmem:[%s3] sm:$0xff] %v1306
  %1647 = vst [vmem:[%s3 + $0x8] sm:$0xff] %v1320
  %1648 = vst [vmem:[%s3 + $0x10] sm:$0xff] %v1334
  %1649 = vst [vmem:[%s3 + $0x18] sm:$0xff] %v1348
  %1650 = vst [vmem:[%s3 + $0x20] sm:$0xff] %v1362
  %1651 = vst [vmem:[%s3 + $0x28] sm:$0xff] %v1376
  %1652 = vst [vmem:[%s3 + $0x30] sm:$0xff] %v1390
  %1653 = vst [vmem:[%s3 + $0x38] sm:$0xff] %v1404
  %1654 = vst [vmem:[%s3 + $0x40] sm:$0xff] %v1418
  %1655 = vst [vmem:[%s3 + $0x48] sm:$0xff] %v1432
  %1656 = vst [vmem:[%s3 + $0x50] sm:$0xff] %v1446
  %1657 = vst [vmem:[%s3 + $0x58] sm:$0xff] %v1460
  %1658 = vst [vmem:[%s3 + $0x60] sm:$0xff] %v1474
  %1659 = vst [vmem:[%s3 + $0x68] sm:$0xff] %v1488
  %1660 = vst [vmem:[%s3 + $0x70] sm:$0xff] %v1502
  %1661 = vst [vmem:[%s3 + $0x78] sm:$0xff] %v1516
  %1662 = vst [vmem:[%s3 + $0x80] sm:$0xff] %v1530
  %1663 = vst [vmem:[%s3 + $0x88] sm:$0xff] %v1544
  %1664 = vst [vmem:[%s3 + $0x90] sm:$0xff] %v1558
  %1665 = vst [vmem:[%s3 + $0x98] sm:$0xff] %v1572
  %1666 = vst [vmem:[%s3 + $0xa0] sm:$0xff] %v1586
  %1667 = vst [vmem:[%s3 + $0xa8] sm:$0xff] %v1600
  %1668 = vst [vmem:[%s3 + $0xb0] sm:$0xff] %v1614
  %1669 = vst [vmem:[%s3 + $0xb8] sm:$0xff] %v1628
  %1670 = vst [vmem:[%s3 + $0xc0] sm:$0xff] %v1642
  %1671 = vst [vmem:[%s3 + $0xc8] sm:$0xff] %v1308
  %1672 = vst [vmem:[%s3 + $0xd0] sm:$0xff] %v1322
  %1673 = vst [vmem:[%s3 + $0xd8] sm:$0xff] %v1336
  %1674 = vst [vmem:[%s3 + $0xe0] sm:$0xff] %v1350
  %1675 = vst [vmem:[%s3 + $0xe8] sm:$0xff] %v1364
  %1676 = vst [vmem:[%s3 + $0xf0] sm:$0xff] %v1378
  %1677 = vst [vmem:[%s3 + $0xf8] sm:$0xff] %v1392
  %1678 = vst [vmem:[%s3 + $0x100] sm:$0xff] %v1406
  %1679 = vst [vmem:[%s3 + $0x108] sm:$0xff] %v1420
  %1680 = vst [vmem:[%s3 + $0x110] sm:$0xff] %v1434
  %1681 = vst [vmem:[%s3 + $0x118] sm:$0xff] %v1448
  %1682 = vst [vmem:[%s3 + $0x120] sm:$0xff] %v1462
  %1683 = vst [vmem:[%s3 + $0x128] sm:$0xff] %v1476
  %1684 = vst [vmem:[%s3 + $0x130] sm:$0xff] %v1490
  %1685 = vst [vmem:[%s3 + $0x138] sm:$0xff] %v1504
  %1686 = vst [vmem:[%s3 + $0x140] sm:$0xff] %v1518
  %1687 = vst [vmem:[%s3 + $0x148] sm:$0xff] %v1532
  %1688 = vst [vmem:[%s3 + $0x150] sm:$0xff] %v1546
  %1689 = vst [vmem:[%s3 + $0x158] sm:$0xff] %v1560
  %1690 = vst [vmem:[%s3 + $0x160] sm:$0xff] %v1574
  %1691 = vst [vmem:[%s3 + $0x168] sm:$0xff] %v1588
  %1692 = vst [vmem:[%s3 + $0x170] sm:$0xff] %v1602
  %1693 = vst [vmem:[%s3 + $0x178] sm:$0xff] %v1616
  %1694 = vst [vmem:[%s3 + $0x180] sm:$0xff] %v1630
  %1695 = vst [vmem:[%s3 + $0x188] sm:$0xff] %v1644
  // Predicated region
  $region14: #{vae_forward.9} parent=0 // pred_check
    _
  $region15: #{vae_forward.9} parent=0 // pred_check_branch
    %1697 = sbr.rel (0) target = $region17
  $region16: #{vae_forward.9} parent=0 // pred_region
    _
  $region17: #{vae_forward.9} parent=0 // pred_fallthru
    _
  // Predicated region
  $region18: #{vae_forward.9} parent=0 // pred_check
    _
  $region19: #{vae_forward.9} parent=0 // pred_check_branch
    %1699 = sbr.rel (0) target = $region21
  $region20: #{vae_forward.9} parent=0 // pred_region
    _
  $region21: #{vae_forward.9} parent=0 // pred_fallthru
    _

// kernel: vae_forward.10
$region0: #{vae_forward.10}
  #allocation0 [shape = 'u32[]', space=smem, size = 0x4, offset = 0x4, fixed_abs, tag = 'smem constant byte address 0x4 - core index']
  #allocation1 [shape = 'u32[72,128]{1,0:T(1,128)}', space=vmem, size = 0x9000, scoped, tag = 'internal scratch']
  %s0 = inlined_call_operand.vmem [shape: bf16[128,256], index: 0, kind: input, shape index: {}]
  %s1 = inlined_call_operand.vmem [shape: bf16[256,128], index: 1, kind: input, shape index: {}]
  %s2 = inlined_call_operand.vmem [shape: f32[1,128], index: 2, kind: input, shape index: {}]
  %s3 = inlined_call_operand.vmem [shape: f32[128,128], index: 3, kind: output, shape index: {}]
  %s4 = sld [smem:[#allocation0]]
  $region22: #{vae_forward.10} parent=0
    _
  %s6 = ssub.s32 1, %s4
  %s7 = scalar_select 0, %s6, %s4
  // Predicated region
  $region2: #{vae_forward.10} parent=0 // pred_check
    _
  $region3: #{vae_forward.10} parent=0 // pred_check_branch
    %9 = sbr.rel (0) target = $region5
  $region4: #{vae_forward.10} parent=0 // pred_region
    _
  $region5: #{vae_forward.10} parent=0 // pred_fallthru
    _
  // Predicated region
  $region6: #{vae_forward.10} parent=0 // pred_check
    _
  $region7: #{vae_forward.10} parent=0 // pred_check_branch
    %11 = sbr.rel (0) target = $region9
  $region8: #{vae_forward.10} parent=0 // pred_region
    _
  $region9: #{vae_forward.10} parent=0 // pred_fallthru
    _
  // Predicated region
  $region10: #{vae_forward.10} parent=0 // pred_check
    _
  $region11: #{vae_forward.10} parent=0 // pred_check_branch
    %13 = sbr.rel (0) target = $region13
  $region12: #{vae_forward.10} parent=0 // pred_region
    _
  $region13: #{vae_forward.10} parent=0 // pred_fallthru
    _
  %v14 = vld [vmem:[%s0] sm:$0xff]
  %v15 = vld [vmem:[%s0 + $0x8] sm:$0xff]
  %v16 = vld [vmem:[%s0 + $0x10] sm:$0xff]
  %v17 = vld [vmem:[%s0 + $0x18] sm:$0xff]
  %v18 = vld [vmem:[%s0 + $0x20] sm:$0xff]
  %v19 = vld [vmem:[%s0 + $0x28] sm:$0xff]
  %v20 = vld [vmem:[%s0 + $0x30] sm:$0xff]
  %v21 = vld [vmem:[%s0 + $0x38] sm:$0xff]
  %v22 = vld [vmem:[%s0 + $0x40] sm:$0xff]
  %v23 = vld [vmem:[%s0 + $0x48] sm:$0xff]
  %v24 = vld [vmem:[%s0 + $0x50] sm:$0xff]
  %v25 = vld [vmem:[%s0 + $0x58] sm:$0xff]
  %v26 = vld [vmem:[%s0 + $0x60] sm:$0xff]
  %v27 = vld [vmem:[%s0 + $0x68] sm:$0xff]
  %v28 = vld [vmem:[%s0 + $0x70] sm:$0xff]
  %v29 = vld [vmem:[%s0 + $0x78] sm:$0xff]
  %v30 = vld [vmem:[%s1] sm:$0xf]
  %v31 = vld [vmem:[%s1 + $0x4] sm:$0xf]
  %v32 = vld [vmem:[%s1 + $0x8] sm:$0xf]
  %v33 = vld [vmem:[%s1 + $0xc] sm:$0xf]
  %v34 = vld [vmem:[%s1 + $0x10] sm:$0xf]
  %v35 = vld [vmem:[%s1 + $0x14] sm:$0xf]
  %v36 = vld [vmem:[%s1 + $0x18] sm:$0xf]
  %v37 = vld [vmem:[%s1 + $0x1c] sm:$0xf]
  %v38 = vld [vmem:[%s1 + $0x20] sm:$0xf]
  %v39 = vld [vmem:[%s1 + $0x24] sm:$0xf]
  %v40 = vld [vmem:[%s1 + $0x28] sm:$0xf]
  %v41 = vld [vmem:[%s1 + $0x2c] sm:$0xf]
  %v42 = vld [vmem:[%s1 + $0x30] sm:$0xf]
  %v43 = vld [vmem:[%s1 + $0x34] sm:$0xf]
  %v44 = vld [vmem:[%s1 + $0x38] sm:$0xf]
  %v45 = vld [vmem:[%s1 + $0x3c] sm:$0xf]
  %v46 = vld [vmem:[%s1 + $0x40] sm:$0xf]
  %v47 = vld [vmem:[%s1 + $0x44] sm:$0xf]
  %v48 = vld [vmem:[%s1 + $0x48] sm:$0xf]
  %v49 = vld [vmem:[%s1 + $0x4c] sm:$0xf]
  %v50 = vld [vmem:[%s1 + $0x50] sm:$0xf]
  %v51 = vld [vmem:[%s1 + $0x54] sm:$0xf]
  %v52 = vld [vmem:[%s1 + $0x58] sm:$0xf]
  %v53 = vld [vmem:[%s1 + $0x5c] sm:$0xf]
  %v54 = vld [vmem:[%s1 + $0x60] sm:$0xf]
  %v55 = vld [vmem:[%s1 + $0x64] sm:$0xf]
  %v56 = vld [vmem:[%s1 + $0x68] sm:$0xf]
  %v57 = vld [vmem:[%s1 + $0x6c] sm:$0xf]
  %v58 = vld [vmem:[%s1 + $0x70] sm:$0xf]
  %v59 = vld [vmem:[%s1 + $0x74] sm:$0xf]
  %v60 = vld [vmem:[%s1 + $0x78] sm:$0xf]
  %v61 = vld [vmem:[%s1 + $0x7c] sm:$0xf]
  %v62 = vld [vmem:[%s2] sm:$0x1]
  %v64 = vperm.slane %v62, 0
  %v82 = vunpack.c.l.b16 %v14
  %v83 = vunpack.c.h.b16 %v14
  %v84 = vunpack.c.l.b16 %v15
  %v85 = vunpack.c.h.b16 %v15
  %v86 = vunpack.c.l.b16 %v16
  %v87 = vunpack.c.h.b16 %v16
  %v88 = vunpack.c.l.b16 %v17
  %v89 = vunpack.c.h.b16 %v17
  %v90 = vunpack.c.l.b16 %v18
  %v91 = vunpack.c.h.b16 %v18
  %v92 = vunpack.c.l.b16 %v19
  %v93 = vunpack.c.h.b16 %v19
  %v94 = vunpack.c.l.b16 %v20
  %v95 = vunpack.c.h.b16 %v20
  %v96 = vunpack.c.l.b16 %v21
  %v97 = vunpack.c.h.b16 %v21
  %v98 = vunpack.c.l.b16 %v22
  %v99 = vunpack.c.h.b16 %v22
  %v100 = vunpack.c.l.b16 %v23
  %v101 = vunpack.c.h.b16 %v23
  %v102 = vunpack.c.l.b16 %v24
  %v103 = vunpack.c.h.b16 %v24
  %v104 = vunpack.c.l.b16 %v25
  %v105 = vunpack.c.h.b16 %v25
  %v106 = vunpack.c.l.b16 %v26
  %v107 = vunpack.c.h.b16 %v26
  %v108 = vunpack.c.l.b16 %v27
  %v109 = vunpack.c.h.b16 %v27
  %v110 = vunpack.c.l.b16 %v28
  %v111 = vunpack.c.h.b16 %v28
  %v112 = vunpack.c.l.b16 %v29
  %v113 = vunpack.c.h.b16 %v29
  %v114 = vpack.c.b16 %v84, %v82
  %v115 = vpack.c.b16 %v85, %v83
  %v116 = vpack.c.b16 %v88, %v86
  %v117 = vpack.c.b16 %v89, %v87
  %v118 = vpack.c.b16 %v92, %v90
  %v119 = vpack.c.b16 %v93, %v91
  %v120 = vpack.c.b16 %v96, %v94
  %v121 = vpack.c.b16 %v97, %v95
  %v122 = vpack.c.b16 %v100, %v98
  %v123 = vpack.c.b16 %v101, %v99
  %v124 = vpack.c.b16 %v104, %v102
  %v125 = vpack.c.b16 %v105, %v103
  %v126 = vpack.c.b16 %v108, %v106
  %v127 = vpack.c.b16 %v109, %v107
  %v128 = vpack.c.b16 %v112, %v110
  %v129 = vpack.c.b16 %v113, %v111
  %v178 = vunpack.c.l.b16 %v30
  %v179 = vunpack.c.l.b16 %v31
  %v180 = vunpack.c.l.b16 %v32
  %v181 = vunpack.c.l.b16 %v33
  %v182 = vunpack.c.l.b16 %v34
  %v183 = vunpack.c.l.b16 %v35
  %v184 = vunpack.c.l.b16 %v36
  %v185 = vunpack.c.l.b16 %v37
  %v186 = vunpack.c.l.b16 %v38
  %v187 = vunpack.c.l.b16 %v39
  %v188 = vunpack.c.l.b16 %v40
  %v189 = vunpack.c.l.b16 %v41
  %v190 = vunpack.c.l.b16 %v42
  %v191 = vunpack.c.l.b16 %v43
  %v192 = vunpack.c.l.b16 %v44
  %v193 = vunpack.c.l.b16 %v45
  %v194 = vunpack.c.l.b16 %v46
  %v195 = vunpack.c.l.b16 %v47
  %v196 = vunpack.c.l.b16 %v48
  %v197 = vunpack.c.l.b16 %v49
  %v198 = vunpack.c.l.b16 %v50
  %v199 = vunpack.c.l.b16 %v51
  %v200 = vunpack.c.l.b16 %v52
  %v201 = vunpack.c.l.b16 %v53
  %v202 = vunpack.c.l.b16 %v54
  %v203 = vunpack.c.l.b16 %v55
  %v204 = vunpack.c.l.b16 %v56
  %v205 = vunpack.c.l.b16 %v57
  %v206 = vunpack.c.l.b16 %v58
  %v207 = vunpack.c.l.b16 %v59
  %v208 = vunpack.c.l.b16 %v60
  %v209 = vunpack.c.l.b16 %v61
  %v210 = vpack.c.b16 %v179, %v178
  %v211 = vpack.c.b16 %v181, %v180
  %v212 = vpack.c.b16 %v183, %v182
  %v213 = vpack.c.b16 %v185, %v184
  %v214 = vpack.c.b16 %v187, %v186
  %v215 = vpack.c.b16 %v189, %v188
  %v216 = vpack.c.b16 %v191, %v190
  %v217 = vpack.c.b16 %v193, %v192
  %v218 = vpack.c.b16 %v195, %v194
  %v219 = vpack.c.b16 %v197, %v196
  %v220 = vpack.c.b16 %v199, %v198
  %v221 = vpack.c.b16 %v201, %v200
  %v222 = vpack.c.b16 %v203, %v202
  %v223 = vpack.c.b16 %v205, %v204
  %v224 = vpack.c.b16 %v207, %v206
  %v225 = vpack.c.b16 %v209, %v208
  %242 = vmatpush.bf16.msra.mxu0 %v217
  %243 = vmatpush.bf16.msra.mxu0 %v216
  %244 = vmatpush.bf16.msra.mxu0 %v215
  %245 = vmatpush.bf16.msra.mxu0 %v214
  %246 = vmatpush.bf16.msra.mxu0 %v213
  %247 = vmatpush.bf16.msra.mxu0 %v212
  %248 = vmatpush.bf16.msra.mxu0 %v211
  %249 = vmatpush.bf16.msra.mxu0 %v210
  %250 = vmatmul.bf16.gmra.mxu0 %v114
  %v251 = vpop.f32.mrf.mxu0
  %v252 = vadd.f32 %v64, %v251
  %v253 = vpop.f32.mrf.mxu0
  %v254 = vadd.f32 %v64, %v253
  %255 = vmatmul.bf16.gmra.mxu0 %v116
  %v256 = vpop.f32.mrf.mxu0
  %v257 = vadd.f32 %v64, %v256
  %v258 = vpop.f32.mrf.mxu0
  %v259 = vadd.f32 %v64, %v258
  %260 = vmatmul.bf16.gmra.mxu0 %v118
  %v261 = vpop.f32.mrf.mxu0
  %v262 = vadd.f32 %v64, %v261
  %v263 = vpop.f32.mrf.mxu0
  %v264 = vadd.f32 %v64, %v263
  %265 = vmatmul.bf16.gmra.mxu0 %v120
  %v266 = vpop.f32.mrf.mxu0
  %v267 = vadd.f32 %v64, %v266
  %v268 = vpop.f32.mrf.mxu0
  %v269 = vadd.f32 %v64, %v268
  %270 = vmatmul.bf16.gmra.mxu0 %v122
  %v271 = vpop.f32.mrf.mxu0
  %v272 = vadd.f32 %v64, %v271
  %v273 = vpop.f32.mrf.mxu0
  %v274 = vadd.f32 %v64, %v273
  %275 = vmatmul.bf16.gmra.mxu0 %v124
  %v276 = vpop.f32.mrf.mxu0
  %v277 = vadd.f32 %v64, %v276
  %v278 = vpop.f32.mrf.mxu0
  %v279 = vadd.f32 %v64, %v278
  %280 = vmatmul.bf16.gmra.mxu0 %v126
  %v281 = vpop.f32.mrf.mxu0
  %v282 = vadd.f32 %v64, %v281
  %v283 = vpop.f32.mrf.mxu0
  %v284 = vadd.f32 %v64, %v283
  %285 = vmatmul.bf16.gmra.mxu0 %v128
  %v286 = vpop.f32.mrf.mxu0
  %v287 = vadd.f32 %v64, %v286
  %v288 = vpop.f32.mrf.mxu0
  %v289 = vadd.f32 %v64, %v288
  %290 = vdwg.mxu0
  %291 = vmatpush.bf16.msra.mxu0 %v225
  %292 = vmatpush.bf16.msra.mxu0 %v224
  %293 = vmatpush.bf16.msra.mxu0 %v223
  %294 = vmatpush.bf16.msra.mxu0 %v222
  %295 = vmatpush.bf16.msra.mxu0 %v221
  %296 = vmatpush.bf16.msra.mxu0 %v220
  %297 = vmatpush.bf16.msra.mxu0 %v219
  %298 = vmatpush.bf16.msra.mxu0 %v218
  %299 = vmatmul.bf16.gmra.mxu0 %v115
  %v300 = vpop.f32.mrf.mxu0
  %v301 = vadd.f32 %v252, %v300
  %v302 = vpop.f32.mrf.mxu0
  %v303 = vadd.f32 %v254, %v302
  %304 = vmatmul.bf16.gmra.mxu0 %v117
  %v305 = vpop.f32.mrf.mxu0
  %v306 = vadd.f32 %v257, %v305
  %v307 = vpop.f32.mrf.mxu0
  %v308 = vadd.f32 %v259, %v307
  %309 = vmatmul.bf16.gmra.mxu0 %v119
  %v310 = vpop.f32.mrf.mxu0
  %v311 = vadd.f32 %v262, %v310
  %v312 = vpop.f32.mrf.mxu0
  %v313 = vadd.f32 %v264, %v312
  %314 = vmatmul.bf16.gmra.mxu0 %v121
  %v315 = vpop.f32.mrf.mxu0
  %v316 = vadd.f32 %v267, %v315
  %v317 = vpop.f32.mrf.mxu0
  %v318 = vadd.f32 %v269, %v317
  %319 = vmatmul.bf16.gmra.mxu0 %v123
  %v320 = vpop.f32.mrf.mxu0
  %v321 = vadd.f32 %v272, %v320
  %v322 = vpop.f32.mrf.mxu0
  %v323 = vadd.f32 %v274, %v322
  %324 = vmatmul.bf16.gmra.mxu0 %v125
  %v325 = vpop.f32.mrf.mxu0
  %v326 = vadd.f32 %v277, %v325
  %v327 = vpop.f32.mrf.mxu0
  %v328 = vadd.f32 %v279, %v327
  %329 = vmatmul.bf16.gmra.mxu0 %v127
  %v330 = vpop.f32.mrf.mxu0
  %v331 = vadd.f32 %v282, %v330
  %v332 = vpop.f32.mrf.mxu0
  %v333 = vadd.f32 %v284, %v332
  %334 = vmatmul.bf16.gmra.mxu0 %v129
  %v335 = vpop.f32.mrf.mxu0
  %v336 = vadd.f32 %v287, %v335
  %v337 = vpop.f32.mrf.mxu0
  %v338 = vadd.f32 %v289, %v337
  %339 = vdwg.mxu0
  %v340 = vmax.f32 %v301, 0.0
  %v341 = vmax.f32 %v303, 0.0
  %v342 = vmax.f32 %v306, 0.0
  %v343 = vmax.f32 %v308, 0.0
  %v344 = vmax.f32 %v311, 0.0
  %v345 = vmax.f32 %v313, 0.0
  %v346 = vmax.f32 %v316, 0.0
  %v347 = vmax.f32 %v318, 0.0
  %v348 = vmax.f32 %v321, 0.0
  %v349 = vmax.f32 %v323, 0.0
  %v350 = vmax.f32 %v326, 0.0
  %v351 = vmax.f32 %v328, 0.0
  %v352 = vmax.f32 %v331, 0.0
  %v353 = vmax.f32 %v333, 0.0
  %v354 = vmax.f32 %v336, 0.0
  %v355 = vmax.f32 %v338, 0.0
  %356 = vst [vmem:[%s3] sm:$0xff] %v340
  %357 = vst [vmem:[%s3 + $0x8] sm:$0xff] %v341
  %358 = vst [vmem:[%s3 + $0x10] sm:$0xff] %v342
  %359 = vst [vmem:[%s3 + $0x18] sm:$0xff] %v343
  %360 = vst [vmem:[%s3 + $0x20] sm:$0xff] %v344
  %361 = vst [vmem:[%s3 + $0x28] sm:$0xff] %v345
  %362 = vst [vmem:[%s3 + $0x30] sm:$0xff] %v346
  %363 = vst [vmem:[%s3 + $0x38] sm:$0xff] %v347
  %364 = vst [vmem:[%s3 + $0x40] sm:$0xff] %v348
  %365 = vst [vmem:[%s3 + $0x48] sm:$0xff] %v349
  %366 = vst [vmem:[%s3 + $0x50] sm:$0xff] %v350
  %367 = vst [vmem:[%s3 + $0x58] sm:$0xff] %v351
  %368 = vst [vmem:[%s3 + $0x60] sm:$0xff] %v352
  %369 = vst [vmem:[%s3 + $0x68] sm:$0xff] %v353
  %370 = vst [vmem:[%s3 + $0x70] sm:$0xff] %v354
  %371 = vst [vmem:[%s3 + $0x78] sm:$0xff] %v355
  // Predicated region
  $region14: #{vae_forward.10} parent=0 // pred_check
    _
  $region15: #{vae_forward.10} parent=0 // pred_check_branch
    %373 = sbr.rel (0) target = $region17
  $region16: #{vae_forward.10} parent=0 // pred_region
    _
  $region17: #{vae_forward.10} parent=0 // pred_fallthru
    _
  // Predicated region
  $region18: #{vae_forward.10} parent=0 // pred_check
    _
  $region19: #{vae_forward.10} parent=0 // pred_check_branch
    %375 = sbr.rel (0) target = $region21
  $region20: #{vae_forward.10} parent=0 // pred_region
    _
  $region21: #{vae_forward.10} parent=0 // pred_fallthru
    _

// kernel: vae_forward.11
$region0: #{vae_forward.11}
  #allocation0 [shape = 'u32[]', space=smem, size = 0x4, offset = 0x4, fixed_abs, tag = 'smem constant byte address 0x4 - core index']
  #allocation1 [shape = 'u32[72,128]{1,0:T(1,128)}', space=vmem, size = 0x9000, scoped, tag = 'internal scratch']
  %s0 = inlined_call_operand.vmem [shape: bf16[464,128], index: 0, kind: input, shape index: {}]
  %s1 = inlined_call_operand.vmem [shape: bf16[128,128], index: 1, kind: input, shape index: {}]
  %s2 = inlined_call_operand.vmem [shape: f32[1,128], index: 2, kind: input, shape index: {}]
  %s3 = inlined_call_operand.vmem [shape: f32[464,128], index: 3, kind: output, shape index: {}]
  %s4 = sld [smem:[#allocation0]]
  $region22: #{vae_forward.11} parent=0
    _
  %s6 = ssub.s32 1, %s4
  %s7 = scalar_select 0, %s6, %s4
  // Predicated region
  $region2: #{vae_forward.11} parent=0 // pred_check
    _
  $region3: #{vae_forward.11} parent=0 // pred_check_branch
    %9 = sbr.rel (0) target = $region5
  $region4: #{vae_forward.11} parent=0 // pred_region
    _
  $region5: #{vae_forward.11} parent=0 // pred_fallthru
    _
  // Predicated region
  $region6: #{vae_forward.11} parent=0 // pred_check
    _
  $region7: #{vae_forward.11} parent=0 // pred_check_branch
    %11 = sbr.rel (0) target = $region9
  $region8: #{vae_forward.11} parent=0 // pred_region
    _
  $region9: #{vae_forward.11} parent=0 // pred_fallthru
    _
  // Predicated region
  $region10: #{vae_forward.11} parent=0 // pred_check
    _
  $region11: #{vae_forward.11} parent=0 // pred_check_branch
    %13 = sbr.rel (0) target = $region13
  $region12: #{vae_forward.11} parent=0 // pred_region
    _
  $region13: #{vae_forward.11} parent=0 // pred_fallthru
    _
  %v14 = vld [vmem:[%s0] sm:$0xf]
  %v15 = vld [vmem:[%s0 + $0x4] sm:$0xf]
  %v16 = vld [vmem:[%s0 + $0x8] sm:$0xf]
  %v17 = vld [vmem:[%s0 + $0xc] sm:$0xf]
  %v18 = vld [vmem:[%s0 + $0x10] sm:$0xf]
  %v19 = vld [vmem:[%s0 + $0x14] sm:$0xf]
  %v20 = vld [vmem:[%s0 + $0x18] sm:$0xf]
  %v21 = vld [vmem:[%s0 + $0x1c] sm:$0xf]
  %v22 = vld [vmem:[%s0 + $0x20] sm:$0xf]
  %v23 = vld [vmem:[%s0 + $0x24] sm:$0xf]
  %v24 = vld [vmem:[%s0 + $0x28] sm:$0xf]
  %v25 = vld [vmem:[%s0 + $0x2c] sm:$0xf]
  %v26 = vld [vmem:[%s0 + $0x30] sm:$0xf]
  %v27 = vld [vmem:[%s0 + $0x34] sm:$0xf]
  %v28 = vld [vmem:[%s0 + $0x38] sm:$0xf]
  %v29 = vld [vmem:[%s0 + $0x3c] sm:$0xf]
  %v30 = vld [vmem:[%s0 + $0x40] sm:$0xf]
  %v31 = vld [vmem:[%s0 + $0x44] sm:$0xf]
  %v32 = vld [vmem:[%s0 + $0x48] sm:$0xf]
  %v33 = vld [vmem:[%s0 + $0x4c] sm:$0xf]
  %v34 = vld [vmem:[%s0 + $0x50] sm:$0xf]
  %v35 = vld [vmem:[%s0 + $0x54] sm:$0xf]
  %v36 = vld [vmem:[%s0 + $0x58] sm:$0xf]
  %v37 = vld [vmem:[%s0 + $0x5c] sm:$0xf]
  %v38 = vld [vmem:[%s0 + $0x60] sm:$0xf]
  %v39 = vld [vmem:[%s0 + $0x64] sm:$0xf]
  %v40 = vld [vmem:[%s0 + $0x68] sm:$0xf]
  %v41 = vld [vmem:[%s0 + $0x6c] sm:$0xf]
  %v42 = vld [vmem:[%s0 + $0x70] sm:$0xf]
  %v43 = vld [vmem:[%s0 + $0x74] sm:$0xf]
  %v44 = vld [vmem:[%s0 + $0x78] sm:$0xf]
  %v45 = vld [vmem:[%s0 + $0x7c] sm:$0xf]
  %v46 = vld [vmem:[%s0 + $0x80] sm:$0xf]
  %v47 = vld [vmem:[%s0 + $0x84] sm:$0xf]
  %v48 = vld [vmem:[%s0 + $0x88] sm:$0xf]
  %v49 = vld [vmem:[%s0 + $0x8c] sm:$0xf]
  %v50 = vld [vmem:[%s0 + $0x90] sm:$0xf]
  %v51 = vld [vmem:[%s0 + $0x94] sm:$0xf]
  %v52 = vld [vmem:[%s0 + $0x98] sm:$0xf]
  %v53 = vld [vmem:[%s0 + $0x9c] sm:$0xf]
  %v54 = vld [vmem:[%s0 + $0xa0] sm:$0xf]
  %v55 = vld [vmem:[%s0 + $0xa4] sm:$0xf]
  %v56 = vld [vmem:[%s0 + $0xa8] sm:$0xf]
  %v57 = vld [vmem:[%s0 + $0xac] sm:$0xf]
  %v58 = vld [vmem:[%s0 + $0xb0] sm:$0xf]
  %v59 = vld [vmem:[%s0 + $0xb4] sm:$0xf]
  %v60 = vld [vmem:[%s0 + $0xb8] sm:$0xf]
  %v61 = vld [vmem:[%s0 + $0xbc] sm:$0xf]
  %v62 = vld [vmem:[%s0 + $0xc0] sm:$0xf]
  %v63 = vld [vmem:[%s0 + $0xc4] sm:$0xf]
  %v64 = vld [vmem:[%s0 + $0xc8] sm:$0xf]
  %v65 = vld [vmem:[%s0 + $0xcc] sm:$0xf]
  %v66 = vld [vmem:[%s0 + $0xd0] sm:$0xf]
  %v67 = vld [vmem:[%s0 + $0xd4] sm:$0xf]
  %v68 = vld [vmem:[%s0 + $0xd8] sm:$0xf]
  %v69 = vld [vmem:[%s0 + $0xdc] sm:$0xf]
  %v70 = vld [vmem:[%s0 + $0xe0] sm:$0xf]
  %v71 = vld [vmem:[%s0 + $0xe4] sm:$0xf]
  %v72 = vld [vmem:[%s1] sm:$0xf]
  %v73 = vld [vmem:[%s1 + $0x4] sm:$0xf]
  %v74 = vld [vmem:[%s1 + $0x8] sm:$0xf]
  %v75 = vld [vmem:[%s1 + $0xc] sm:$0xf]
  %v76 = vld [vmem:[%s1 + $0x10] sm:$0xf]
  %v77 = vld [vmem:[%s1 + $0x14] sm:$0xf]
  %v78 = vld [vmem:[%s1 + $0x18] sm:$0xf]
  %v79 = vld [vmem:[%s1 + $0x1c] sm:$0xf]
  %v80 = vld [vmem:[%s1 + $0x20] sm:$0xf]
  %v81 = vld [vmem:[%s1 + $0x24] sm:$0xf]
  %v82 = vld [vmem:[%s1 + $0x28] sm:$0xf]
  %v83 = vld [vmem:[%s1 + $0x2c] sm:$0xf]
  %v84 = vld [vmem:[%s1 + $0x30] sm:$0xf]
  %v85 = vld [vmem:[%s1 + $0x34] sm:$0xf]
  %v86 = vld [vmem:[%s1 + $0x38] sm:$0xf]
  %v87 = vld [vmem:[%s1 + $0x3c] sm:$0xf]
  %v88 = vld [vmem:[%s2] sm:$0x1]
  %v90 = vperm.slane %v88, 0
  %v150 = vunpack.c.l.b16 %v14
  %v151 = vunpack.c.l.b16 %v15
  %v152 = vunpack.c.l.b16 %v16
  %v153 = vunpack.c.l.b16 %v17
  %v154 = vunpack.c.l.b16 %v18
  %v155 = vunpack.c.l.b16 %v19
  %v156 = vunpack.c.l.b16 %v20
  %v157 = vunpack.c.l.b16 %v21
  %v158 = vunpack.c.l.b16 %v22
  %v159 = vunpack.c.l.b16 %v23
  %v160 = vunpack.c.l.b16 %v24
  %v161 = vunpack.c.l.b16 %v25
  %v162 = vunpack.c.l.b16 %v26
  %v163 = vunpack.c.l.b16 %v27
  %v164 = vunpack.c.l.b16 %v28
  %v165 = vunpack.c.l.b16 %v29
  %v166 = vunpack.c.l.b16 %v30
  %v167 = vunpack.c.l.b16 %v31
  %v168 = vunpack.c.l.b16 %v32
  %v169 = vunpack.c.l.b16 %v33
  %v170 = vunpack.c.l.b16 %v34
  %v171 = vunpack.c.l.b16 %v35
  %v172 = vunpack.c.l.b16 %v36
  %v173 = vunpack.c.l.b16 %v37
  %v174 = vunpack.c.l.b16 %v38
  %v175 = vunpack.c.l.b16 %v39
  %v176 = vunpack.c.l.b16 %v40
  %v177 = vunpack.c.l.b16 %v41
  %v178 = vunpack.c.l.b16 %v42
  %v179 = vunpack.c.l.b16 %v43
  %v180 = vunpack.c.l.b16 %v44
  %v181 = vunpack.c.l.b16 %v45
  %v182 = vunpack.c.l.b16 %v46
  %v183 = vunpack.c.l.b16 %v47
  %v184 = vunpack.c.l.b16 %v48
  %v185 = vunpack.c.l.b16 %v49
  %v186 = vunpack.c.l.b16 %v50
  %v187 = vunpack.c.l.b16 %v51
  %v188 = vunpack.c.l.b16 %v52
  %v189 = vunpack.c.l.b16 %v53
  %v190 = vunpack.c.l.b16 %v54
  %v191 = vunpack.c.l.b16 %v55
  %v192 = vunpack.c.l.b16 %v56
  %v193 = vunpack.c.l.b16 %v57
  %v194 = vunpack.c.l.b16 %v58
  %v195 = vunpack.c.l.b16 %v59
  %v196 = vunpack.c.l.b16 %v60
  %v197 = vunpack.c.l.b16 %v61
  %v198 = vunpack.c.l.b16 %v62
  %v199 = vunpack.c.l.b16 %v63
  %v200 = vunpack.c.l.b16 %v64
  %v201 = vunpack.c.l.b16 %v65
  %v202 = vunpack.c.l.b16 %v66
  %v203 = vunpack.c.l.b16 %v67
  %v204 = vunpack.c.l.b16 %v68
  %v205 = vunpack.c.l.b16 %v69
  %v206 = vunpack.c.l.b16 %v70
  %v207 = vunpack.c.l.b16 %v71
  %v208 = vpack.c.b16 %v151, %v150
  %v209 = vpack.c.b16 %v153, %v152
  %v210 = vpack.c.b16 %v155, %v154
  %v211 = vpack.c.b16 %v157, %v156
  %v212 = vpack.c.b16 %v159, %v158
  %v213 = vpack.c.b16 %v161, %v160
  %v214 = vpack.c.b16 %v163, %v162
  %v215 = vpack.c.b16 %v165, %v164
  %v216 = vpack.c.b16 %v167, %v166
  %v217 = vpack.c.b16 %v169, %v168
  %v218 = vpack.c.b16 %v171, %v170
  %v219 = vpack.c.b16 %v173, %v172
  %v220 = vpack.c.b16 %v175, %v174
  %v221 = vpack.c.b16 %v177, %v176
  %v222 = vpack.c.b16 %v179, %v178
  %v223 = vpack.c.b16 %v181, %v180
  %v224 = vpack.c.b16 %v183, %v182
  %v225 = vpack.c.b16 %v185, %v184
  %v226 = vpack.c.b16 %v187, %v186
  %v227 = vpack.c.b16 %v189, %v188
  %v228 = vpack.c.b16 %v191, %v190
  %v229 = vpack.c.b16 %v193, %v192
  %v230 = vpack.c.b16 %v195, %v194
  %v231 = vpack.c.b16 %v197, %v196
  %v232 = vpack.c.b16 %v199, %v198
  %v233 = vpack.c.b16 %v201, %v200
  %v234 = vpack.c.b16 %v203, %v202
  %v235 = vpack.c.b16 %v205, %v204
  %v236 = vpack.c.b16 %v207, %v206
  %v282 = vunpack.c.l.b16 %v72
  %v283 = vunpack.c.l.b16 %v73
  %v284 = vunpack.c.l.b16 %v74
  %v285 = vunpack.c.l.b16 %v75
  %v286 = vunpack.c.l.b16 %v76
  %v287 = vunpack.c.l.b16 %v77
  %v288 = vunpack.c.l.b16 %v78
  %v289 = vunpack.c.l.b16 %v79
  %v290 = vunpack.c.l.b16 %v80
  %v291 = vunpack.c.l.b16 %v81
  %v292 = vunpack.c.l.b16 %v82
  %v293 = vunpack.c.l.b16 %v83
  %v294 = vunpack.c.l.b16 %v84
  %v295 = vunpack.c.l.b16 %v85
  %v296 = vunpack.c.l.b16 %v86
  %v297 = vunpack.c.l.b16 %v87
  %v298 = vpack.c.b16 %v283, %v282
  %v299 = vpack.c.b16 %v285, %v284
  %v300 = vpack.c.b16 %v287, %v286
  %v301 = vpack.c.b16 %v289, %v288
  %v302 = vpack.c.b16 %v291, %v290
  %v303 = vpack.c.b16 %v293, %v292
  %v304 = vpack.c.b16 %v295, %v294
  %v305 = vpack.c.b16 %v297, %v296
  %314 = vmatpush.bf16.msra.mxu0 %v305
  %315 = vmatpush.bf16.msra.mxu0 %v304
  %316 = vmatpush.bf16.msra.mxu0 %v303
  %317 = vmatpush.bf16.msra.mxu0 %v302
  %318 = vmatpush.bf16.msra.mxu0 %v301
  %319 = vmatpush.bf16.msra.mxu0 %v300
  %320 = vmatpush.bf16.msra.mxu0 %v299
  %321 = vmatpush.bf16.msra.mxu0 %v298
  %322 = vmatmul.bf16.gmra.mxu0 %v208
  %v323 = vpop.f32.mrf.mxu0
  %v324 = vadd.f32 %v90, %v323
  %v325 = vpop.f32.mrf.mxu0
  %v326 = vadd.f32 %v90, %v325
  %327 = vmatmul.bf16.gmra.mxu0 %v209
  %v328 = vpop.f32.mrf.mxu0
  %v329 = vadd.f32 %v90, %v328
  %v330 = vpop.f32.mrf.mxu0
  %v331 = vadd.f32 %v90, %v330
  %332 = vmatmul.bf16.gmra.mxu0 %v210
  %v333 = vpop.f32.mrf.mxu0
  %v334 = vadd.f32 %v90, %v333
  %v335 = vpop.f32.mrf.mxu0
  %v336 = vadd.f32 %v90, %v335
  %337 = vmatmul.bf16.gmra.mxu0 %v211
  %v338 = vpop.f32.mrf.mxu0
  %v339 = vadd.f32 %v90, %v338
  %v340 = vpop.f32.mrf.mxu0
  %v341 = vadd.f32 %v90, %v340
  %342 = vmatmul.bf16.gmra.mxu0 %v212
  %v343 = vpop.f32.mrf.mxu0
  %v344 = vadd.f32 %v90, %v343
  %v345 = vpop.f32.mrf.mxu0
  %v346 = vadd.f32 %v90, %v345
  %347 = vmatmul.bf16.gmra.mxu0 %v213
  %v348 = vpop.f32.mrf.mxu0
  %v349 = vadd.f32 %v90, %v348
  %v350 = vpop.f32.mrf.mxu0
  %v351 = vadd.f32 %v90, %v350
  %352 = vmatmul.bf16.gmra.mxu0 %v214
  %v353 = vpop.f32.mrf.mxu0
  %v354 = vadd.f32 %v90, %v353
  %v355 = vpop.f32.mrf.mxu0
  %v356 = vadd.f32 %v90, %v355
  %357 = vmatmul.bf16.gmra.mxu0 %v215
  %v358 = vpop.f32.mrf.mxu0
  %v359 = vadd.f32 %v90, %v358
  %v360 = vpop.f32.mrf.mxu0
  %v361 = vadd.f32 %v90, %v360
  %362 = vmatmul.bf16.gmra.mxu0 %v216
  %v363 = vpop.f32.mrf.mxu0
  %v364 = vadd.f32 %v90, %v363
  %v365 = vpop.f32.mrf.mxu0
  %v366 = vadd.f32 %v90, %v365
  %367 = vmatmul.bf16.gmra.mxu0 %v217
  %v368 = vpop.f32.mrf.mxu0
  %v369 = vadd.f32 %v90, %v368
  %v370 = vpop.f32.mrf.mxu0
  %v371 = vadd.f32 %v90, %v370
  %372 = vmatmul.bf16.gmra.mxu0 %v218
  %v373 = vpop.f32.mrf.mxu0
  %v374 = vadd.f32 %v90, %v373
  %v375 = vpop.f32.mrf.mxu0
  %v376 = vadd.f32 %v90, %v375
  %377 = vmatmul.bf16.gmra.mxu0 %v219
  %v378 = vpop.f32.mrf.mxu0
  %v379 = vadd.f32 %v90, %v378
  %v380 = vpop.f32.mrf.mxu0
  %v381 = vadd.f32 %v90, %v380
  %382 = vmatmul.bf16.gmra.mxu0 %v220
  %v383 = vpop.f32.mrf.mxu0
  %v384 = vadd.f32 %v90, %v383
  %v385 = vpop.f32.mrf.mxu0
  %v386 = vadd.f32 %v90, %v385
  %387 = vmatmul.bf16.gmra.mxu0 %v221
  %v388 = vpop.f32.mrf.mxu0
  %v389 = vadd.f32 %v90, %v388
  %v390 = vpop.f32.mrf.mxu0
  %v391 = vadd.f32 %v90, %v390
  %392 = vmatmul.bf16.gmra.mxu0 %v222
  %v393 = vpop.f32.mrf.mxu0
  %v394 = vadd.f32 %v90, %v393
  %v395 = vpop.f32.mrf.mxu0
  %v396 = vadd.f32 %v90, %v395
  %397 = vmatmul.bf16.gmra.mxu0 %v223
  %v398 = vpop.f32.mrf.mxu0
  %v399 = vadd.f32 %v90, %v398
  %v400 = vpop.f32.mrf.mxu0
  %v401 = vadd.f32 %v90, %v400
  %402 = vmatmul.bf16.gmra.mxu0 %v224
  %v403 = vpop.f32.mrf.mxu0
  %v404 = vadd.f32 %v90, %v403
  %v405 = vpop.f32.mrf.mxu0
  %v406 = vadd.f32 %v90, %v405
  %407 = vmatmul.bf16.gmra.mxu0 %v225
  %v408 = vpop.f32.mrf.mxu0
  %v409 = vadd.f32 %v90, %v408
  %v410 = vpop.f32.mrf.mxu0
  %v411 = vadd.f32 %v90, %v410
  %412 = vmatmul.bf16.gmra.mxu0 %v226
  %v413 = vpop.f32.mrf.mxu0
  %v414 = vadd.f32 %v90, %v413
  %v415 = vpop.f32.mrf.mxu0
  %v416 = vadd.f32 %v90, %v415
  %417 = vmatmul.bf16.gmra.mxu0 %v227
  %v418 = vpop.f32.mrf.mxu0
  %v419 = vadd.f32 %v90, %v418
  %v420 = vpop.f32.mrf.mxu0
  %v421 = vadd.f32 %v90, %v420
  %422 = vmatmul.bf16.gmra.mxu0 %v228
  %v423 = vpop.f32.mrf.mxu0
  %v424 = vadd.f32 %v90, %v423
  %v425 = vpop.f32.mrf.mxu0
  %v426 = vadd.f32 %v90, %v425
  %427 = vmatmul.bf16.gmra.mxu0 %v229
  %v428 = vpop.f32.mrf.mxu0
  %v429 = vadd.f32 %v90, %v428
  %v430 = vpop.f32.mrf.mxu0
  %v431 = vadd.f32 %v90, %v430
  %432 = vmatmul.bf16.gmra.mxu0 %v230
  %v433 = vpop.f32.mrf.mxu0
  %v434 = vadd.f32 %v90, %v433
  %v435 = vpop.f32.mrf.mxu0
  %v436 = vadd.f32 %v90, %v435
  %437 = vmatmul.bf16.gmra.mxu0 %v231
  %v438 = vpop.f32.mrf.mxu0
  %v439 = vadd.f32 %v90, %v438
  %v440 = vpop.f32.mrf.mxu0
  %v441 = vadd.f32 %v90, %v440
  %442 = vmatmul.bf16.gmra.mxu0 %v232
  %v443 = vpop.f32.mrf.mxu0
  %v444 = vadd.f32 %v90, %v443
  %v445 = vpop.f32.mrf.mxu0
  %v446 = vadd.f32 %v90, %v445
  %447 = vmatmul.bf16.gmra.mxu0 %v233
  %v448 = vpop.f32.mrf.mxu0
  %v449 = vadd.f32 %v90, %v448
  %v450 = vpop.f32.mrf.mxu0
  %v451 = vadd.f32 %v90, %v450
  %452 = vmatmul.bf16.gmra.mxu0 %v234
  %v453 = vpop.f32.mrf.mxu0
  %v454 = vadd.f32 %v90, %v453
  %v455 = vpop.f32.mrf.mxu0
  %v456 = vadd.f32 %v90, %v455
  %457 = vmatmul.bf16.gmra.mxu0 %v235
  %v458 = vpop.f32.mrf.mxu0
  %v459 = vadd.f32 %v90, %v458
  %v460 = vpop.f32.mrf.mxu0
  %v461 = vadd.f32 %v90, %v460
  %462 = vmatmul.bf16.gmra.mxu0 %v236
  %v463 = vpop.f32.mrf.mxu0
  %v464 = vadd.f32 %v90, %v463
  %v465 = vpop.f32.mrf.mxu0
  %v466 = vadd.f32 %v90, %v465
  %467 = vdwg.mxu0
  %v468 = vsub.f32 0.0, %v324
  %v469 = vsub.f32 0.0, %v326
  %v470 = vsub.f32 0.0, %v329
  %v471 = vsub.f32 0.0, %v331
  %v472 = vsub.f32 0.0, %v334
  %v473 = vsub.f32 0.0, %v336
  %v474 = vsub.f32 0.0, %v339
  %v475 = vsub.f32 0.0, %v341
  %v476 = vsub.f32 0.0, %v344
  %v477 = vsub.f32 0.0, %v346
  %v478 = vsub.f32 0.0, %v349
  %v479 = vsub.f32 0.0, %v351
  %v480 = vsub.f32 0.0, %v354
  %v481 = vsub.f32 0.0, %v356
  %v482 = vsub.f32 0.0, %v359
  %v483 = vsub.f32 0.0, %v361
  %v484 = vsub.f32 0.0, %v364
  %v485 = vsub.f32 0.0, %v366
  %v486 = vsub.f32 0.0, %v369
  %v487 = vsub.f32 0.0, %v371
  %v488 = vsub.f32 0.0, %v374
  %v489 = vsub.f32 0.0, %v376
  %v490 = vsub.f32 0.0, %v379
  %v491 = vsub.f32 0.0, %v381
  %v492 = vsub.f32 0.0, %v384
  %v493 = vsub.f32 0.0, %v386
  %v494 = vsub.f32 0.0, %v389
  %v495 = vsub.f32 0.0, %v391
  %v496 = vsub.f32 0.0, %v394
  %v497 = vsub.f32 0.0, %v396
  %v498 = vsub.f32 0.0, %v399
  %v499 = vsub.f32 0.0, %v401
  %v500 = vsub.f32 0.0, %v404
  %v501 = vsub.f32 0.0, %v406
  %v502 = vsub.f32 0.0, %v409
  %v503 = vsub.f32 0.0, %v411
  %v504 = vsub.f32 0.0, %v414
  %v505 = vsub.f32 0.0, %v416
  %v506 = vsub.f32 0.0, %v419
  %v507 = vsub.f32 0.0, %v421
  %v508 = vsub.f32 0.0, %v424
  %v509 = vsub.f32 0.0, %v426
  %v510 = vsub.f32 0.0, %v429
  %v511 = vsub.f32 0.0, %v431
  %v512 = vsub.f32 0.0, %v434
  %v513 = vsub.f32 0.0, %v436
  %v514 = vsub.f32 0.0, %v439
  %v515 = vsub.f32 0.0, %v441
  %v516 = vsub.f32 0.0, %v444
  %v517 = vsub.f32 0.0, %v446
  %v518 = vsub.f32 0.0, %v449
  %v519 = vsub.f32 0.0, %v451
  %v520 = vsub.f32 0.0, %v454
  %v521 = vsub.f32 0.0, %v456
  %v522 = vsub.f32 0.0, %v459
  %v523 = vsub.f32 0.0, %v461
  %v524 = vsub.f32 0.0, %v464
  %v525 = vsub.f32 0.0, %v466
  %v526 = vmul.f32 %v468, 1.442695
  %v527 = vpow.pop %v526
  %v528 = vmul.f32 %v469, 1.442695
  %v529 = vpow.pop %v528
  %v530 = vmul.f32 %v470, 1.442695
  %v531 = vpow.pop %v530
  %v532 = vmul.f32 %v471, 1.442695
  %v533 = vpow.pop %v532
  %v534 = vmul.f32 %v472, 1.442695
  %v535 = vpow.pop %v534
  %v536 = vmul.f32 %v473, 1.442695
  %v537 = vpow.pop %v536
  %v538 = vmul.f32 %v474, 1.442695
  %v539 = vpow.pop %v538
  %v540 = vmul.f32 %v475, 1.442695
  %v541 = vpow.pop %v540
  %v542 = vmul.f32 %v476, 1.442695
  %v543 = vpow.pop %v542
  %v544 = vmul.f32 %v477, 1.442695
  %v545 = vpow.pop %v544
  %v546 = vmul.f32 %v478, 1.442695
  %v547 = vpow.pop %v546
  %v548 = vmul.f32 %v479, 1.442695
  %v549 = vpow.pop %v548
  %v550 = vmul.f32 %v480, 1.442695
  %v551 = vpow.pop %v550
  %v552 = vmul.f32 %v481, 1.442695
  %v553 = vpow.pop %v552
  %v554 = vmul.f32 %v482, 1.442695
  %v555 = vpow.pop %v554
  %v556 = vmul.f32 %v483, 1.442695
  %v557 = vpow.pop %v556
  %v558 = vmul.f32 %v484, 1.442695
  %v559 = vpow.pop %v558
  %v560 = vmul.f32 %v485, 1.442695
  %v561 = vpow.pop %v560
  %v562 = vmul.f32 %v486, 1.442695
  %v563 = vpow.pop %v562
  %v564 = vmul.f32 %v487, 1.442695
  %v565 = vpow.pop %v564
  %v566 = vmul.f32 %v488, 1.442695
  %v567 = vpow.pop %v566
  %v568 = vmul.f32 %v489, 1.442695
  %v569 = vpow.pop %v568
  %v570 = vmul.f32 %v490, 1.442695
  %v571 = vpow.pop %v570
  %v572 = vmul.f32 %v491, 1.442695
  %v573 = vpow.pop %v572
  %v574 = vmul.f32 %v492, 1.442695
  %v575 = vpow.pop %v574
  %v576 = vmul.f32 %v493, 1.442695
  %v577 = vpow.pop %v576
  %v578 = vmul.f32 %v494, 1.442695
  %v579 = vpow.pop %v578
  %v580 = vmul.f32 %v495, 1.442695
  %v581 = vpow.pop %v580
  %v582 = vmul.f32 %v496, 1.442695
  %v583 = vpow.pop %v582
  %v584 = vmul.f32 %v497, 1.442695
  %v585 = vpow.pop %v584
  %v586 = vmul.f32 %v498, 1.442695
  %v587 = vpow.pop %v586
  %v588 = vmul.f32 %v499, 1.442695
  %v589 = vpow.pop %v588
  %v590 = vmul.f32 %v500, 1.442695
  %v591 = vpow.pop %v590
  %v592 = vmul.f32 %v501, 1.442695
  %v593 = vpow.pop %v592
  %v594 = vmul.f32 %v502, 1.442695
  %v595 = vpow.pop %v594
  %v596 = vmul.f32 %v503, 1.442695
  %v597 = vpow.pop %v596
  %v598 = vmul.f32 %v504, 1.442695
  %v599 = vpow.pop %v598
  %v600 = vmul.f32 %v505, 1.442695
  %v601 = vpow.pop %v600
  %v602 = vmul.f32 %v506, 1.442695
  %v603 = vpow.pop %v602
  %v604 = vmul.f32 %v507, 1.442695
  %v605 = vpow.pop %v604
  %v606 = vmul.f32 %v508, 1.442695
  %v607 = vpow.pop %v606
  %v608 = vmul.f32 %v509, 1.442695
  %v609 = vpow.pop %v608
  %v610 = vmul.f32 %v510, 1.442695
  %v611 = vpow.pop %v610
  %v612 = vmul.f32 %v511, 1.442695
  %v613 = vpow.pop %v612
  %v614 = vmul.f32 %v512, 1.442695
  %v615 = vpow.pop %v614
  %v616 = vmul.f32 %v513, 1.442695
  %v617 = vpow.pop %v616
  %v618 = vmul.f32 %v514, 1.442695
  %v619 = vpow.pop %v618
  %v620 = vmul.f32 %v515, 1.442695
  %v621 = vpow.pop %v620
  %v622 = vmul.f32 %v516, 1.442695
  %v623 = vpow.pop %v622
  %v624 = vmul.f32 %v517, 1.442695
  %v625 = vpow.pop %v624
  %v626 = vmul.f32 %v518, 1.442695
  %v627 = vpow.pop %v626
  %v628 = vmul.f32 %v519, 1.442695
  %v629 = vpow.pop %v628
  %v630 = vmul.f32 %v520, 1.442695
  %v631 = vpow.pop %v630
  %v632 = vmul.f32 %v521, 1.442695
  %v633 = vpow.pop %v632
  %v634 = vmul.f32 %v522, 1.442695
  %v635 = vpow.pop %v634
  %v636 = vmul.f32 %v523, 1.442695
  %v637 = vpow.pop %v636
  %v638 = vmul.f32 %v524, 1.442695
  %v639 = vpow.pop %v638
  %v640 = vmul.f32 %v525, 1.442695
  %v641 = vpow.pop %v640
  %v642 = vadd.f32 %v527, 1.0
  %v643 = vadd.f32 %v529, 1.0
  %v644 = vadd.f32 %v531, 1.0
  %v645 = vadd.f32 %v533, 1.0
  %v646 = vadd.f32 %v535, 1.0
  %v647 = vadd.f32 %v537, 1.0
  %v648 = vadd.f32 %v539, 1.0
  %v649 = vadd.f32 %v541, 1.0
  %v650 = vadd.f32 %v543, 1.0
  %v651 = vadd.f32 %v545, 1.0
  %v652 = vadd.f32 %v547, 1.0
  %v653 = vadd.f32 %v549, 1.0
  %v654 = vadd.f32 %v551, 1.0
  %v655 = vadd.f32 %v553, 1.0
  %v656 = vadd.f32 %v555, 1.0
  %v657 = vadd.f32 %v557, 1.0
  %v658 = vadd.f32 %v559, 1.0
  %v659 = vadd.f32 %v561, 1.0
  %v660 = vadd.f32 %v563, 1.0
  %v661 = vadd.f32 %v565, 1.0
  %v662 = vadd.f32 %v567, 1.0
  %v663 = vadd.f32 %v569, 1.0
  %v664 = vadd.f32 %v571, 1.0
  %v665 = vadd.f32 %v573, 1.0
  %v666 = vadd.f32 %v575, 1.0
  %v667 = vadd.f32 %v577, 1.0
  %v668 = vadd.f32 %v579, 1.0
  %v669 = vadd.f32 %v581, 1.0
  %v670 = vadd.f32 %v583, 1.0
  %v671 = vadd.f32 %v585, 1.0
  %v672 = vadd.f32 %v587, 1.0
  %v673 = vadd.f32 %v589, 1.0
  %v674 = vadd.f32 %v591, 1.0
  %v675 = vadd.f32 %v593, 1.0
  %v676 = vadd.f32 %v595, 1.0
  %v677 = vadd.f32 %v597, 1.0
  %v678 = vadd.f32 %v599, 1.0
  %v679 = vadd.f32 %v601, 1.0
  %v680 = vadd.f32 %v603, 1.0
  %v681 = vadd.f32 %v605, 1.0
  %v682 = vadd.f32 %v607, 1.0
  %v683 = vadd.f32 %v609, 1.0
  %v684 = vadd.f32 %v611, 1.0
  %v685 = vadd.f32 %v613, 1.0
  %v686 = vadd.f32 %v615, 1.0
  %v687 = vadd.f32 %v617, 1.0
  %v688 = vadd.f32 %v619, 1.0
  %v689 = vadd.f32 %v621, 1.0
  %v690 = vadd.f32 %v623, 1.0
  %v691 = vadd.f32 %v625, 1.0
  %v692 = vadd.f32 %v627, 1.0
  %v693 = vadd.f32 %v629, 1.0
  %v694 = vadd.f32 %v631, 1.0
  %v695 = vadd.f32 %v633, 1.0
  %v696 = vadd.f32 %v635, 1.0
  %v697 = vadd.f32 %v637, 1.0
  %v698 = vadd.f32 %v639, 1.0
  %v699 = vadd.f32 %v641, 1.0
  %v700 = vrcp.pop %v642
  %v701 = vrcp.pop %v643
  %v702 = vrcp.pop %v644
  %v703 = vrcp.pop %v645
  %v704 = vrcp.pop %v646
  %v705 = vrcp.pop %v647
  %v706 = vrcp.pop %v648
  %v707 = vrcp.pop %v649
  %v708 = vrcp.pop %v650
  %v709 = vrcp.pop %v651
  %v710 = vrcp.pop %v652
  %v711 = vrcp.pop %v653
  %v712 = vrcp.pop %v654
  %v713 = vrcp.pop %v655
  %v714 = vrcp.pop %v656
  %v715 = vrcp.pop %v657
  %v716 = vrcp.pop %v658
  %v717 = vrcp.pop %v659
  %v718 = vrcp.pop %v660
  %v719 = vrcp.pop %v661
  %v720 = vrcp.pop %v662
  %v721 = vrcp.pop %v663
  %v722 = vrcp.pop %v664
  %v723 = vrcp.pop %v665
  %v724 = vrcp.pop %v666
  %v725 = vrcp.pop %v667
  %v726 = vrcp.pop %v668
  %v727 = vrcp.pop %v669
  %v728 = vrcp.pop %v670
  %v729 = vrcp.pop %v671
  %v730 = vrcp.pop %v672
  %v731 = vrcp.pop %v673
  %v732 = vrcp.pop %v674
  %v733 = vrcp.pop %v675
  %v734 = vrcp.pop %v676
  %v735 = vrcp.pop %v677
  %v736 = vrcp.pop %v678
  %v737 = vrcp.pop %v679
  %v738 = vrcp.pop %v680
  %v739 = vrcp.pop %v681
  %v740 = vrcp.pop %v682
  %v741 = vrcp.pop %v683
  %v742 = vrcp.pop %v684
  %v743 = vrcp.pop %v685
  %v744 = vrcp.pop %v686
  %v745 = vrcp.pop %v687
  %v746 = vrcp.pop %v688
  %v747 = vrcp.pop %v689
  %v748 = vrcp.pop %v690
  %v749 = vrcp.pop %v691
  %v750 = vrcp.pop %v692
  %v751 = vrcp.pop %v693
  %v752 = vrcp.pop %v694
  %v753 = vrcp.pop %v695
  %v754 = vrcp.pop %v696
  %v755 = vrcp.pop %v697
  %v756 = vrcp.pop %v698
  %v757 = vrcp.pop %v699
  %758 = vst [vmem:[%s3] sm:$0xff] %v700
  %759 = vst [vmem:[%s3 + $0x8] sm:$0xff] %v701
  %760 = vst [vmem:[%s3 + $0x10] sm:$0xff] %v702
  %761 = vst [vmem:[%s3 + $0x18] sm:$0xff] %v703
  %762 = vst [vmem:[%s3 + $0x20] sm:$0xff] %v704
  %763 = vst [vmem:[%s3 + $0x28] sm:$0xff] %v705
  %764 = vst [vmem:[%s3 + $0x30] sm:$0xff] %v706
  %765 = vst [vmem:[%s3 + $0x38] sm:$0xff] %v707
  %766 = vst [vmem:[%s3 + $0x40] sm:$0xff] %v708
  %767 = vst [vmem:[%s3 + $0x48] sm:$0xff] %v709
  %768 = vst [vmem:[%s3 + $0x50] sm:$0xff] %v710
  %769 = vst [vmem:[%s3 + $0x58] sm:$0xff] %v711
  %770 = vst [vmem:[%s3 + $0x60] sm:$0xff] %v712
  %771 = vst [vmem:[%s3 + $0x68] sm:$0xff] %v713
  %772 = vst [vmem:[%s3 + $0x70] sm:$0xff] %v714
  %773 = vst [vmem:[%s3 + $0x78] sm:$0xff] %v715
  %774 = vst [vmem:[%s3 + $0x80] sm:$0xff] %v716
  %775 = vst [vmem:[%s3 + $0x88] sm:$0xff] %v717
  %776 = vst [vmem:[%s3 + $0x90] sm:$0xff] %v718
  %777 = vst [vmem:[%s3 + $0x98] sm:$0xff] %v719
  %778 = vst [vmem:[%s3 + $0xa0] sm:$0xff] %v720
  %779 = vst [vmem:[%s3 + $0xa8] sm:$0xff] %v721
  %780 = vst [vmem:[%s3 + $0xb0] sm:$0xff] %v722
  %781 = vst [vmem:[%s3 + $0xb8] sm:$0xff] %v723
  %782 = vst [vmem:[%s3 + $0xc0] sm:$0xff] %v724
  %783 = vst [vmem:[%s3 + $0xc8] sm:$0xff] %v725
  %784 = vst [vmem:[%s3 + $0xd0] sm:$0xff] %v726
  %785 = vst [vmem:[%s3 + $0xd8] sm:$0xff] %v727
  %786 = vst [vmem:[%s3 + $0xe0] sm:$0xff] %v728
  %787 = vst [vmem:[%s3 + $0xe8] sm:$0xff] %v729
  %788 = vst [vmem:[%s3 + $0xf0] sm:$0xff] %v730
  %789 = vst [vmem:[%s3 + $0xf8] sm:$0xff] %v731
  %790 = vst [vmem:[%s3 + $0x100] sm:$0xff] %v732
  %791 = vst [vmem:[%s3 + $0x108] sm:$0xff] %v733
  %792 = vst [vmem:[%s3 + $0x110] sm:$0xff] %v734
  %793 = vst [vmem:[%s3 + $0x118] sm:$0xff] %v735
  %794 = vst [vmem:[%s3 + $0x120] sm:$0xff] %v736
  %795 = vst [vmem:[%s3 + $0x128] sm:$0xff] %v737
  %796 = vst [vmem:[%s3 + $0x130] sm:$0xff] %v738
  %797 = vst [vmem:[%s3 + $0x138] sm:$0xff] %v739
  %798 = vst [vmem:[%s3 + $0x140] sm:$0xff] %v740
  %799 = vst [vmem:[%s3 + $0x148] sm:$0xff] %v741
  %800 = vst [vmem:[%s3 + $0x150] sm:$0xff] %v742
  %801 = vst [vmem:[%s3 + $0x158] sm:$0xff] %v743
  %802 = vst [vmem:[%s3 + $0x160] sm:$0xff] %v744
  %803 = vst [vmem:[%s3 + $0x168] sm:$0xff] %v745
  %804 = vst [vmem:[%s3 + $0x170] sm:$0xff] %v746
  %805 = vst [vmem:[%s3 + $0x178] sm:$0xff] %v747
  %806 = vst [vmem:[%s3 + $0x180] sm:$0xff] %v748
  %807 = vst [vmem:[%s3 + $0x188] sm:$0xff] %v749
  %808 = vst [vmem:[%s3 + $0x190] sm:$0xff] %v750
  %809 = vst [vmem:[%s3 + $0x198] sm:$0xff] %v751
  %810 = vst [vmem:[%s3 + $0x1a0] sm:$0xff] %v752
  %811 = vst [vmem:[%s3 + $0x1a8] sm:$0xff] %v753
  %812 = vst [vmem:[%s3 + $0x1b0] sm:$0xff] %v754
  %813 = vst [vmem:[%s3 + $0x1b8] sm:$0xff] %v755
  %814 = vst [vmem:[%s3 + $0x1c0] sm:$0xff] %v756
  %815 = vst [vmem:[%s3 + $0x1c8] sm:$0xff] %v757
  // Predicated region
  $region14: #{vae_forward.11} parent=0 // pred_check
    _
  $region15: #{vae_forward.11} parent=0 // pred_check_branch
    %817 = sbr.rel (0) target = $region17
  $region16: #{vae_forward.11} parent=0 // pred_region
    _
  $region17: #{vae_forward.11} parent=0 // pred_fallthru
    _
  // Predicated region
  $region18: #{vae_forward.11} parent=0 // pred_check
    _
  $region19: #{vae_forward.11} parent=0 // pred_check_branch
    %819 = sbr.rel (0) target = $region21
  $region20: #{vae_forward.11} parent=0 // pred_region
    _
  $region21: #{vae_forward.11} parent=0 // pred_fallthru
    _

</llo_original>
